<compile_context>
chip_gen: v7x
topology: tpu7x:2x2x1
jax: 0.10.0
libtpu: 0.0.40
codegen_flags: <defaults>
</compile_context>

<pallas_src>
import functools

import jax
import jax.numpy as jnp
from jax.experimental import pallas as pl
from jax.experimental.pallas import tpu as pltpu


def stn3d_kernel(x_ref,
                 w1_ref, b1_ref, w2_ref, b2_ref, w3_ref, b3_ref,
                 wf1_ref, bf1_ref, wf2_ref, bf2_ref, wf3_ref, bf3_ref,
                 o_ref, gmax_ref,
                 *, bp, pn, c_in, n_valid, needs_mask):
    k = pl.program_id(1)

    # ---- init the running max at the first point chunk of this batch tile -----
    @pl.when(k == 0)
    def _():
        gmax_ref[...] = jnp.full_like(gmax_ref, -jnp.inf)

    rows = bp * pn
    x = x_ref[...].reshape(rows, c_in)                          # (rows, C) f32

    # ---- conv1 (1x1): K=C is tiny -> VPU broadcast FMAs, not an MXU pass ------
    if c_in <= 8:
        w1 = w1_ref[...]                                        # (C, 64) f32
        h = x[:, 0:1] * w1[0:1, :]
        for c in range(1, c_in):
            h = h + x[:, c:c + 1] * w1[c:c + 1, :]
        h = h + b1_ref[...]
    else:
        h = jnp.dot(x.astype(jnp.bfloat16), w1_ref[...],
                    preferred_element_type=jnp.float32) + b1_ref[...]
    h = jnp.maximum(h, 0.0)                                     # (rows, 64) f32

    # ---- conv2 / conv3: bf16 MXU matmuls with f32 accumulation ----------------
    h = jnp.dot(h.astype(jnp.bfloat16), w2_ref[...],
                preferred_element_type=jnp.float32) + b2_ref[...]
    h = jnp.maximum(h, 0.0)                                     # (rows, 128)
    h = jnp.dot(h.astype(jnp.bfloat16), w3_ref[...],
                preferred_element_type=jnp.float32) + b3_ref[...]
    h = jnp.maximum(h, 0.0)                                     # (rows, 1024)

    # ---- running max over the point axis --------------------------------------
    h = h.reshape(bp, pn, 1024)
    if needs_mask:
        # Zero out rows beyond the true point count (safe: ReLU features >= 0).
        pt = k * pn + jax.lax.broadcasted_iota(jnp.int32, (bp, pn, 1), 1)
        h = jnp.where(pt < n_valid, h, 0.0)
    gmax_ref[...] = jnp.maximum(gmax_ref[...], jnp.max(h, axis=1))

    # ---- FC head + output at the last chunk (identity pre-folded into bf3) ----
    @pl.when(k == pl.num_programs(1) - 1)
    def _():
        g = gmax_ref[...]                                       # (bp, 1024) f32
        g = jnp.maximum(jnp.dot(g.astype(jnp.bfloat16), wf1_ref[...],
                                preferred_element_type=jnp.float32) + bf1_ref[...], 0.0)
        g = jnp.maximum(jnp.dot(g.astype(jnp.bfloat16), wf2_ref[...],
                                preferred_element_type=jnp.float32) + bf2_ref[...], 0.0)
        g = jnp.dot(g.astype(jnp.bfloat16), wf3_ref[...],
                    preferred_element_type=jnp.float32) + bf3_ref[...]
        o_ref[...] = g.reshape(1, bp, 9)


def _round_up(v, m):
    return ((v + m - 1) // m) * m


def _vmem_budget_bytes():
    """Generation-aware VMEM budget (~75% of physical, capped)."""
    try:
        phys = pltpu.get_tpu_info().vmem_capacity_bytes
    except Exception:
        phys = 64 * 1024 * 1024            # conservative (v7x-sized) fallback
    return min(int(phys) * 3 // 4, 96 * 1024 * 1024)


def _pick_tiles(B, N, C, budget_bytes):
    """Choose (batch_per_step bp, points_per_chunk pn, padded_N) under the VMEM budget."""
    # Live bytes per fused row per step (lane-padded f32 h1/h2/h3 + bf16 dot copies
    # + double-buffered x tile), rounded up for compiler temporaries.
    per_row = 10 * 1024
    fixed = 10 * 1024 * 1024               # resident weights (dbl-buffered) + scratch + margin
    rows_cap = max(128, (budget_bytes - fixed) // per_row)
    target_rows = min(4096 if budget_bytes >= 80 * 1024 * 1024 else 2048, rows_cap)

    n_pad8 = _round_up(N, 8)
    if n_pad8 <= target_rows:
        # Whole point cloud in one chunk; stack several batch elements per step,
        # but keep >= 2 steps on the parallel batch axis (v7x has 2 TensorCores).
        pn = n_pad8
        bp_cap = max(1, min(target_rows // pn, B // 2 if B >= 2 else 1))
        bp = max(d for d in range(1, bp_cap + 1) if B % d == 0)
        n_chunks = 1
    else:
        # Split the point axis into ~equal 8-aligned chunks; one batch elem per step.
        bp = 1
        n_chunks = -(-N // target_rows)
        pn = _round_up(-(-N // n_chunks), 8)
        n_chunks = -(-N // pn)
    return bp, pn, n_chunks * pn


def stn3d_forward(x_bcn, p):
    """x_bcn: (B, C, N) float32 (PyTorch layout).  Returns (B, 3, 3) float32."""
    B, C, N = x_bcn.shape
    budget = _vmem_budget_bytes()
    bp, pn, n_pad = _pick_tiles(B, N, C, budget)
    n_chunks = n_pad // pn

    # 1x1 convs are per-point matmuls: points on sublanes, channels on lanes.
    x_bnc = jnp.transpose(x_bcn, (0, 2, 1))
    if n_pad != N:
        x_bnc = jnp.pad(x_bnc, ((0, 0), (0, n_pad - N), (0, 0)))

    use_vpu_l1 = C <= 8
    w1 = p["w1"].astype(jnp.float32 if use_vpu_l1 else jnp.bfloat16)
    w2 = p["w2"].astype(jnp.bfloat16)
    w3 = p["w3"].astype(jnp.bfloat16)
    wf1 = p["wf1"].astype(jnp.bfloat16)
    wf2 = p["wf2"].astype(jnp.bfloat16)
    wf3 = p["wf3"].astype(jnp.bfloat16)
    # Fold the constant 3x3 identity into the fc3 bias (fc3 is affine).
    bf3 = (p["bf3"] + jnp.eye(3, dtype=jnp.float32).reshape(1, 9)).astype(jnp.float32)

    def const_spec(arr):
        # Weights/biases stay resident in VMEM across all grid steps.
        # TODO(synk): pipeline_mode=pl.Buffered(1) would single-buffer these resident
        # weights (~1.6 MiB reclaimed); left at the default for portability.
        nd = arr.ndim
        return pl.BlockSpec(arr.shape, lambda t, k, _nd=nd: (0,) * _nd)

    weights = (w1, p["b1"], w2, p["b2"], w3, p["b3"],
               wf1, p["bf1"], wf2, p["bf2"], wf3, bf3)

    grid_spec = pltpu.PrefetchScalarGridSpec(
        num_scalar_prefetch=0,
        grid=(B // bp, n_chunks),               # (parallel batch tiles, point chunks)
        in_specs=[pl.BlockSpec((bp, pn, C), lambda t, k: (t, k, 0))]
                 + [const_spec(w) for w in weights],
        out_specs=pl.BlockSpec((1, bp, 9), lambda t, k: (t, 0, 0)),
        scratch_shapes=[pltpu.VMEM((bp, 1024), jnp.float32)],   # running max
    )

    out = pl.pallas_call(
        functools.partial(stn3d_kernel, bp=bp, pn=pn, c_in=C,
                          n_valid=N, needs_mask=(n_pad != N)),
        out_shape=jax.ShapeDtypeStruct((B // bp, bp, 9), jnp.float32),
        grid_spec=grid_spec,
        compiler_params=pltpu.CompilerParams(
            dimension_semantics=("parallel", "arbitrary"),
            vmem_limit_bytes=budget,
        ),
    )(x_bnc, *weights)

    return out.reshape(B, 3, 3)


def init_params(key, *, channel=3):
    """Synthetic parameters matching STN3d shapes (weights stored as (cin, cout))."""
    dims = [("1", channel, 64), ("2", 64, 128), ("3", 128, 1024),
            ("f1", 1024, 512), ("f2", 512, 256), ("f3", 256, 9)]
    keys = jax.random.split(key, 2 * len(dims))
    p = {}
    for i, (name, cin, cout) in enumerate(dims):
        p[f"w{name}"] = 0.1 * jax.random.normal(keys[2 * i], (cin, cout), jnp.float32)
        p[f"b{name}"] = 0.1 * jax.random.normal(keys[2 * i + 1], (1, cout), jnp.float32)
    return p


def stn3d_ref(x_bcn, p):
    """Pure-JAX f32 reference of the STN3d forward (use_bn=False)."""
    x = jnp.transpose(x_bcn, (0, 2, 1))                       # (B, N, C)
    h = jnp.maximum(x @ p["w1"] + p["b1"], 0.0)
    h = jnp.maximum(h @ p["w2"] + p["b2"], 0.0)
    h = jnp.maximum(h @ p["w3"] + p["b3"], 0.0)
    g = jnp.max(h, axis=1)                                    # (B, 1024)
    g = jnp.maximum(g @ p["wf1"] + p["bf1"], 0.0)
    g = jnp.maximum(g @ p["wf2"] + p["bf2"], 0.0)
    g = g @ p["wf3"] + p["bf3"] + jnp.eye(3, dtype=jnp.float32).reshape(1, 9)
    return g.reshape(-1, 3, 3)


if __name__ == "__main__":
    key = jax.random.PRNGKey(0)
    kx, kp, kx2 = jax.random.split(key, 3)

    # Primary small test (PyTorch (B, C, N) layout).
    B, C, N = 2, 3, 16
    x = jax.random.normal(kx, (B, C, N), jnp.float32)
    params = init_params(kp, channel=C)

    out = jax.block_until_ready(stn3d_forward(x, params))
    ref = stn3d_ref(x, params)
    assert out.shape == (B, 3, 3), out.shape
    # bf16 matmul inputs with f32 accumulation -> loosened tolerance vs f32 reference.
    assert jnp.allclose(out, ref, rtol=5e-2, atol=5e-2), float(
        jnp.max(jnp.abs(out - ref)))

    # Second tiny shape exercising point padding/masking (N not a multiple of 8)
    # and bp > 1 batch tiling.
    B2, N2 = 4, 20
    x2 = jax.random.normal(kx2, (B2, C, N2), jnp.float32)
    out2 = jax.block_until_ready(stn3d_forward(x2, params))
    ref2 = stn3d_ref(x2, params)
    assert out2.shape == (B2, 3, 3), out2.shape
    assert jnp.allclose(out2, ref2, rtol=5e-2, atol=5e-2), float(
        jnp.max(jnp.abs(out2 - ref2)))

    print("KERNEL_OK")
</pallas_src>

<mosaic_0001>
module attributes {stable_mosaic.version = 11 : i64} {
  func.func @stn3d_kernel(%arg0: i32, %arg1: i32, %arg2: memref<1x16x3xf32, #tpu.memory_space<vmem>>, %arg3: memref<3x64xf32, #tpu.memory_space<vmem>>, %arg4: memref<1x64xf32, #tpu.memory_space<vmem>>, %arg5: memref<64x128xbf16, #tpu.memory_space<vmem>>, %arg6: memref<1x128xf32, #tpu.memory_space<vmem>>, %arg7: memref<128x1024xbf16, #tpu.memory_space<vmem>>, %arg8: memref<1x1024xf32, #tpu.memory_space<vmem>>, %arg9: memref<1024x512xbf16, #tpu.memory_space<vmem>>, %arg10: memref<1x512xf32, #tpu.memory_space<vmem>>, %arg11: memref<512x256xbf16, #tpu.memory_space<vmem>>, %arg12: memref<1x256xf32, #tpu.memory_space<vmem>>, %arg13: memref<256x9xbf16, #tpu.memory_space<vmem>>, %arg14: memref<1x9xf32, #tpu.memory_space<vmem>>, %arg15: memref<1x1x9xf32, #tpu.memory_space<vmem>>, %arg16: memref<1x1024xf32, #tpu.memory_space<vmem>>) attributes {dimension_semantics = [#tpu.dimension_semantics<parallel>, #tpu.dimension_semantics<arbitrary>], iteration_bounds = array<i64: 2, 1>, scalar_prefetch = 0 : i64, scratch_operands = 1 : i64, tpu.core_type = #tpu.core_type<tc>, window_params = [{transform_indices = @transform_0, window_bounds = array<i64: 1, 16, 3>}, {pipeline_mode = #tpu.pipeline_mode<synchronous>, transform_indices = @transform_1, window_bounds = array<i64: 3, 64>}, {pipeline_mode = #tpu.pipeline_mode<synchronous>, transform_indices = @transform_2, window_bounds = array<i64: 1, 64>}, {pipeline_mode = #tpu.pipeline_mode<synchronous>, transform_indices = @transform_3, window_bounds = array<i64: 64, 128>}, {pipeline_mode = #tpu.pipeline_mode<synchronous>, transform_indices = @transform_4, window_bounds = array<i64: 1, 128>}, {pipeline_mode = #tpu.pipeline_mode<synchronous>, transform_indices = @transform_5, window_bounds = array<i64: 128, 1024>}, {pipeline_mode = #tpu.pipeline_mode<synchronous>, transform_indices = @transform_6, window_bounds = array<i64: 1, 1024>}, {pipeline_mode = #tpu.pipeline_mode<synchronous>, transform_indices = @transform_7, window_bounds = array<i64: 1024, 512>}, {pipeline_mode = #tpu.pipeline_mode<synchronous>, transform_indices = @transform_8, window_bounds = array<i64: 1, 512>}, {pipeline_mode = #tpu.pipeline_mode<synchronous>, transform_indices = @transform_9, window_bounds = array<i64: 512, 256>}, {pipeline_mode = #tpu.pipeline_mode<synchronous>, transform_indices = @transform_10, window_bounds = array<i64: 1, 256>}, {pipeline_mode = #tpu.pipeline_mode<synchronous>, transform_indices = @transform_11, window_bounds = array<i64: 256, 9>}, {pipeline_mode = #tpu.pipeline_mode<synchronous>, transform_indices = @transform_12, window_bounds = array<i64: 1, 9>}, {transform_indices = @transform_13, window_bounds = array<i64: 1, 1, 9>}]} {
    %c0_i32 = arith.constant 0 : i32
    %0 = arith.cmpi eq, %arg1, %c0_i32 : i32
    %1 = arith.extui %0 : i1 to i32
    %c0_i32_0 = arith.constant 0 : i32
    %2 = arith.cmpi ne, %1, %c0_i32_0 : i32
    scf.if %2 {
      %cst_26 = arith.constant 0xFF800000 : f32
      %52 = vector.broadcast %cst_26 : f32 to vector<1x1024xf32>
      %c0_27 = arith.constant 0 : index
      %c0_28 = arith.constant 0 : index
      %53 = vector.load %arg16[%c0_27, %c0_28] : memref<1x1024xf32, #tpu.memory_space<vmem>>, vector<1x1024xf32>
      tpu.vector_store %arg16[%c0_27, %c0_28], %52 {strides = array<i32>} : memref<1x1024xf32, #tpu.memory_space<vmem>>, vector<1x1024xf32>,
    } else {
    }
    %c0 = arith.constant 0 : index
    %c0_1 = arith.constant 0 : index
    %c0_2 = arith.constant 0 : index
    %3 = vector.load %arg2[%c0, %c0_1, %c0_2] : memref<1x16x3xf32, #tpu.memory_space<vmem>>, vector<1x16x3xf32>
    %4 = vector.shape_cast %3 : vector<1x16x3xf32> to vector<16x3xf32>
    %c0_3 = arith.constant 0 : index
    %c0_4 = arith.constant 0 : index
    %5 = vector.load %arg3[%c0_3, %c0_4] : memref<3x64xf32, #tpu.memory_space<vmem>>, vector<3x64xf32>
    %6 = vector.extract_strided_slice %4 {offsets = [0, 0], sizes = [16, 1], strides = [1, 1]} : vector<16x3xf32> to vector<16x1xf32>
    %7 = vector.extract_strided_slice %5 {offsets = [0, 0], sizes = [1, 64], strides = [1, 1]} : vector<3x64xf32> to vector<1x64xf32>
    %8 = vector.broadcast %6 : vector<16x1xf32> to vector<16x64xf32>
    %9 = vector.broadcast %7 : vector<1x64xf32> to vector<16x64xf32>
    %10 = arith.mulf %8, %9 : vector<16x64xf32>
    %11 = vector.extract_strided_slice %4 {offsets = [0, 1], sizes = [16, 1], strides = [1, 1]} : vector<16x3xf32> to vector<16x1xf32>
    %12 = vector.extract_strided_slice %5 {offsets = [1, 0], sizes = [1, 64], strides = [1, 1]} : vector<3x64xf32> to vector<1x64xf32>
    %13 = vector.broadcast %11 : vector<16x1xf32> to vector<16x64xf32>
    %14 = vector.broadcast %12 : vector<1x64xf32> to vector<16x64xf32>
    %15 = arith.mulf %13, %14 : vector<16x64xf32>
    %16 = arith.addf %10, %15 : vector<16x64xf32>
    %17 = vector.extract_strided_slice %4 {offsets = [0, 2], sizes = [16, 1], strides = [1, 1]} : vector<16x3xf32> to vector<16x1xf32>
    %18 = vector.extract_strided_slice %5 {offsets = [2, 0], sizes = [1, 64], strides = [1, 1]} : vector<3x64xf32> to vector<1x64xf32>
    %19 = vector.broadcast %17 : vector<16x1xf32> to vector<16x64xf32>
    %20 = vector.broadcast %18 : vector<1x64xf32> to vector<16x64xf32>
    %21 = arith.mulf %19, %20 : vector<16x64xf32>
    %22 = arith.addf %16, %21 : vector<16x64xf32>
    %c0_5 = arith.constant 0 : index
    %c0_6 = arith.constant 0 : index
    %23 = vector.load %arg4[%c0_5, %c0_6] : memref<1x64xf32, #tpu.memory_space<vmem>>, vector<1x64xf32>
    %24 = vector.broadcast %23 : vector<1x64xf32> to vector<16x64xf32>
    %25 = arith.addf %22, %24 : vector<16x64xf32>
    %cst = arith.constant 0.000000e+00 : f32
    %26 = vector.broadcast %cst : f32 to vector<16x64xf32>
    %27 = arith.maximumf %25, %26 : vector<16x64xf32>
    %28 = arith.truncf %27 : vector<16x64xf32> to vector<16x64xbf16>
    %c0_7 = arith.constant 0 : index
    %c0_8 = arith.constant 0 : index
    %29 = vector.load %arg5[%c0_7, %c0_8] : memref<64x128xbf16, #tpu.memory_space<vmem>>, vector<64x128xbf16>
    %cst_9 = arith.constant dense<0.000000e+00> : vector<16x128xf32>
    %30 = tpu.matmul %28, %29, %cst_9 {dimension_numbers = #tpu.dot_dimension_numbers<[1], [0], [0], [1], [0, 0, 1, 1], [], []>} : vector<16x64xbf16>, vector<64x128xbf16>, vector<16x128xf32> -> vector<16x128xf32>
    %c0_10 = arith.constant 0 : index
    %c0_11 = arith.constant 0 : index
    %31 = vector.load %arg6[%c0_10, %c0_11] : memref<1x128xf32, #tpu.memory_space<vmem>>, vector<1x128xf32>
    %32 = vector.broadcast %31 : vector<1x128xf32> to vector<16x128xf32>
    %33 = arith.addf %30, %32 : vector<16x128xf32>
    %cst_12 = arith.constant 0.000000e+00 : f32
    %34 = vector.broadcast %cst_12 : f32 to vector<16x128xf32>
    %35 = arith.maximumf %33, %34 : vector<16x128xf32>
    %36 = arith.truncf %35 : vector<16x128xf32> to vector<16x128xbf16>
    %c0_13 = arith.constant 0 : index
    %c0_14 = arith.constant 0 : index
    %37 = vector.load %arg7[%c0_13, %c0_14] : memref<128x1024xbf16, #tpu.memory_space<vmem>>, vector<128x1024xbf16>
    %cst_15 = arith.constant dense<0.000000e+00> : vector<16x1024xf32>
    %38 = tpu.matmul %36, %37, %cst_15 {dimension_numbers = #tpu.dot_dimension_numbers<[1], [0], [0], [1], [0, 0, 1, 1], [], []>} : vector<16x128xbf16>, vector<128x1024xbf16>, vector<16x1024xf32> -> vector<16x1024xf32>
    %c0_16 = arith.constant 0 : index
    %c0_17 = arith.constant 0 : index
    %39 = vector.load %arg8[%c0_16, %c0_17] : memref<1x1024xf32, #tpu.memory_space<vmem>>, vector<1x1024xf32>
    %40 = vector.broadcast %39 : vector<1x1024xf32> to vector<16x1024xf32>
    %41 = arith.addf %38, %40 : vector<16x1024xf32>
    %cst_18 = arith.constant 0.000000e+00 : f32
    %42 = vector.broadcast %cst_18 : f32 to vector<16x1024xf32>
    %43 = arith.maximumf %41, %42 : vector<16x1024xf32>
    %44 = vector.shape_cast %43 : vector<16x1024xf32> to vector<1x16x1024xf32>
    %c0_19 = arith.constant 0 : index
    %c0_20 = arith.constant 0 : index
    %45 = vector.load %arg16[%c0_19, %c0_20] : memref<1x1024xf32, #tpu.memory_space<vmem>>, vector<1x1024xf32>
    %cst_21 = arith.constant dense<0xFF800000> : vector<1x1024xf32>
    %46 = vector.multi_reduction <maximumf>, %44, %cst_21 [1] : vector<1x16x1024xf32> to vector<1x1024xf32>
    %47 = arith.maximumf %45, %46 : vector<1x1024xf32>
    %c0_22 = arith.constant 0 : index
    %c0_23 = arith.constant 0 : index
    %48 = vector.load %arg16[%c0_22, %c0_23] : memref<1x1024xf32, #tpu.memory_space<vmem>>, vector<1x1024xf32>
    tpu.vector_store %arg16[%c0_22, %c0_23], %47 {strides = array<i32>} : memref<1x1024xf32, #tpu.memory_space<vmem>>, vector<1x1024xf32>,
    %c0_i32_24 = arith.constant 0 : i32
    %49 = arith.cmpi eq, %arg1, %c0_i32_24 : i32
    %50 = arith.extui %49 : i1 to i32
    %c0_i32_25 = arith.constant 0 : i32
    %51 = arith.cmpi ne, %50, %c0_i32_25 : i32
    scf.if %51 {
      %c0_26 = arith.constant 0 : index
      %c0_27 = arith.constant 0 : index
      %52 = vector.load %arg16[%c0_26, %c0_27] : memref<1x1024xf32, #tpu.memory_space<vmem>>, vector<1x1024xf32>
      %53 = arith.truncf %52 : vector<1x1024xf32> to vector<1x1024xbf16>
      %c0_28 = arith.constant 0 : index
      %c0_29 = arith.constant 0 : index
      %54 = vector.load %arg9[%c0_28, %c0_29] : memref<1024x512xbf16, #tpu.memory_space<vmem>>, vector<1024x512xbf16>
      %cst_30 = arith.constant dense<0.000000e+00> : vector<1x512xf32>
      %55 = tpu.matmul %53, %54, %cst_30 {dimension_numbers = #tpu.dot_dimension_numbers<[1], [0], [0], [1], [0, 0, 1, 1], [], []>} : vector<1x1024xbf16>, vector<1024x512xbf16>, vector<1x512xf32> -> vector<1x512xf32>
      %c0_31 = arith.constant 0 : index
      %c0_32 = arith.constant 0 : index
      %56 = vector.load %arg10[%c0_31, %c0_32] : memref<1x512xf32, #tpu.memory_space<vmem>>, vector<1x512xf32>
      %57 = arith.addf %55, %56 : vector<1x512xf32>
      %cst_33 = arith.constant 0.000000e+00 : f32
      %58 = vector.broadcast %cst_33 : f32 to vector<1x512xf32>
      %59 = arith.maximumf %57, %58 : vector<1x512xf32>
      %60 = arith.truncf %59 : vector<1x512xf32> to vector<1x512xbf16>
      %c0_34 = arith.constant 0 : index
      %c0_35 = arith.constant 0 : index
      %61 = vector.load %arg11[%c0_34, %c0_35] : memref<512x256xbf16, #tpu.memory_space<vmem>>, vector<512x256xbf16>
      %cst_36 = arith.constant dense<0.000000e+00> : vector<1x256xf32>
      %62 = tpu.matmul %60, %61, %cst_36 {dimension_numbers = #tpu.dot_dimension_numbers<[1], [0], [0], [1], [0, 0, 1, 1], [], []>} : vector<1x512xbf16>, vector<512x256xbf16>, vector<1x256xf32> -> vector<1x256xf32>
      %c0_37 = arith.constant 0 : index
      %c0_38 = arith.constant 0 : index
      %63 = vector.load %arg12[%c0_37, %c0_38] : memref<1x256xf32, #tpu.memory_space<vmem>>, vector<1x256xf32>
      %64 = arith.addf %62, %63 : vector<1x256xf32>
      %cst_39 = arith.constant 0.000000e+00 : f32
      %65 = vector.broadcast %cst_39 : f32 to vector<1x256xf32>
      %66 = arith.maximumf %64, %65 : vector<1x256xf32>
      %67 = arith.truncf %66 : vector<1x256xf32> to vector<1x256xbf16>
      %c0_40 = arith.constant 0 : index
      %c0_41 = arith.constant 0 : index
      %68 = vector.load %arg13[%c0_40, %c0_41] : memref<256x9xbf16, #tpu.memory_space<vmem>>, vector<256x9xbf16>
      %cst_42 = arith.constant dense<0.000000e+00> : vector<1x9xf32>
      %69 = tpu.matmul %67, %68, %cst_42 {dimension_numbers = #tpu.dot_dimension_numbers<[1], [0], [0], [1], [0, 0, 1, 1], [], []>} : vector<1x256xbf16>, vector<256x9xbf16>, vector<1x9xf32> -> vector<1x9xf32>
      %c0_43 = arith.constant 0 : index
      %c0_44 = arith.constant 0 : index
      %70 = vector.load %arg14[%c0_43, %c0_44] : memref<1x9xf32, #tpu.memory_space<vmem>>, vector<1x9xf32>
      %71 = arith.addf %69, %70 : vector<1x9xf32>
      %72 = vector.shape_cast %71 : vector<1x9xf32> to vector<1x1x9xf32>
      %c0_45 = arith.constant 0 : index
      %c0_46 = arith.constant 0 : index
      %c0_47 = arith.constant 0 : index
      %73 = vector.load %arg15[%c0_45, %c0_46, %c0_47] : memref<1x1x9xf32, #tpu.memory_space<vmem>>, vector<1x1x9xf32>
      tpu.vector_store %arg15[%c0_45, %c0_46, %c0_47], %72 {strides = array<i32>} : memref<1x1x9xf32, #tpu.memory_space<vmem>>, vector<1x1x9xf32>,
    } else {
    }
    return
  }
  func.func @transform_0(%arg0: i32, %arg1: i32) -> (i32, i32, i32) {
    %c0_i32 = arith.constant 0 : i32
    %c0_i32_0 = arith.constant 0 : i32
    return %arg0, %arg1, %c0_i32 : i32, i32, i32
  }
  func.func @transform_1(%arg0: i32, %arg1: i32) -> (i32, i32) {
    %c0_i32 = arith.constant 0 : i32
    %c0_i32_0 = arith.constant 0 : i32
    %c0_i32_1 = arith.constant 0 : i32
    return %c0_i32, %c0_i32_0 : i32, i32
  }
  func.func @transform_2(%arg0: i32, %arg1: i32) -> (i32, i32) {
    %c0_i32 = arith.constant 0 : i32
    %c0_i32_0 = arith.constant 0 : i32
    %c0_i32_1 = arith.constant 0 : i32
    return %c0_i32, %c0_i32_0 : i32, i32
  }
  func.func @transform_3(%arg0: i32, %arg1: i32) -> (i32, i32) {
    %c0_i32 = arith.constant 0 : i32
    %c0_i32_0 = arith.constant 0 : i32
    %c0_i32_1 = arith.constant 0 : i32
    return %c0_i32, %c0_i32_0 : i32, i32
  }
  func.func @transform_4(%arg0: i32, %arg1: i32) -> (i32, i32) {
    %c0_i32 = arith.constant 0 : i32
    %c0_i32_0 = arith.constant 0 : i32
    %c0_i32_1 = arith.constant 0 : i32
    return %c0_i32, %c0_i32_0 : i32, i32
  }
  func.func @transform_5(%arg0: i32, %arg1: i32) -> (i32, i32) {
    %c0_i32 = arith.constant 0 : i32
    %c0_i32_0 = arith.constant 0 : i32
    %c0_i32_1 = arith.constant 0 : i32
    return %c0_i32, %c0_i32_0 : i32, i32
  }
  func.func @transform_6(%arg0: i32, %arg1: i32) -> (i32, i32) {
    %c0_i32 = arith.constant 0 : i32
    %c0_i32_0 = arith.constant 0 : i32
    %c0_i32_1 = arith.constant 0 : i32
    return %c0_i32, %c0_i32_0 : i32, i32
  }
  func.func @transform_7(%arg0: i32, %arg1: i32) -> (i32, i32) {
    %c0_i32 = arith.constant 0 : i32
    %c0_i32_0 = arith.constant 0 : i32
    %c0_i32_1 = arith.constant 0 : i32
    return %c0_i32, %c0_i32_0 : i32, i32
  }
  func.func @transform_8(%arg0: i32, %arg1: i32) -> (i32, i32) {
    %c0_i32 = arith.constant 0 : i32
    %c0_i32_0 = arith.constant 0 : i32
    %c0_i32_1 = arith.constant 0 : i32
    return %c0_i32, %c0_i32_0 : i32, i32
  }
  func.func @transform_9(%arg0: i32, %arg1: i32) -> (i32, i32) {
    %c0_i32 = arith.constant 0 : i32
    %c0_i32_0 = arith.constant 0 : i32
    %c0_i32_1 = arith.constant 0 : i32
    return %c0_i32, %c0_i32_0 : i32, i32
  }
  func.func @transform_10(%arg0: i32, %arg1: i32) -> (i32, i32) {
    %c0_i32 = arith.constant 0 : i32
    %c0_i32_0 = arith.constant 0 : i32
    %c0_i32_1 = arith.constant 0 : i32
    return %c0_i32, %c0_i32_0 : i32, i32
  }
  func.func @transform_11(%arg0: i32, %arg1: i32) -> (i32, i32) {
    %c0_i32 = arith.constant 0 : i32
    %c0_i32_0 = arith.constant 0 : i32
    %c0_i32_1 = arith.constant 0 : i32
    return %c0_i32, %c0_i32_0 : i32, i32
  }
  func.func @transform_12(%arg0: i32, %arg1: i32) -> (i32, i32) {
    %c0_i32 = arith.constant 0 : i32
    %c0_i32_0 = arith.constant 0 : i32
    %c0_i32_1 = arith.constant 0 : i32
    return %c0_i32, %c0_i32_0 : i32, i32
  }
  func.func @transform_13(%arg0: i32, %arg1: i32) -> (i32, i32, i32) {
    %c0_i32 = arith.constant 0 : i32
    %c0_i32_0 = arith.constant 0 : i32
    %c0_i32_1 = arith.constant 0 : i32
    return %arg0, %c0_i32, %c0_i32_0 : i32, i32, i32
  }
}

</mosaic_0001>

<llo_original>
// kernel: tpu_custom_call.1
$region0: #{tpu_custom_call.1}
  #allocation0 [shape = 'u32[]', space=smem, size = 0x4, offset = 0x4, fixed_abs, tag = 'smem constant byte address 0x4 - core index']
  #allocation1 [shape = 'u32[144,128]{1,0:T(1,128)}', space=vmem, size = 0x12000, scoped, tag = 'internal scratch']
  #allocation2 [shape = 'f32[1,1024]{1,0:T(1,128)}', space=vmem, size = 0x1000, scoped, tag = 'scratch operand']
  %s0 = inlined_call_operand.vmem [shape: f32[2,16,3], index: 0, kind: input, shape index: {}]
  %s1 = inlined_call_operand.vmem [shape: f32[3,64], index: 1, kind: input, shape index: {}]
  %s2 = inlined_call_operand.vmem [shape: f32[1,64], index: 2, kind: input, shape index: {}]
  %s3 = inlined_call_operand.vmem [shape: bf16[64,128], index: 3, kind: input, shape index: {}]
  %s4 = inlined_call_operand.vmem [shape: f32[1,128], index: 4, kind: input, shape index: {}]
  %s5 = inlined_call_operand.hbm [shape: bf16[128,1024], index: 5, kind: input, shape index: {}]
  %s6 = inlined_call_operand.vmem [shape: f32[1,1024], index: 6, kind: input, shape index: {}]
  %s7 = inlined_call_operand.hbm [shape: bf16[1024,512], index: 7, kind: input, shape index: {}]
  %s8 = inlined_call_operand.vmem [shape: f32[1,512], index: 8, kind: input, shape index: {}]
  %s9 = inlined_call_operand.hbm [shape: bf16[512,256], index: 9, kind: input, shape index: {}]
  %s10 = inlined_call_operand.vmem [shape: f32[1,256], index: 10, kind: input, shape index: {}]
  %s11 = inlined_call_operand.vmem [shape: bf16[256,9], index: 11, kind: input, shape index: {}]
  %s12 = inlined_call_operand.vmem [shape: f32[1,9], index: 12, kind: input, shape index: {}]
  %s13 = inlined_call_operand.hbm [shape: f32[2,1,9], index: 13, kind: output, shape index: {}]
  %s14 = sld [smem:[#allocation0]]
  $region105: #{tpu_custom_call.1} parent=0
    _
  %s16 = ssub.s32 1, %s14
  %s17 = scalar_select 0, %s16, %s14
  $region1: #{tpu_custom_call.1} parent=0
    #allocation3 [shape = 'u8[262144]{0}', space=vmem, size = 0x40000, scoped, tag = 'input window, operand 5, single buffered']
    #allocation4 [shape = 's32[2]{0}', space=sflag, size = 0x8, scoped, tag = 'scoped memory for tpu_custom_call.1']
    #allocation5 [shape = 's32[2]{0}', space=sflag, size = 0x8, scoped, tag = 'scoped memory for tpu_custom_call.1']
    #allocation6 [shape = 'u8[1048576]{0}', space=vmem, size = 0x100000, scoped, tag = 'input window, operand 7, single buffered']
    #allocation7 [shape = 's32[1]{0}', space=sflag, size = 0x4, scoped, tag = 'scoped memory for tpu_custom_call.1']
    #allocation8 [shape = 'u8[262144]{0}', space=vmem, size = 0x40000, scoped, tag = 'input window, operand 9, single buffered']
    #allocation9 [shape = 'u8[1024]{0}', space=vmem, size = 0x400, scoped, tag = 'output window, operand 0']
    %18 = vsyncpa [#allocation4], 0
    %19 = vsyncpa [#allocation7], 0
    %20 = vsyncpa [#allocation5], 0
    %s21 = scalar_lea.sflag [#allocation5], 1
    %22 = vsyncpa %s21, 0
    loop: start=0, step=1, limit=4
    $region2: #{tpu_custom_call.1} parent=1 // loop_pre_header
      _
    $region3: #{tpu_custom_call.1} parent=1 // loop_header
      %s24 = sphi 0, %s28
      %p25 = scmp.ge.s32.totalorder %s24, 4
      %s31 = sphi 0, %s43
      %s32 = sphi 0, %s39
      %s33 = sphi 0, %s31
      %s34 = sphi 0, %s32
      %s35 = sphi 0, %s33
      %s36 = sphi 0, %s34
      %s48 = sphi 0, %s50
      %s51 = sphi 0, %s48
      %s52 = sphi 0, %s51
      %s68 = sphi 0, %s52
      %s72 = sphi 0, %s72
      %s74 = sphi 0, %s72
      %s75 = sphi 0, %s74
      %s89 = sphi 0, %s75
      %s93 = sphi 0, %s93
      %s95 = sphi 0, %s93
      %s96 = sphi 0, %s95
      %s110 = sphi 0, %s96
      %s114 = sphi 0, %s114
      %s116 = sphi 0, %s114
      %s117 = sphi 0, %s116
      %s131 = sphi 0, %s117
      %s135 = sphi 0, %s135
      %s137 = sphi 0, %s135
      %s138 = sphi 0, %s137
      %s152 = sphi 0, %s138
      %s156 = sphi 0, %s156
      %s158 = sphi 0, %s156
      %s159 = sphi 0, %s158
      %s173 = sphi 0, %s159
      %s177 = sphi 0, %s177
      %s179 = sphi 0, %s177
      %s180 = sphi 0, %s179
      %s194 = sphi 0, %s180
      %s198 = sphi 0, %s198
      %s200 = sphi 0, %s198
      %s201 = sphi 0, %s200
      %s215 = sphi 0, %s201
      %s219 = sphi 0, %s219
      %s221 = sphi 0, %s219
      %s222 = sphi 0, %s221
      %s236 = sphi 0, %s222
      %s240 = sphi 0, %s240
      %s242 = sphi 0, %s240
      %s243 = sphi 0, %s242
      %s257 = sphi 0, %s243
      %s261 = sphi 0, %s261
      %s263 = sphi 0, %s261
      %s264 = sphi 0, %s263
      %s278 = sphi 0, %s264
      %s282 = sphi 0, %s282
      %s284 = sphi 0, %s282
      %s285 = sphi 0, %s284
      %s299 = sphi 0, %s285
      %s303 = sphi 0, %s303
      %s305 = sphi 0, %s303
      %s306 = sphi 0, %s305
      %s320 = sphi 0, %s306
      %s326 = sphi 0, %s328
      %s329 = sphi 0, %s326
      %s330 = sphi 0, %s329
      %s346 = sphi 0, %s330
    $region4: #{tpu_custom_call.1} parent=1 // loop_header_branch
      %27 = sbr.rel (%p25) target = $region8
    $region5: #{tpu_custom_call.1} parent=1 // loop_body
      %s29 = ssub.s32 %s24, 1
      %s30 = ssub.s32 %s24, 2
      %s37 = sadd.s32 1, %s32
      %p38 = scmp.ge.s32.totalorder %s37, 1
      %s39 = scalar_select %p38, 0, %s37
      %s40 = sadd.s32 1, %s31
      %s41 = scalar_select %p38, %s40, %s31
      %p42 = scmp.ge.s32.totalorder %s41, 2
      %s43 = scalar_select %p42, 0, %s41
      %s44 = ssub.s32 %s31, %s43
      %s45 = ssub.s32 %s32, %s39
      %s46 = sor.u32 %s44, %s45
      %p47 = scmp.eq.s32.totalorder %s46, 0
      %s49 = sadd.s32 %s48, 1
      %s50 = scalar_select %p47, %s48, %s49
      %p53 = pneg %p47
      %p54 = scmp.eq.s32.totalorder %s24, 1
      %p55 = por %p53, %p54
      %p56 = scmp.ne.s32.totalorder %s48, %s51
      %p57 = scmp.eq.s32.totalorder %s24, 0
      %p58 = por %p56, %p57
      %p59 = scmp.ne.s32.totalorder %s48, %s51
      %p60 = scmp.eq.s32.totalorder %s29, 1
      %p61 = por %p59, %p60
      %p62 = scmp.ne.s32.totalorder %s51, %s52
      %p63 = scmp.eq.s32.totalorder %s29, 0
      %p64 = por %p62, %p63
      %p65 = scmp.ne.s32.totalorder %s51, %s52
      %p66 = scmp.eq.s32.totalorder %s30, 1
      %p67 = por %p65, %p66
      %p69 = scmp.ne.s32.totalorder %s52, %s68
      %p70 = scmp.eq.s32.totalorder %s30, 0
      %p71 = por %p69, %p70
      %s73 = sadd.s32 %s72, 1
      %p76 = scmp.eq.s32.totalorder %s24, 1
      %p77 = scmp.ne.s32.totalorder %s72, %s74
      %p78 = scmp.eq.s32.totalorder %s24, 0
      %p79 = por %p77, %p78
      %p80 = scmp.ne.s32.totalorder %s72, %s74
      %p81 = scmp.eq.s32.totalorder %s29, 1
      %p82 = por %p80, %p81
      %p83 = scmp.ne.s32.totalorder %s74, %s75
      %p84 = scmp.eq.s32.totalorder %s29, 0
      %p85 = por %p83, %p84
      %p86 = scmp.ne.s32.totalorder %s74, %s75
      %p87 = scmp.eq.s32.totalorder %s30, 1
      %p88 = por %p86, %p87
      %p90 = scmp.ne.s32.totalorder %s75, %s89
      %p91 = scmp.eq.s32.totalorder %s30, 0
      %p92 = por %p90, %p91
      %s94 = sadd.s32 %s93, 1
      %p97 = scmp.eq.s32.totalorder %s24, 1
      %p98 = scmp.ne.s32.totalorder %s93, %s95
      %p99 = scmp.eq.s32.totalorder %s24, 0
      %p100 = por %p98, %p99
      %p101 = scmp.ne.s32.totalorder %s93, %s95
      %p102 = scmp.eq.s32.totalorder %s29, 1
      %p103 = por %p101, %p102
      %p104 = scmp.ne.s32.totalorder %s95, %s96
      %p105 = scmp.eq.s32.totalorder %s29, 0
      %p106 = por %p104, %p105
      %p107 = scmp.ne.s32.totalorder %s95, %s96
      %p108 = scmp.eq.s32.totalorder %s30, 1
      %p109 = por %p107, %p108
      %p111 = scmp.ne.s32.totalorder %s96, %s110
      %p112 = scmp.eq.s32.totalorder %s30, 0
      %p113 = por %p111, %p112
      %s115 = sadd.s32 %s114, 1
      %p118 = scmp.eq.s32.totalorder %s24, 1
      %p119 = scmp.ne.s32.totalorder %s114, %s116
      %p120 = scmp.eq.s32.totalorder %s24, 0
      %p121 = por %p119, %p120
      %p122 = scmp.ne.s32.totalorder %s114, %s116
      %p123 = scmp.eq.s32.totalorder %s29, 1
      %p124 = por %p122, %p123
      %p125 = scmp.ne.s32.totalorder %s116, %s117
      %p126 = scmp.eq.s32.totalorder %s29, 0
      %p127 = por %p125, %p126
      %p128 = scmp.ne.s32.totalorder %s116, %s117
      %p129 = scmp.eq.s32.totalorder %s30, 1
      %p130 = por %p128, %p129
      %p132 = scmp.ne.s32.totalorder %s117, %s131
      %p133 = scmp.eq.s32.totalorder %s30, 0
      %p134 = por %p132, %p133
      %s136 = sadd.s32 %s135, 1
      %p139 = scmp.eq.s32.totalorder %s24, 1
      %p140 = scmp.ne.s32.totalorder %s135, %s137
      %p141 = scmp.eq.s32.totalorder %s24, 0
      %p142 = por %p140, %p141
      %p143 = scmp.ne.s32.totalorder %s135, %s137
      %p144 = scmp.eq.s32.totalorder %s29, 1
      %p145 = por %p143, %p144
      %p146 = scmp.ne.s32.totalorder %s137, %s138
      %p147 = scmp.eq.s32.totalorder %s29, 0
      %p148 = por %p146, %p147
      %p149 = scmp.ne.s32.totalorder %s137, %s138
      %p150 = scmp.eq.s32.totalorder %s30, 1
      %p151 = por %p149, %p150
      %p153 = scmp.ne.s32.totalorder %s138, %s152
      %p154 = scmp.eq.s32.totalorder %s30, 0
      %p155 = por %p153, %p154
      %s157 = sadd.s32 %s156, 1
      %p160 = scmp.eq.s32.totalorder %s24, 1
      %p161 = scmp.ne.s32.totalorder %s156, %s158
      %p162 = scmp.eq.s32.totalorder %s24, 0
      %p163 = por %p161, %p162
      %p164 = scmp.ne.s32.totalorder %s156, %s158
      %p165 = scmp.eq.s32.totalorder %s29, 1
      %p166 = por %p164, %p165
      %p167 = scmp.ne.s32.totalorder %s158, %s159
      %p168 = scmp.eq.s32.totalorder %s29, 0
      %p169 = por %p167, %p168
      %p170 = scmp.ne.s32.totalorder %s158, %s159
      %p171 = scmp.eq.s32.totalorder %s30, 1
      %p172 = por %p170, %p171
      %p174 = scmp.ne.s32.totalorder %s159, %s173
      %p175 = scmp.eq.s32.totalorder %s30, 0
      %p176 = por %p174, %p175
      %s178 = sadd.s32 %s177, 1
      %p181 = scmp.eq.s32.totalorder %s24, 1
      %p182 = scmp.ne.s32.totalorder %s177, %s179
      %p183 = scmp.eq.s32.totalorder %s24, 0
      %p184 = por %p182, %p183
      %p185 = scmp.ne.s32.totalorder %s177, %s179
      %p186 = scmp.eq.s32.totalorder %s29, 1
      %p187 = por %p185, %p186
      %p188 = scmp.ne.s32.totalorder %s179, %s180
      %p189 = scmp.eq.s32.totalorder %s29, 0
      %p190 = por %p188, %p189
      %p191 = scmp.ne.s32.totalorder %s179, %s180
      %p192 = scmp.eq.s32.totalorder %s30, 1
      %p193 = por %p191, %p192
      %p195 = scmp.ne.s32.totalorder %s180, %s194
      %p196 = scmp.eq.s32.totalorder %s30, 0
      %p197 = por %p195, %p196
      %s199 = sadd.s32 %s198, 1
      %p202 = scmp.eq.s32.totalorder %s24, 1
      %p203 = scmp.ne.s32.totalorder %s198, %s200
      %p204 = scmp.eq.s32.totalorder %s24, 0
      %p205 = por %p203, %p204
      %p206 = scmp.ne.s32.totalorder %s198, %s200
      %p207 = scmp.eq.s32.totalorder %s29, 1
      %p208 = por %p206, %p207
      %p209 = scmp.ne.s32.totalorder %s200, %s201
      %p210 = scmp.eq.s32.totalorder %s29, 0
      %p211 = por %p209, %p210
      %p212 = scmp.ne.s32.totalorder %s200, %s201
      %p213 = scmp.eq.s32.totalorder %s30, 1
      %p214 = por %p212, %p213
      %p216 = scmp.ne.s32.totalorder %s201, %s215
      %p217 = scmp.eq.s32.totalorder %s30, 0
      %p218 = por %p216, %p217
      %s220 = sadd.s32 %s219, 1
      %p223 = scmp.eq.s32.totalorder %s24, 1
      %p224 = scmp.ne.s32.totalorder %s219, %s221
      %p225 = scmp.eq.s32.totalorder %s24, 0
      %p226 = por %p224, %p225
      %p227 = scmp.ne.s32.totalorder %s219, %s221
      %p228 = scmp.eq.s32.totalorder %s29, 1
      %p229 = por %p227, %p228
      %p230 = scmp.ne.s32.totalorder %s221, %s222
      %p231 = scmp.eq.s32.totalorder %s29, 0
      %p232 = por %p230, %p231
      %p233 = scmp.ne.s32.totalorder %s221, %s222
      %p234 = scmp.eq.s32.totalorder %s30, 1
      %p235 = por %p233, %p234
      %p237 = scmp.ne.s32.totalorder %s222, %s236
      %p238 = scmp.eq.s32.totalorder %s30, 0
      %p239 = por %p237, %p238
      %s241 = sadd.s32 %s240, 1
      %p244 = scmp.eq.s32.totalorder %s24, 1
      %p245 = scmp.ne.s32.totalorder %s240, %s242
      %p246 = scmp.eq.s32.totalorder %s24, 0
      %p247 = por %p245, %p246
      %p248 = scmp.ne.s32.totalorder %s240, %s242
      %p249 = scmp.eq.s32.totalorder %s29, 1
      %p250 = por %p248, %p249
      %p251 = scmp.ne.s32.totalorder %s242, %s243
      %p252 = scmp.eq.s32.totalorder %s29, 0
      %p253 = por %p251, %p252
      %p254 = scmp.ne.s32.totalorder %s242, %s243
      %p255 = scmp.eq.s32.totalorder %s30, 1
      %p256 = por %p254, %p255
      %p258 = scmp.ne.s32.totalorder %s243, %s257
      %p259 = scmp.eq.s32.totalorder %s30, 0
      %p260 = por %p258, %p259
      %s262 = sadd.s32 %s261, 1
      %p265 = scmp.eq.s32.totalorder %s24, 1
      %p266 = scmp.ne.s32.totalorder %s261, %s263
      %p267 = scmp.eq.s32.totalorder %s24, 0
      %p268 = por %p266, %p267
      %p269 = scmp.ne.s32.totalorder %s261, %s263
      %p270 = scmp.eq.s32.totalorder %s29, 1
      %p271 = por %p269, %p270
      %p272 = scmp.ne.s32.totalorder %s263, %s264
      %p273 = scmp.eq.s32.totalorder %s29, 0
      %p274 = por %p272, %p273
      %p275 = scmp.ne.s32.totalorder %s263, %s264
      %p276 = scmp.eq.s32.totalorder %s30, 1
      %p277 = por %p275, %p276
      %p279 = scmp.ne.s32.totalorder %s264, %s278
      %p280 = scmp.eq.s32.totalorder %s30, 0
      %p281 = por %p279, %p280
      %s283 = sadd.s32 %s282, 1
      %p286 = scmp.eq.s32.totalorder %s24, 1
      %p287 = scmp.ne.s32.totalorder %s282, %s284
      %p288 = scmp.eq.s32.totalorder %s24, 0
      %p289 = por %p287, %p288
      %p290 = scmp.ne.s32.totalorder %s282, %s284
      %p291 = scmp.eq.s32.totalorder %s29, 1
      %p292 = por %p290, %p291
      %p293 = scmp.ne.s32.totalorder %s284, %s285
      %p294 = scmp.eq.s32.totalorder %s29, 0
      %p295 = por %p293, %p294
      %p296 = scmp.ne.s32.totalorder %s284, %s285
      %p297 = scmp.eq.s32.totalorder %s30, 1
      %p298 = por %p296, %p297
      %p300 = scmp.ne.s32.totalorder %s285, %s299
      %p301 = scmp.eq.s32.totalorder %s30, 0
      %p302 = por %p300, %p301
      %s304 = sadd.s32 %s303, 1
      %p307 = scmp.eq.s32.totalorder %s24, 1
      %p308 = scmp.ne.s32.totalorder %s303, %s305
      %p309 = scmp.eq.s32.totalorder %s24, 0
      %p310 = por %p308, %p309
      %p311 = scmp.ne.s32.totalorder %s303, %s305
      %p312 = scmp.eq.s32.totalorder %s29, 1
      %p313 = por %p311, %p312
      %p314 = scmp.ne.s32.totalorder %s305, %s306
      %p315 = scmp.eq.s32.totalorder %s29, 0
      %p316 = por %p314, %p315
      %p317 = scmp.ne.s32.totalorder %s305, %s306
      %p318 = scmp.eq.s32.totalorder %s30, 1
      %p319 = por %p317, %p318
      %p321 = scmp.ne.s32.totalorder %s306, %s320
      %p322 = scmp.eq.s32.totalorder %s30, 0
      %p323 = por %p321, %p322
      %s324 = ssub.s32 %s31, %s43
      %p325 = scmp.eq.s32.totalorder %s324, 0
      %s327 = sadd.s32 %s326, 1
      %s328 = scalar_select %p325, %s326, %s327
      %p331 = pneg %p325
      %p332 = scmp.eq.s32.totalorder %s24, 1
      %p333 = por %p331, %p332
      %p334 = scmp.ne.s32.totalorder %s326, %s329
      %p335 = scmp.eq.s32.totalorder %s24, 0
      %p336 = por %p334, %p335
      %p337 = scmp.ne.s32.totalorder %s326, %s329
      %p338 = scmp.eq.s32.totalorder %s29, 1
      %p339 = por %p337, %p338
      %p340 = scmp.ne.s32.totalorder %s329, %s330
      %p341 = scmp.eq.s32.totalorder %s29, 0
      %p342 = por %p340, %p341
      %p343 = scmp.ne.s32.totalorder %s329, %s330
      %p344 = scmp.eq.s32.totalorder %s30, 1
      %p345 = por %p343, %p344
      %p347 = scmp.ne.s32.totalorder %s330, %s346
      %p348 = scmp.eq.s32.totalorder %s30, 0
      %p349 = por %p347, %p348
      %p350 = scmp.le.s32.totalorder 1, %s24
      %p351 = scmp.lt.s32.totalorder %s24, 3
      %p352 = pnand %p350, %p351
      %p353 = pneg %p352
      // Predicated region
      $region9: #{tpu_custom_call.1} parent=5 // pred_check
        _
      $region10: #{tpu_custom_call.1} parent=5 // pred_check_branch
        %355 = sbr.rel (%p352) target = $region12
      $region11: #{tpu_custom_call.1} parent=5 // pred_region
        %s356 = ssub.s32 %s24, 1
        // Predicated region
        $region13: #{tpu_custom_call.1} parent=11 // pred_check
          %p357 = pneg %p85
        $region14: #{tpu_custom_call.1} parent=11 // pred_check_branch
          %359 = sbr.rel (%p357) target = $region16
        $region15: #{tpu_custom_call.1} parent=11 // pred_region
          _
        $region16: #{tpu_custom_call.1} parent=11 // pred_fallthru
          _
        // Predicated region
        $region17: #{tpu_custom_call.1} parent=11 // pred_check
          %p360 = pneg %p106
        $region18: #{tpu_custom_call.1} parent=11 // pred_check_branch
          %362 = sbr.rel (%p360) target = $region20
        $region19: #{tpu_custom_call.1} parent=11 // pred_region
          _
        $region20: #{tpu_custom_call.1} parent=11 // pred_fallthru
          _
        // Predicated region
        $region21: #{tpu_custom_call.1} parent=11 // pred_check
          %p363 = pneg %p127
        $region22: #{tpu_custom_call.1} parent=11 // pred_check_branch
          %365 = sbr.rel (%p363) target = $region24
        $region23: #{tpu_custom_call.1} parent=11 // pred_region
          _
        $region24: #{tpu_custom_call.1} parent=11 // pred_fallthru
          _
        // Predicated region
        $region25: #{tpu_custom_call.1} parent=11 // pred_check
          %p366 = pneg %p148
        $region26: #{tpu_custom_call.1} parent=11 // pred_check_branch
          %368 = sbr.rel (%p366) target = $region28
        $region27: #{tpu_custom_call.1} parent=11 // pred_region
          _
        $region28: #{tpu_custom_call.1} parent=11 // pred_fallthru
          _
        // Predicated region
        $region29: #{tpu_custom_call.1} parent=11 // pred_check
          %p369 = pneg %p169
        $region30: #{tpu_custom_call.1} parent=11 // pred_check_branch
          %371 = sbr.rel (%p369) target = $region32
        $region31: #{tpu_custom_call.1} parent=11 // pred_region
          %s373 = ssub.s32 8192, 8192
          %374 = vsyncadd [#allocation4], %s373
          %s375 = sshll.u32 [#allocation3], 4
          %s376 = int_to_ptr.vmem [resolvable:$true] %s375
          %381 = dma.hbm_to_vmem [thread:$0]  %s5, 8192, %s376, [#allocation4], 512, 512, 32
        $region32: #{tpu_custom_call.1} parent=11 // pred_fallthru
          _
        // Predicated region
        $region33: #{tpu_custom_call.1} parent=11 // pred_check
          %p382 = pneg %p190
        $region34: #{tpu_custom_call.1} parent=11 // pred_check_branch
          %384 = sbr.rel (%p382) target = $region36
        $region35: #{tpu_custom_call.1} parent=11 // pred_region
          _
        $region36: #{tpu_custom_call.1} parent=11 // pred_fallthru
          _
        // Predicated region
        $region37: #{tpu_custom_call.1} parent=11 // pred_check
          %p385 = pneg %p211
        $region38: #{tpu_custom_call.1} parent=11 // pred_check_branch
          %387 = sbr.rel (%p385) target = $region40
        $region39: #{tpu_custom_call.1} parent=11 // pred_region
          %s389 = ssub.s32 32768, 32768
          %390 = vsyncadd [#allocation7], %s389
          %s391 = sshll.u32 [#allocation6], 4
          %s392 = int_to_ptr.vmem [resolvable:$true] %s391
          %397 = dma.hbm_to_vmem [thread:$0]  %s7, 32768, %s392, [#allocation7], 256, 256, 16
        $region40: #{tpu_custom_call.1} parent=11 // pred_fallthru
          _
        // Predicated region
        $region41: #{tpu_custom_call.1} parent=11 // pred_check
          %p398 = pneg %p232
        $region42: #{tpu_custom_call.1} parent=11 // pred_check_branch
          %400 = sbr.rel (%p398) target = $region44
        $region43: #{tpu_custom_call.1} parent=11 // pred_region
          _
        $region44: #{tpu_custom_call.1} parent=11 // pred_fallthru
          _
        // Predicated region
        $region45: #{tpu_custom_call.1} parent=11 // pred_check
          %p401 = pneg %p253
        $region46: #{tpu_custom_call.1} parent=11 // pred_check_branch
          %403 = sbr.rel (%p401) target = $region48
        $region47: #{tpu_custom_call.1} parent=11 // pred_region
          %s405 = ssub.s32 8192, 8192
          %406 = vsyncadd [#allocation7], %s405
          %s407 = sshll.u32 [#allocation8], 4
          %s408 = int_to_ptr.vmem [resolvable:$true] %s407
          %413 = dma.hbm_to_vmem [thread:$0]  %s9, 8192, %s408, [#allocation7], 128, 128, 8
        $region48: #{tpu_custom_call.1} parent=11 // pred_fallthru
          _
        // Predicated region
        $region49: #{tpu_custom_call.1} parent=11 // pred_check
          %p414 = pneg %p274
        $region50: #{tpu_custom_call.1} parent=11 // pred_check_branch
          %416 = sbr.rel (%p414) target = $region52
        $region51: #{tpu_custom_call.1} parent=11 // pred_region
          _
        $region52: #{tpu_custom_call.1} parent=11 // pred_fallthru
          _
        // Predicated region
        $region53: #{tpu_custom_call.1} parent=11 // pred_check
          %p417 = pneg %p295
        $region54: #{tpu_custom_call.1} parent=11 // pred_check_branch
          %419 = sbr.rel (%p417) target = $region56
        $region55: #{tpu_custom_call.1} parent=11 // pred_region
          _
        $region56: #{tpu_custom_call.1} parent=11 // pred_fallthru
          _
        // Predicated region
        $region57: #{tpu_custom_call.1} parent=11 // pred_check
          %p420 = pneg %p316
        $region58: #{tpu_custom_call.1} parent=11 // pred_check_branch
          %422 = sbr.rel (%p420) target = $region60
        $region59: #{tpu_custom_call.1} parent=11 // pred_region
          _
        $region60: #{tpu_custom_call.1} parent=11 // pred_fallthru
          _
      $region12: #{tpu_custom_call.1} parent=5 // pred_fallthru
        _
      %p423 = scmp.lt.s32.totalorder %s24, 2
      // Predicated region
      $region61: #{tpu_custom_call.1} parent=5 // pred_check
        %p424 = pneg %p423
      $region62: #{tpu_custom_call.1} parent=5 // pred_check_branch
        %426 = sbr.rel (%p424) target = $region64
      $region63: #{tpu_custom_call.1} parent=5 // pred_region
        // Predicated region
        $region65: #{tpu_custom_call.1} parent=63 // pred_check
          %p427 = pneg %p58
        $region66: #{tpu_custom_call.1} parent=63 // pred_check_branch
          %429 = sbr.rel (%p427) target = $region68
        $region67: #{tpu_custom_call.1} parent=63 // pred_region
          %s430 = smul.u32 2, %s32
          %p431 = scmp.lt.s32.totalorder %s31, 1
          %s432 = scalar_select %p431, %s31, 1
          %p433 = scmp.lt.s32.totalorder %s430, 1
          %s434 = scalar_select %p433, %s430, 1
          %s435 = smul.addr %s432, 2
          %s436 = sadd.s32 %s434, %s435
          %s437 = smul.addr %s436, 8
          %s438 = scalar_lea.vmem %s0, %s437
          %s439 = smul.u32 2, %s32
        $region68: #{tpu_custom_call.1} parent=63 // pred_fallthru
          _
      $region64: #{tpu_custom_call.1} parent=5 // pred_fallthru
        _
      %p440 = scmp.le.s32.totalorder 1, %s24
      %p441 = scmp.lt.s32.totalorder %s24, 3
      %p442 = pnand %p440, %p441
      %p443 = pneg %p442
      // Predicated region
      $region69: #{tpu_custom_call.1} parent=5 // pred_check
        _
      $region70: #{tpu_custom_call.1} parent=5 // pred_check_branch
        %445 = sbr.rel (%p442) target = $region72
      $region71: #{tpu_custom_call.1} parent=5 // pred_region
        %s446 = ssub.s32 %s24, 1
        // Predicated region
        $region73: #{tpu_custom_call.1} parent=71 // pred_check
          %p447 = pneg %p169
        $region74: #{tpu_custom_call.1} parent=71 // pred_check_branch
          %449 = sbr.rel (%p447) target = $region76
        $region75: #{tpu_custom_call.1} parent=71 // pred_region
          %450 = dma.done [#allocation4], 8192
        $region76: #{tpu_custom_call.1} parent=71 // pred_fallthru
          _
        // Predicated region
        $region77: #{tpu_custom_call.1} parent=71 // pred_check
          %p451 = pneg %p211
        $region78: #{tpu_custom_call.1} parent=71 // pred_check_branch
          %453 = sbr.rel (%p451) target = $region80
        $region79: #{tpu_custom_call.1} parent=71 // pred_region
          %454 = dma.done [#allocation7], 32768
        $region80: #{tpu_custom_call.1} parent=71 // pred_fallthru
          _
        // Predicated region
        $region81: #{tpu_custom_call.1} parent=71 // pred_check
          %p455 = pneg %p253
        $region82: #{tpu_custom_call.1} parent=71 // pred_check_branch
          %457 = sbr.rel (%p455) target = $region84
        $region83: #{tpu_custom_call.1} parent=71 // pred_region
          %458 = dma.done [#allocation7], 8192
        $region84: #{tpu_custom_call.1} parent=71 // pred_fallthru
          _
        %s459 = smul.u32 2, %s34
        %p460 = scmp.lt.s32.totalorder %s33, 1
        %s461 = scalar_select %p460, %s33, 1
        %p462 = scmp.lt.s32.totalorder %s459, 1
        %s463 = scalar_select %p462, %s459, 1
        %s464 = smul.addr %s461, 2
        %s465 = sadd.s32 %s463, %s464
        %s466 = smul.addr %s465, 8
        %s467 = scalar_lea.vmem %s0, %s466
        %p468 = pneg %p64
        %p469 = pneg %p61
        %p470 = pneg %p85
        %p471 = pneg %p82
        %p472 = pneg %p106
        %p473 = pneg %p103
        %p474 = pneg %p127
        %p475 = pneg %p124
        %p476 = pneg %p148
        %p477 = pneg %p145
        %p478 = pneg %p169
        %p479 = pneg %p166
        %p480 = pneg %p190
        %p481 = pneg %p187
        %p482 = pneg %p211
        %p483 = pneg %p208
        %p484 = pneg %p232
        %p485 = pneg %p229
        %p486 = pneg %p253
        %p487 = pneg %p250
        %p488 = pneg %p274
        %p489 = pneg %p271
        %p490 = pneg %p295
        %p491 = pneg %p292
        %p492 = pneg %p316
        %p493 = pneg %p313
        %p494 = pneg %p342
        %p495 = pneg %p339
        %s496 = sand.u32 %s329, 1
        %s497 = scalar_lea.sflag [#allocation5], %s496
        %s498 = sand.u32 %s329, 1
        %s499 = scalar_lea.vmem [#allocation9], %s498
        %s500 = smul.u32 2, %s34
        %p501 = scmp.lt.s32.totalorder %s33, 1
        %s502 = scalar_select %p501, %s33, 1
        %p503 = scmp.lt.s32.totalorder %s500, 1
        %s504 = scalar_select %p503, %s500, 1
        %s505 = smul.addr %s502, 2
        %s506 = sadd.s32 %s504, %s505
        %s507 = smul.addr %s506, 8
        %s508 = scalar_lea.vmem %s0, %s507
        %s509 = smul.u32 2, %s34
        %p511 = scmp.eq.s32.totalorder %s34, 0
        // Predicated region
        $region85: #{tpu_custom_call.1} parent=71 // pred_check
          %p512 = pneg %p511
        $region86: #{tpu_custom_call.1} parent=71 // pred_check_branch
          %514 = sbr.rel (%p512) target = $region88
        $region87: #{tpu_custom_call.1} parent=71 // pred_region
          %515 = vst [vmem:[#allocation2] sm:$0xff] -inf
        $region88: #{tpu_custom_call.1} parent=71 // pred_fallthru
          _
        %v516 = vld [vmem:[%s508] sm:$0xff]
        %v517 = vld [vmem:[%s508 + $0x8] sm:$0xff]
        %v518 = vld [vmem:[%s1] sm:$0x7]
        %520 = vset.pattern.permute.xlu0 0
        %521 = vperm.xlu0 %520, %v516
        %v522 = vpop.permute.xlu0 %521
        %525 = vset.pattern.permute.xlu0 0
        %526 = vperm.xlu0 %525, %v517
        %v527 = vpop.permute.xlu0 %526
        %v529 = vlaneseq
        %v530 = vshrl.u32 %v529, 7
        %v531 = vsub.s32 0, %v530
        %v532 = vrot.slane %v518, %v531
        %v533 = vmul.f32 %v522, %v532
        %v534 = vmul.f32 %v527, %v532
        %535 = vset.pattern.permute.xlu0 1
        %536 = vperm.xlu0 %535, %v516
        %v537 = vpop.permute.xlu0 %536
        %539 = vset.pattern.permute.xlu0 1
        %540 = vperm.xlu0 %539, %v517
        %v541 = vpop.permute.xlu0 %540
        %v543 = vlaneseq
        %v544 = vshrl.u32 %v543, 7
        %v545 = vsub.s32 1, %v544
        %v546 = vrot.slane %v518, %v545
        %v547 = vmul.f32 %v537, %v546
        %v548 = vmul.f32 %v541, %v546
        %v549 = vadd.f32 %v533, %v547
        %v550 = vadd.f32 %v534, %v548
        %551 = vset.pattern.permute.xlu0 2
        %552 = vperm.xlu0 %551, %v516
        %v553 = vpop.permute.xlu0 %552
        %555 = vset.pattern.permute.xlu0 2
        %556 = vperm.xlu0 %555, %v517
        %v557 = vpop.permute.xlu0 %556
        %v559 = vlaneseq
        %v560 = vshrl.u32 %v559, 7
        %v561 = vsub.s32 2, %v560
        %v562 = vrot.slane %v518, %v561
        %v563 = vmul.f32 %v553, %v562
        %v564 = vmul.f32 %v557, %v562
        %v565 = vadd.f32 %v549, %v563
        %v566 = vadd.f32 %v550, %v564
        %v567 = vld [vmem:[%s2] sm:$0x1]
        %v569 = vlaneseq
        %v570 = vshrl.u32 %v569, 7
        %v571 = vsub.s32 0, %v570
        %v572 = vrot.slane %v567, %v571
        %v574 = vadd.f32 %v565, %v572
        %v575 = vadd.f32 %v566, %v572
        %v576 = vmax.f32 %v574, 0.0
        %v577 = vmax.f32 %v575, 0.0
        %v578 = vpack.c.bf16 %v577, %v576
        %v579 = vld [vmem:[%s3] sm:$0xf]
        %v580 = vld [vmem:[%s3 + $0x4] sm:$0xf]
        %v581 = vld [vmem:[%s3 + $0x8] sm:$0xf]
        %v582 = vld [vmem:[%s3 + $0xc] sm:$0xf]
        %v583 = vld [vmem:[%s3 + $0x10] sm:$0xf]
        %v584 = vld [vmem:[%s3 + $0x14] sm:$0xf]
        %v585 = vld [vmem:[%s3 + $0x18] sm:$0xf]
        %v586 = vld [vmem:[%s3 + $0x1c] sm:$0xf]
        %v587 = vld [vmem:[%s4] sm:$0x1]
        %v589 = vlaneseq
        %v590 = vshrl.u32 %v589, 7
        %v591 = vsub.s32 0, %v590
        %v592 = vrot.slane %v587, %v591
        %v602 = vunpack.c.l.b16 %v579
        %v603 = vunpack.c.l.b16 %v580
        %v604 = vunpack.c.l.b16 %v581
        %v605 = vunpack.c.l.b16 %v582
        %v606 = vunpack.c.l.b16 %v583
        %v607 = vunpack.c.l.b16 %v584
        %v608 = vunpack.c.l.b16 %v585
        %v609 = vunpack.c.l.b16 %v586
        %v610 = vpack.c.b16 %v603, %v602
        %v611 = vpack.c.b16 %v605, %v604
        %v612 = vpack.c.b16 %v607, %v606
        %v613 = vpack.c.b16 %v609, %v608
        %vm618 = vcmask 523264
        %v620 = vsel %vm618, %v578, 0
        %622 = vmatprep.subr.bf16.mxu0 0
        %623 = vmatpush1.bf16.msra.mxu0 %v610
        %624 = vmatprep.subr.bf16.mxu0 0
        %625 = vmatpush1.bf16.msra.mxu0 %v611
        %626 = vmatprep.subr.bf16.mxu0 0
        %627 = vmatpush1.bf16.msra.mxu0 %v612
        %628 = vmatprep.subr.bf16.mxu0 0
        %629 = vmatpush1.bf16.msra.mxu0 %v613
        %630 = vmatprep.subr.bf16.mxu0 0
        %631 = vmatpush1.bf16.msra.mxu0 0
        %632 = vmatprep.subr.bf16.mxu0 0
        %633 = vmatpush1.bf16.msra.mxu0 0
        %634 = vmatprep.subr.bf16.mxu0 0
        %635 = vmatpush1.bf16.msra.mxu0 0
        %636 = vmatprep.subr.bf16.mxu0 0
        %637 = vmatpush1.bf16.msra.mxu0 0
        %638 = vmatprep.subr.bf16.mxu0 0
        %639 = vmatpush1.bf16.msra.mxu0 0
        %640 = vmatprep.subr.bf16.mxu0 0
        %641 = vmatpush1.bf16.msra.mxu0 0
        %642 = vmatprep.subr.bf16.mxu0 0
        %643 = vmatpush1.bf16.msra.mxu0 0
        %644 = vmatprep.subr.bf16.mxu0 0
        %645 = vmatpush1.bf16.msra.mxu0 0
        %646 = vmatprep.subr.bf16.mxu0 0
        %647 = vmatpush1.bf16.msra.mxu0 0
        %648 = vmatprep.subr.bf16.mxu0 0
        %649 = vmatpush1.bf16.msra.mxu0 0
        %650 = vmatprep.subr.bf16.mxu0 0
        %651 = vmatpush1.bf16.msra.mxu0 0
        %652 = vmatprep.subr.bf16.mxu0 0
        %653 = vmatpush1.bf16.msra.mxu0 0
        %654 = vmatprep.mubr.bf16.mxu0 0
        %655 = vmatmul.mubr.bf16.gmra.mrb[0].mxu0 %v620
        %v656 = vpop.f32.mrb[0].mxu0
        %v657 = vadd.f32 %v592, %v656
        %v658 = vpop.f32.mrb[0].mxu0
        %v659 = vpop.f32.mrb[0].mxu0
        %v660 = vadd.f32 %v592, %v659
        %v661 = vpop.f32.mrb[0].mxu0
        %662 = vdwg.mxu0
        %v663 = vmax.f32 %v657, 0.0
        %v664 = vmax.f32 %v660, 0.0
        %v665 = vpack.c.bf16 %v664, %v663
        %v666 = vld [vmem:[#allocation3] sm:$0xff]
        %v667 = vld [vmem:[#allocation3 + $0x8] sm:$0xff]
        %v668 = vld [vmem:[#allocation3 + $0x10] sm:$0xff]
        %v669 = vld [vmem:[#allocation3 + $0x18] sm:$0xff]
        %v670 = vld [vmem:[#allocation3 + $0x20] sm:$0xff]
        %v671 = vld [vmem:[#allocation3 + $0x28] sm:$0xff]
        %v672 = vld [vmem:[#allocation3 + $0x30] sm:$0xff]
        %v673 = vld [vmem:[#allocation3 + $0x38] sm:$0xff]
        %v674 = vld [vmem:[#allocation3 + $0x40] sm:$0xff]
        %v675 = vld [vmem:[#allocation3 + $0x48] sm:$0xff]
        %v676 = vld [vmem:[#allocation3 + $0x50] sm:$0xff]
        %v677 = vld [vmem:[#allocation3 + $0x58] sm:$0xff]
        %v678 = vld [vmem:[#allocation3 + $0x60] sm:$0xff]
        %v679 = vld [vmem:[#allocation3 + $0x68] sm:$0xff]
        %v680 = vld [vmem:[#allocation3 + $0x70] sm:$0xff]
        %v681 = vld [vmem:[#allocation3 + $0x78] sm:$0xff]
        %v682 = vld [vmem:[#allocation3 + $0x80] sm:$0xff]
        %v683 = vld [vmem:[#allocation3 + $0x88] sm:$0xff]
        %v684 = vld [vmem:[#allocation3 + $0x90] sm:$0xff]
        %v685 = vld [vmem:[#allocation3 + $0x98] sm:$0xff]
        %v686 = vld [vmem:[#allocation3 + $0xa0] sm:$0xff]
        %v687 = vld [vmem:[#allocation3 + $0xa8] sm:$0xff]
        %v688 = vld [vmem:[#allocation3 + $0xb0] sm:$0xff]
        %v689 = vld [vmem:[#allocation3 + $0xb8] sm:$0xff]
        %v690 = vld [vmem:[#allocation3 + $0xc0] sm:$0xff]
        %v691 = vld [vmem:[#allocation3 + $0xc8] sm:$0xff]
        %v692 = vld [vmem:[#allocation3 + $0xd0] sm:$0xff]
        %v693 = vld [vmem:[#allocation3 + $0xd8] sm:$0xff]
        %v694 = vld [vmem:[#allocation3 + $0xe0] sm:$0xff]
        %v695 = vld [vmem:[#allocation3 + $0xe8] sm:$0xff]
        %v696 = vld [vmem:[#allocation3 + $0xf0] sm:$0xff]
        %v697 = vld [vmem:[#allocation3 + $0xf8] sm:$0xff]
        %v698 = vld [vmem:[#allocation3 + $0x100] sm:$0xff]
        %v699 = vld [vmem:[#allocation3 + $0x108] sm:$0xff]
        %v700 = vld [vmem:[#allocation3 + $0x110] sm:$0xff]
        %v701 = vld [vmem:[#allocation3 + $0x118] sm:$0xff]
        %v702 = vld [vmem:[#allocation3 + $0x120] sm:$0xff]
        %v703 = vld [vmem:[#allocation3 + $0x128] sm:$0xff]
        %v704 = vld [vmem:[#allocation3 + $0x130] sm:$0xff]
        %v705 = vld [vmem:[#allocation3 + $0x138] sm:$0xff]
        %v706 = vld [vmem:[#allocation3 + $0x140] sm:$0xff]
        %v707 = vld [vmem:[#allocation3 + $0x148] sm:$0xff]
        %v708 = vld [vmem:[#allocation3 + $0x150] sm:$0xff]
        %v709 = vld [vmem:[#allocation3 + $0x158] sm:$0xff]
        %v710 = vld [vmem:[#allocation3 + $0x160] sm:$0xff]
        %v711 = vld [vmem:[#allocation3 + $0x168] sm:$0xff]
        %v712 = vld [vmem:[#allocation3 + $0x170] sm:$0xff]
        %v713 = vld [vmem:[#allocation3 + $0x178] sm:$0xff]
        %v714 = vld [vmem:[#allocation3 + $0x180] sm:$0xff]
        %v715 = vld [vmem:[#allocation3 + $0x188] sm:$0xff]
        %v716 = vld [vmem:[#allocation3 + $0x190] sm:$0xff]
        %v717 = vld [vmem:[#allocation3 + $0x198] sm:$0xff]
        %v718 = vld [vmem:[#allocation3 + $0x1a0] sm:$0xff]
        %v719 = vld [vmem:[#allocation3 + $0x1a8] sm:$0xff]
        %v720 = vld [vmem:[#allocation3 + $0x1b0] sm:$0xff]
        %v721 = vld [vmem:[#allocation3 + $0x1b8] sm:$0xff]
        %v722 = vld [vmem:[#allocation3 + $0x1c0] sm:$0xff]
        %v723 = vld [vmem:[#allocation3 + $0x1c8] sm:$0xff]
        %v724 = vld [vmem:[#allocation3 + $0x1d0] sm:$0xff]
        %v725 = vld [vmem:[#allocation3 + $0x1d8] sm:$0xff]
        %v726 = vld [vmem:[#allocation3 + $0x1e0] sm:$0xff]
        %v727 = vld [vmem:[#allocation3 + $0x1e8] sm:$0xff]
        %v728 = vld [vmem:[#allocation3 + $0x1f0] sm:$0xff]
        %v729 = vld [vmem:[#allocation3 + $0x1f8] sm:$0xff]
        %v730 = vld [vmem:[%s6] sm:$0xff]
        %v732 = vlaneseq
        %v733 = vshrl.u32 %v732, 7
        %v734 = vsub.s32 0, %v733
        %v735 = vrot.slane %v730, %v734
        %v736 = vlaneseq
        %v737 = vshrl.u32 %v736, 7
        %v738 = vsub.s32 1, %v737
        %v739 = vrot.slane %v730, %v738
        %v740 = vlaneseq
        %v741 = vshrl.u32 %v740, 7
        %v742 = vsub.s32 2, %v741
        %v743 = vrot.slane %v730, %v742
        %v744 = vlaneseq
        %v745 = vshrl.u32 %v744, 7
        %v746 = vsub.s32 3, %v745
        %v747 = vrot.slane %v730, %v746
        %v748 = vlaneseq
        %v749 = vshrl.u32 %v748, 7
        %v750 = vsub.s32 4, %v749
        %v751 = vrot.slane %v730, %v750
        %v752 = vlaneseq
        %v753 = vshrl.u32 %v752, 7
        %v754 = vsub.s32 5, %v753
        %v755 = vrot.slane %v730, %v754
        %v756 = vlaneseq
        %v757 = vshrl.u32 %v756, 7
        %v758 = vsub.s32 6, %v757
        %v759 = vrot.slane %v730, %v758
        %v760 = vlaneseq
        %v761 = vshrl.u32 %v760, 7
        %v762 = vsub.s32 7, %v761
        %v763 = vrot.slane %v730, %v762
        %v836 = vunpack.c.l.b16 %v666
        %v837 = vunpack.c.h.b16 %v666
        %v838 = vunpack.c.l.b16 %v667
        %v839 = vunpack.c.h.b16 %v667
        %v840 = vunpack.c.l.b16 %v668
        %v841 = vunpack.c.h.b16 %v668
        %v842 = vunpack.c.l.b16 %v669
        %v843 = vunpack.c.h.b16 %v669
        %v844 = vunpack.c.l.b16 %v670
        %v845 = vunpack.c.h.b16 %v670
        %v846 = vunpack.c.l.b16 %v671
        %v847 = vunpack.c.h.b16 %v671
        %v848 = vunpack.c.l.b16 %v672
        %v849 = vunpack.c.h.b16 %v672
        %v850 = vunpack.c.l.b16 %v673
        %v851 = vunpack.c.h.b16 %v673
        %v852 = vunpack.c.l.b16 %v674
        %v853 = vunpack.c.h.b16 %v674
        %v854 = vunpack.c.l.b16 %v675
        %v855 = vunpack.c.h.b16 %v675
        %v856 = vunpack.c.l.b16 %v676
        %v857 = vunpack.c.h.b16 %v676
        %v858 = vunpack.c.l.b16 %v677
        %v859 = vunpack.c.h.b16 %v677
        %v860 = vunpack.c.l.b16 %v678
        %v861 = vunpack.c.h.b16 %v678
        %v862 = vunpack.c.l.b16 %v679
        %v863 = vunpack.c.h.b16 %v679
        %v864 = vunpack.c.l.b16 %v680
        %v865 = vunpack.c.h.b16 %v680
        %v866 = vunpack.c.l.b16 %v681
        %v867 = vunpack.c.h.b16 %v681
        %v868 = vunpack.c.l.b16 %v682
        %v869 = vunpack.c.h.b16 %v682
        %v870 = vunpack.c.l.b16 %v683
        %v871 = vunpack.c.h.b16 %v683
        %v872 = vunpack.c.l.b16 %v684
        %v873 = vunpack.c.h.b16 %v684
        %v874 = vunpack.c.l.b16 %v685
        %v875 = vunpack.c.h.b16 %v685
        %v876 = vunpack.c.l.b16 %v686
        %v877 = vunpack.c.h.b16 %v686
        %v878 = vunpack.c.l.b16 %v687
        %v879 = vunpack.c.h.b16 %v687
        %v880 = vunpack.c.l.b16 %v688
        %v881 = vunpack.c.h.b16 %v688
        %v882 = vunpack.c.l.b16 %v689
        %v883 = vunpack.c.h.b16 %v689
        %v884 = vunpack.c.l.b16 %v690
        %v885 = vunpack.c.h.b16 %v690
        %v886 = vunpack.c.l.b16 %v691
        %v887 = vunpack.c.h.b16 %v691
        %v888 = vunpack.c.l.b16 %v692
        %v889 = vunpack.c.h.b16 %v692
        %v890 = vunpack.c.l.b16 %v693
        %v891 = vunpack.c.h.b16 %v693
        %v892 = vunpack.c.l.b16 %v694
        %v893 = vunpack.c.h.b16 %v694
        %v894 = vunpack.c.l.b16 %v695
        %v895 = vunpack.c.h.b16 %v695
        %v896 = vunpack.c.l.b16 %v696
        %v897 = vunpack.c.h.b16 %v696
        %v898 = vunpack.c.l.b16 %v697
        %v899 = vunpack.c.h.b16 %v697
        %v900 = vunpack.c.l.b16 %v698
        %v901 = vunpack.c.h.b16 %v698
        %v902 = vunpack.c.l.b16 %v699
        %v903 = vunpack.c.h.b16 %v699
        %v904 = vunpack.c.l.b16 %v700
        %v905 = vunpack.c.h.b16 %v700
        %v906 = vunpack.c.l.b16 %v701
        %v907 = vunpack.c.h.b16 %v701
        %v908 = vunpack.c.l.b16 %v702
        %v909 = vunpack.c.h.b16 %v702
        %v910 = vunpack.c.l.b16 %v703
        %v911 = vunpack.c.h.b16 %v703
        %v912 = vunpack.c.l.b16 %v704
        %v913 = vunpack.c.h.b16 %v704
        %v914 = vunpack.c.l.b16 %v705
        %v915 = vunpack.c.h.b16 %v705
        %v916 = vunpack.c.l.b16 %v706
        %v917 = vunpack.c.h.b16 %v706
        %v918 = vunpack.c.l.b16 %v707
        %v919 = vunpack.c.h.b16 %v707
        %v920 = vunpack.c.l.b16 %v708
        %v921 = vunpack.c.h.b16 %v708
        %v922 = vunpack.c.l.b16 %v709
        %v923 = vunpack.c.h.b16 %v709
        %v924 = vunpack.c.l.b16 %v710
        %v925 = vunpack.c.h.b16 %v710
        %v926 = vunpack.c.l.b16 %v711
        %v927 = vunpack.c.h.b16 %v711
        %v928 = vunpack.c.l.b16 %v712
        %v929 = vunpack.c.h.b16 %v712
        %v930 = vunpack.c.l.b16 %v713
        %v931 = vunpack.c.h.b16 %v713
        %v932 = vunpack.c.l.b16 %v714
        %v933 = vunpack.c.h.b16 %v714
        %v934 = vunpack.c.l.b16 %v715
        %v935 = vunpack.c.h.b16 %v715
        %v936 = vunpack.c.l.b16 %v716
        %v937 = vunpack.c.h.b16 %v716
        %v938 = vunpack.c.l.b16 %v717
        %v939 = vunpack.c.h.b16 %v717
        %v940 = vunpack.c.l.b16 %v718
        %v941 = vunpack.c.h.b16 %v718
        %v942 = vunpack.c.l.b16 %v719
        %v943 = vunpack.c.h.b16 %v719
        %v944 = vunpack.c.l.b16 %v720
        %v945 = vunpack.c.h.b16 %v720
        %v946 = vunpack.c.l.b16 %v721
        %v947 = vunpack.c.h.b16 %v721
        %v948 = vunpack.c.l.b16 %v722
        %v949 = vunpack.c.h.b16 %v722
        %v950 = vunpack.c.l.b16 %v723
        %v951 = vunpack.c.h.b16 %v723
        %v952 = vunpack.c.l.b16 %v724
        %v953 = vunpack.c.h.b16 %v724
        %v954 = vunpack.c.l.b16 %v725
        %v955 = vunpack.c.h.b16 %v725
        %v956 = vunpack.c.l.b16 %v726
        %v957 = vunpack.c.h.b16 %v726
        %v958 = vunpack.c.l.b16 %v727
        %v959 = vunpack.c.h.b16 %v727
        %v960 = vunpack.c.l.b16 %v728
        %v961 = vunpack.c.h.b16 %v728
        %v962 = vunpack.c.l.b16 %v729
        %v963 = vunpack.c.h.b16 %v729
        %v964 = vpack.c.b16 %v844, %v836
        %v965 = vpack.c.b16 %v845, %v837
        %v966 = vpack.c.b16 %v846, %v838
        %v967 = vpack.c.b16 %v847, %v839
        %v968 = vpack.c.b16 %v848, %v840
        %v969 = vpack.c.b16 %v849, %v841
        %v970 = vpack.c.b16 %v850, %v842
        %v971 = vpack.c.b16 %v851, %v843
        %v972 = vpack.c.b16 %v860, %v852
        %v973 = vpack.c.b16 %v861, %v853
        %v974 = vpack.c.b16 %v862, %v854
        %v975 = vpack.c.b16 %v863, %v855
        %v976 = vpack.c.b16 %v864, %v856
        %v977 = vpack.c.b16 %v865, %v857
        %v978 = vpack.c.b16 %v866, %v858
        %v979 = vpack.c.b16 %v867, %v859
        %v980 = vpack.c.b16 %v876, %v868
        %v981 = vpack.c.b16 %v877, %v869
        %v982 = vpack.c.b16 %v878, %v870
        %v983 = vpack.c.b16 %v879, %v871
        %v984 = vpack.c.b16 %v880, %v872
        %v985 = vpack.c.b16 %v881, %v873
        %v986 = vpack.c.b16 %v882, %v874
        %v987 = vpack.c.b16 %v883, %v875
        %v988 = vpack.c.b16 %v892, %v884
        %v989 = vpack.c.b16 %v893, %v885
        %v990 = vpack.c.b16 %v894, %v886
        %v991 = vpack.c.b16 %v895, %v887
        %v992 = vpack.c.b16 %v896, %v888
        %v993 = vpack.c.b16 %v897, %v889
        %v994 = vpack.c.b16 %v898, %v890
        %v995 = vpack.c.b16 %v899, %v891
        %v996 = vpack.c.b16 %v908, %v900
        %v997 = vpack.c.b16 %v909, %v901
        %v998 = vpack.c.b16 %v910, %v902
        %v999 = vpack.c.b16 %v911, %v903
        %v1000 = vpack.c.b16 %v912, %v904
        %v1001 = vpack.c.b16 %v913, %v905
        %v1002 = vpack.c.b16 %v914, %v906
        %v1003 = vpack.c.b16 %v915, %v907
        %v1004 = vpack.c.b16 %v924, %v916
        %v1005 = vpack.c.b16 %v925, %v917
        %v1006 = vpack.c.b16 %v926, %v918
        %v1007 = vpack.c.b16 %v927, %v919
        %v1008 = vpack.c.b16 %v928, %v920
        %v1009 = vpack.c.b16 %v929, %v921
        %v1010 = vpack.c.b16 %v930, %v922
        %v1011 = vpack.c.b16 %v931, %v923
        %v1012 = vpack.c.b16 %v940, %v932
        %v1013 = vpack.c.b16 %v941, %v933
        %v1014 = vpack.c.b16 %v942, %v934
        %v1015 = vpack.c.b16 %v943, %v935
        %v1016 = vpack.c.b16 %v944, %v936
        %v1017 = vpack.c.b16 %v945, %v937
        %v1018 = vpack.c.b16 %v946, %v938
        %v1019 = vpack.c.b16 %v947, %v939
        %v1020 = vpack.c.b16 %v956, %v948
        %v1021 = vpack.c.b16 %v957, %v949
        %v1022 = vpack.c.b16 %v958, %v950
        %v1023 = vpack.c.b16 %v959, %v951
        %v1024 = vpack.c.b16 %v960, %v952
        %v1025 = vpack.c.b16 %v961, %v953
        %v1026 = vpack.c.b16 %v962, %v954
        %v1027 = vpack.c.b16 %v963, %v955
        %1092 = vmatprep.subr.bf16.mxu0 %v965
        %1093 = vmatpush1.bf16.msra.mxu0 %v964
        %1094 = vmatprep.subr.bf16.mxu0 %v973
        %1095 = vmatpush1.bf16.msra.mxu0 %v972
        %1096 = vmatprep.subr.bf16.mxu0 %v981
        %1097 = vmatpush1.bf16.msra.mxu0 %v980
        %1098 = vmatprep.subr.bf16.mxu0 %v989
        %1099 = vmatpush1.bf16.msra.mxu0 %v988
        %1100 = vmatprep.subr.bf16.mxu0 %v997
        %1101 = vmatpush1.bf16.msra.mxu0 %v996
        %1102 = vmatprep.subr.bf16.mxu0 %v1005
        %1103 = vmatpush1.bf16.msra.mxu0 %v1004
        %1104 = vmatprep.subr.bf16.mxu0 %v1013
        %1105 = vmatpush1.bf16.msra.mxu0 %v1012
        %1106 = vmatprep.subr.bf16.mxu0 %v1021
        %1107 = vmatpush1.bf16.msra.mxu0 %v1020
        %1108 = vmatprep.subr.bf16.mxu0 0
        %1109 = vmatpush1.bf16.msra.mxu0 0
        %1110 = vmatprep.subr.bf16.mxu0 0
        %1111 = vmatpush1.bf16.msra.mxu0 0
        %1112 = vmatprep.subr.bf16.mxu0 0
        %1113 = vmatpush1.bf16.msra.mxu0 0
        %1114 = vmatprep.subr.bf16.mxu0 0
        %1115 = vmatpush1.bf16.msra.mxu0 0
        %1116 = vmatprep.subr.bf16.mxu0 0
        %1117 = vmatpush1.bf16.msra.mxu0 0
        %1118 = vmatprep.subr.bf16.mxu0 0
        %1119 = vmatpush1.bf16.msra.mxu0 0
        %1120 = vmatprep.subr.bf16.mxu0 0
        %1121 = vmatpush1.bf16.msra.mxu0 0
        %1122 = vmatprep.subr.bf16.mxu0 0
        %1123 = vmatpush1.bf16.msra.mxu0 0
        %1124 = vmatprep.mubr.bf16.mxu0 0
        %1125 = vmatmul.mubr.bf16.gmra.mrb[0].mxu0 %v665
        %v1126 = vpop.f32.mrb[0].mxu0
        %v1127 = vadd.f32 %v735, %v1126
        %v1128 = vpop.f32.mrb[0].mxu0
        %v1129 = vadd.f32 %v739, %v1128
        %v1130 = vpop.f32.mrb[0].mxu0
        %v1131 = vadd.f32 %v735, %v1130
        %v1132 = vpop.f32.mrb[0].mxu0
        %v1133 = vadd.f32 %v739, %v1132
        %1134 = vdwg.mxu0
        %1135 = vmatprep.subr.bf16.mxu0 %v967
        %1136 = vmatpush1.bf16.msra.mxu0 %v966
        %1137 = vmatprep.subr.bf16.mxu0 %v975
        %1138 = vmatpush1.bf16.msra.mxu0 %v974
        %1139 = vmatprep.subr.bf16.mxu0 %v983
        %1140 = vmatpush1.bf16.msra.mxu0 %v982
        %1141 = vmatprep.subr.bf16.mxu0 %v991
        %1142 = vmatpush1.bf16.msra.mxu0 %v990
        %1143 = vmatprep.subr.bf16.mxu0 %v999
        %1144 = vmatpush1.bf16.msra.mxu0 %v998
        %1145 = vmatprep.subr.bf16.mxu0 %v1007
        %1146 = vmatpush1.bf16.msra.mxu0 %v1006
        %1147 = vmatprep.subr.bf16.mxu0 %v1015
        %1148 = vmatpush1.bf16.msra.mxu0 %v1014
        %1149 = vmatprep.subr.bf16.mxu0 %v1023
        %1150 = vmatpush1.bf16.msra.mxu0 %v1022
        %1151 = vmatprep.subr.bf16.mxu0 0
        %1152 = vmatpush1.bf16.msra.mxu0 0
        %1153 = vmatprep.subr.bf16.mxu0 0
        %1154 = vmatpush1.bf16.msra.mxu0 0
        %1155 = vmatprep.subr.bf16.mxu0 0
        %1156 = vmatpush1.bf16.msra.mxu0 0
        %1157 = vmatprep.subr.bf16.mxu0 0
        %1158 = vmatpush1.bf16.msra.mxu0 0
        %1159 = vmatprep.subr.bf16.mxu0 0
        %1160 = vmatpush1.bf16.msra.mxu0 0
        %1161 = vmatprep.subr.bf16.mxu0 0
        %1162 = vmatpush1.bf16.msra.mxu0 0
        %1163 = vmatprep.subr.bf16.mxu0 0
        %1164 = vmatpush1.bf16.msra.mxu0 0
        %1165 = vmatprep.subr.bf16.mxu0 0
        %1166 = vmatpush1.bf16.msra.mxu0 0
        %1167 = vmatprep.mubr.bf16.mxu0 0
        %1168 = vmatmul.mubr.bf16.gmra.mrb[0].mxu0 %v665
        %v1169 = vpop.f32.mrb[0].mxu0
        %v1170 = vadd.f32 %v743, %v1169
        %v1171 = vpop.f32.mrb[0].mxu0
        %v1172 = vadd.f32 %v747, %v1171
        %v1173 = vpop.f32.mrb[0].mxu0
        %v1174 = vadd.f32 %v743, %v1173
        %v1175 = vpop.f32.mrb[0].mxu0
        %v1176 = vadd.f32 %v747, %v1175
        %1177 = vdwg.mxu0
        %1178 = vmatprep.subr.bf16.mxu0 %v969
        %1179 = vmatpush1.bf16.msra.mxu0 %v968
        %1180 = vmatprep.subr.bf16.mxu0 %v977
        %1181 = vmatpush1.bf16.msra.mxu0 %v976
        %1182 = vmatprep.subr.bf16.mxu0 %v985
        %1183 = vmatpush1.bf16.msra.mxu0 %v984
        %1184 = vmatprep.subr.bf16.mxu0 %v993
        %1185 = vmatpush1.bf16.msra.mxu0 %v992
        %1186 = vmatprep.subr.bf16.mxu0 %v1001
        %1187 = vmatpush1.bf16.msra.mxu0 %v1000
        %1188 = vmatprep.subr.bf16.mxu0 %v1009
        %1189 = vmatpush1.bf16.msra.mxu0 %v1008
        %1190 = vmatprep.subr.bf16.mxu0 %v1017
        %1191 = vmatpush1.bf16.msra.mxu0 %v1016
        %1192 = vmatprep.subr.bf16.mxu0 %v1025
        %1193 = vmatpush1.bf16.msra.mxu0 %v1024
        %1194 = vmatprep.subr.bf16.mxu0 0
        %1195 = vmatpush1.bf16.msra.mxu0 0
        %1196 = vmatprep.subr.bf16.mxu0 0
        %1197 = vmatpush1.bf16.msra.mxu0 0
        %1198 = vmatprep.subr.bf16.mxu0 0
        %1199 = vmatpush1.bf16.msra.mxu0 0
        %1200 = vmatprep.subr.bf16.mxu0 0
        %1201 = vmatpush1.bf16.msra.mxu0 0
        %1202 = vmatprep.subr.bf16.mxu0 0
        %1203 = vmatpush1.bf16.msra.mxu0 0
        %1204 = vmatprep.subr.bf16.mxu0 0
        %1205 = vmatpush1.bf16.msra.mxu0 0
        %1206 = vmatprep.subr.bf16.mxu0 0
        %1207 = vmatpush1.bf16.msra.mxu0 0
        %1208 = vmatprep.subr.bf16.mxu0 0
        %1209 = vmatpush1.bf16.msra.mxu0 0
        %1210 = vmatprep.mubr.bf16.mxu0 0
        %1211 = vmatmul.mubr.bf16.gmra.mrb[0].mxu0 %v665
        %v1212 = vpop.f32.mrb[0].mxu0
        %v1213 = vadd.f32 %v751, %v1212
        %v1214 = vpop.f32.mrb[0].mxu0
        %v1215 = vadd.f32 %v755, %v1214
        %v1216 = vpop.f32.mrb[0].mxu0
        %v1217 = vadd.f32 %v751, %v1216
        %v1218 = vpop.f32.mrb[0].mxu0
        %v1219 = vadd.f32 %v755, %v1218
        %1220 = vdwg.mxu0
        %1221 = vmatprep.subr.bf16.mxu0 %v971
        %1222 = vmatpush1.bf16.msra.mxu0 %v970
        %1223 = vmatprep.subr.bf16.mxu0 %v979
        %1224 = vmatpush1.bf16.msra.mxu0 %v978
        %1225 = vmatprep.subr.bf16.mxu0 %v987
        %1226 = vmatpush1.bf16.msra.mxu0 %v986
        %1227 = vmatprep.subr.bf16.mxu0 %v995
        %1228 = vmatpush1.bf16.msra.mxu0 %v994
        %1229 = vmatprep.subr.bf16.mxu0 %v1003
        %1230 = vmatpush1.bf16.msra.mxu0 %v1002
        %1231 = vmatprep.subr.bf16.mxu0 %v1011
        %1232 = vmatpush1.bf16.msra.mxu0 %v1010
        %1233 = vmatprep.subr.bf16.mxu0 %v1019
        %1234 = vmatpush1.bf16.msra.mxu0 %v1018
        %1235 = vmatprep.subr.bf16.mxu0 %v1027
        %1236 = vmatpush1.bf16.msra.mxu0 %v1026
        %1237 = vmatprep.subr.bf16.mxu0 0
        %1238 = vmatpush1.bf16.msra.mxu0 0
        %1239 = vmatprep.subr.bf16.mxu0 0
        %1240 = vmatpush1.bf16.msra.mxu0 0
        %1241 = vmatprep.subr.bf16.mxu0 0
        %1242 = vmatpush1.bf16.msra.mxu0 0
        %1243 = vmatprep.subr.bf16.mxu0 0
        %1244 = vmatpush1.bf16.msra.mxu0 0
        %1245 = vmatprep.subr.bf16.mxu0 0
        %1246 = vmatpush1.bf16.msra.mxu0 0
        %1247 = vmatprep.subr.bf16.mxu0 0
        %1248 = vmatpush1.bf16.msra.mxu0 0
        %1249 = vmatprep.subr.bf16.mxu0 0
        %1250 = vmatpush1.bf16.msra.mxu0 0
        %1251 = vmatprep.subr.bf16.mxu0 0
        %1252 = vmatpush1.bf16.msra.mxu0 0
        %1253 = vmatprep.mubr.bf16.mxu0 0
        %1254 = vmatmul.mubr.bf16.gmra.mrb[0].mxu0 %v665
        %v1255 = vpop.f32.mrb[0].mxu0
        %v1256 = vadd.f32 %v759, %v1255
        %v1257 = vpop.f32.mrb[0].mxu0
        %v1258 = vadd.f32 %v763, %v1257
        %v1259 = vpop.f32.mrb[0].mxu0
        %v1260 = vadd.f32 %v759, %v1259
        %v1261 = vpop.f32.mrb[0].mxu0
        %v1262 = vadd.f32 %v763, %v1261
        %1263 = vdwg.mxu0
        %v1264 = vmax.f32 %v1127, 0.0
        %v1265 = vmax.f32 %v1129, 0.0
        %v1266 = vmax.f32 %v1170, 0.0
        %v1267 = vmax.f32 %v1172, 0.0
        %v1268 = vmax.f32 %v1213, 0.0
        %v1269 = vmax.f32 %v1215, 0.0
        %v1270 = vmax.f32 %v1256, 0.0
        %v1271 = vmax.f32 %v1258, 0.0
        %v1272 = vmax.f32 %v1131, 0.0
        %v1273 = vmax.f32 %v1133, 0.0
        %v1274 = vmax.f32 %v1174, 0.0
        %v1275 = vmax.f32 %v1176, 0.0
        %v1276 = vmax.f32 %v1217, 0.0
        %v1277 = vmax.f32 %v1219, 0.0
        %v1278 = vmax.f32 %v1260, 0.0
        %v1279 = vmax.f32 %v1262, 0.0
        %v1280 = vld [vmem:[#allocation2] sm:$0xff]
        %v1281 = vmax.f32 %v1264, %v1272
        %v1282 = vrot.slane %v1281, 4
        %v1283 = vmax.f32 %v1281, %v1282
        %v1284 = vrot.slane %v1283, 2
        %v1285 = vmax.f32 %v1283, %v1284
        %v1286 = vrot.slane %v1285, 1
        %v1287 = vmax.f32 %v1285, %v1286
        %v1288 = vmax.f32 %v1265, %v1273
        %v1289 = vrot.slane %v1288, 4
        %v1290 = vmax.f32 %v1288, %v1289
        %v1291 = vrot.slane %v1290, 2
        %v1292 = vmax.f32 %v1290, %v1291
        %v1293 = vrot.slane %v1292, 1
        %v1294 = vmax.f32 %v1292, %v1293
        %v1295 = vmax.f32 %v1266, %v1274
        %v1296 = vrot.slane %v1295, 4
        %v1297 = vmax.f32 %v1295, %v1296
        %v1298 = vrot.slane %v1297, 2
        %v1299 = vmax.f32 %v1297, %v1298
        %v1300 = vrot.slane %v1299, 1
        %v1301 = vmax.f32 %v1299, %v1300
        %v1302 = vmax.f32 %v1267, %v1275
        %v1303 = vrot.slane %v1302, 4
        %v1304 = vmax.f32 %v1302, %v1303
        %v1305 = vrot.slane %v1304, 2
        %v1306 = vmax.f32 %v1304, %v1305
        %v1307 = vrot.slane %v1306, 1
        %v1308 = vmax.f32 %v1306, %v1307
        %v1309 = vmax.f32 %v1268, %v1276
        %v1310 = vrot.slane %v1309, 4
        %v1311 = vmax.f32 %v1309, %v1310
        %v1312 = vrot.slane %v1311, 2
        %v1313 = vmax.f32 %v1311, %v1312
        %v1314 = vrot.slane %v1313, 1
        %v1315 = vmax.f32 %v1313, %v1314
        %v1316 = vmax.f32 %v1269, %v1277
        %v1317 = vrot.slane %v1316, 4
        %v1318 = vmax.f32 %v1316, %v1317
        %v1319 = vrot.slane %v1318, 2
        %v1320 = vmax.f32 %v1318, %v1319
        %v1321 = vrot.slane %v1320, 1
        %v1322 = vmax.f32 %v1320, %v1321
        %v1323 = vmax.f32 %v1270, %v1278
        %v1324 = vrot.slane %v1323, 4
        %v1325 = vmax.f32 %v1323, %v1324
        %v1326 = vrot.slane %v1325, 2
        %v1327 = vmax.f32 %v1325, %v1326
        %v1328 = vrot.slane %v1327, 1
        %v1329 = vmax.f32 %v1327, %v1328
        %v1330 = vmax.f32 %v1271, %v1279
        %v1331 = vrot.slane %v1330, 4
        %v1332 = vmax.f32 %v1330, %v1331
        %v1333 = vrot.slane %v1332, 2
        %v1334 = vmax.f32 %v1332, %v1333
        %v1335 = vrot.slane %v1334, 1
        %v1336 = vmax.f32 %v1334, %v1335
        %v1345 = vcombine.low %v1287, %v1294
        %v1346 = vcombine.low %v1301, %v1308
        %v1347 = vcombine.low %v1315, %v1322
        %v1348 = vcombine.low %v1329, %v1336
        %v1350 = vunpack.c.l.s4 1966171168
        %v1351 = vunpack.c.0.s8 %v1350
        %v1352 = vlaneseq
        %v1353 = vshrl.u32 %v1352, 7
        %v1354 = vsub.s32 %v1351, %v1353
        %v1355 = vrot.slane %v1345, %v1354
        %v1357 = vunpack.c.l.s4 1966171168
        %v1358 = vunpack.c.0.s8 %v1357
        %v1359 = vlaneseq
        %v1360 = vshrl.u32 %v1359, 7
        %v1361 = vsub.s32 %v1358, %v1360
        %v1362 = vrot.slane %v1346, %v1361
        %v1364 = vunpack.c.l.s4 1966171168
        %v1365 = vunpack.c.0.s8 %v1364
        %v1366 = vlaneseq
        %v1367 = vshrl.u32 %v1366, 7
        %v1368 = vsub.s32 %v1365, %v1367
        %v1369 = vrot.slane %v1347, %v1368
        %v1371 = vunpack.c.l.s4 1966171168
        %v1372 = vunpack.c.0.s8 %v1371
        %v1373 = vlaneseq
        %v1374 = vshrl.u32 %v1373, 7
        %v1375 = vsub.s32 %v1372, %v1374
        %v1376 = vrot.slane %v1348, %v1375
        %v1377 = vcombine.low %v1355, %v1362
        %v1378 = vcombine.low %v1369, %v1376
        %v1380 = vunpack.c.l.s4 1966171168
        %v1381 = vunpack.c.0.s8 %v1380
        %v1382 = vlaneseq
        %v1383 = vshrl.u32 %v1382, 7
        %v1384 = vsub.s32 %v1381, %v1383
        %v1385 = vrot.slane %v1377, %v1384
        %v1387 = vunpack.c.l.s4 1966171168
        %v1388 = vunpack.c.0.s8 %v1387
        %v1389 = vlaneseq
        %v1390 = vshrl.u32 %v1389, 7
        %v1391 = vsub.s32 %v1388, %v1390
        %v1392 = vrot.slane %v1378, %v1391
        %v1393 = vcombine.low %v1385, %v1392
        %v1395 = vmax.f32 %v1280, %v1393
        %1396 = vst [vmem:[#allocation2] sm:$0xff] %v1395
        // Predicated region
        $region89: #{tpu_custom_call.1} parent=71 // pred_check
          %p1397 = pneg %p511
        $region90: #{tpu_custom_call.1} parent=71 // pred_check_branch
          %1399 = sbr.rel (%p1397) target = $region92
        $region91: #{tpu_custom_call.1} parent=71 // pred_region
          %v1400 = vld [vmem:[#allocation2] sm:$0xff]
          %v1402 = vlaneseq
          %v1403 = vshrl.u32 %v1402, 7
          %v1404 = vsub.s32 0, %v1403
          %v1405 = vrot.slane %v1400, %v1404
          %v1406 = vlaneseq
          %v1407 = vshrl.u32 %v1406, 7
          %v1408 = vsub.s32 1, %v1407
          %v1409 = vrot.slane %v1400, %v1408
          %v1410 = vlaneseq
          %v1411 = vshrl.u32 %v1410, 7
          %v1412 = vsub.s32 2, %v1411
          %v1413 = vrot.slane %v1400, %v1412
          %v1414 = vlaneseq
          %v1415 = vshrl.u32 %v1414, 7
          %v1416 = vsub.s32 3, %v1415
          %v1417 = vrot.slane %v1400, %v1416
          %v1418 = vlaneseq
          %v1419 = vshrl.u32 %v1418, 7
          %v1420 = vsub.s32 4, %v1419
          %v1421 = vrot.slane %v1400, %v1420
          %v1422 = vlaneseq
          %v1423 = vshrl.u32 %v1422, 7
          %v1424 = vsub.s32 5, %v1423
          %v1425 = vrot.slane %v1400, %v1424
          %v1426 = vlaneseq
          %v1427 = vshrl.u32 %v1426, 7
          %v1428 = vsub.s32 6, %v1427
          %v1429 = vrot.slane %v1400, %v1428
          %v1430 = vlaneseq
          %v1431 = vshrl.u32 %v1430, 7
          %v1432 = vsub.s32 7, %v1431
          %v1433 = vrot.slane %v1400, %v1432
          %v1442 = vpack.c.bf16 %v1405, %v1405
          %v1443 = vpack.c.bf16 %v1409, %v1409
          %v1444 = vpack.c.bf16 %v1413, %v1413
          %v1445 = vpack.c.bf16 %v1417, %v1417
          %v1446 = vpack.c.bf16 %v1421, %v1421
          %v1447 = vpack.c.bf16 %v1425, %v1425
          %v1448 = vpack.c.bf16 %v1429, %v1429
          %v1449 = vpack.c.bf16 %v1433, %v1433
          %v1450 = vld [vmem:[#allocation6] sm:$0xff]
          %v1451 = vld [vmem:[#allocation6 + $0x8] sm:$0xff]
          %v1452 = vld [vmem:[#allocation6 + $0x10] sm:$0xff]
          %v1453 = vld [vmem:[#allocation6 + $0x18] sm:$0xff]
          %v1454 = vld [vmem:[#allocation6 + $0x20] sm:$0xff]
          %v1455 = vld [vmem:[#allocation6 + $0x28] sm:$0xff]
          %v1456 = vld [vmem:[#allocation6 + $0x30] sm:$0xff]
          %v1457 = vld [vmem:[#allocation6 + $0x38] sm:$0xff]
          %v1458 = vld [vmem:[#allocation6 + $0x40] sm:$0xff]
          %v1459 = vld [vmem:[#allocation6 + $0x48] sm:$0xff]
          %v1460 = vld [vmem:[#allocation6 + $0x50] sm:$0xff]
          %v1461 = vld [vmem:[#allocation6 + $0x58] sm:$0xff]
          %v1462 = vld [vmem:[#allocation6 + $0x60] sm:$0xff]
          %v1463 = vld [vmem:[#allocation6 + $0x68] sm:$0xff]
          %v1464 = vld [vmem:[#allocation6 + $0x70] sm:$0xff]
          %v1465 = vld [vmem:[#allocation6 + $0x78] sm:$0xff]
          %v1466 = vld [vmem:[#allocation6 + $0x80] sm:$0xff]
          %v1467 = vld [vmem:[#allocation6 + $0x88] sm:$0xff]
          %v1468 = vld [vmem:[#allocation6 + $0x90] sm:$0xff]
          %v1469 = vld [vmem:[#allocation6 + $0x98] sm:$0xff]
          %v1470 = vld [vmem:[#allocation6 + $0xa0] sm:$0xff]
          %v1471 = vld [vmem:[#allocation6 + $0xa8] sm:$0xff]
          %v1472 = vld [vmem:[#allocation6 + $0xb0] sm:$0xff]
          %v1473 = vld [vmem:[#allocation6 + $0xb8] sm:$0xff]
          %v1474 = vld [vmem:[#allocation6 + $0xc0] sm:$0xff]
          %v1475 = vld [vmem:[#allocation6 + $0xc8] sm:$0xff]
          %v1476 = vld [vmem:[#allocation6 + $0xd0] sm:$0xff]
          %v1477 = vld [vmem:[#allocation6 + $0xd8] sm:$0xff]
          %v1478 = vld [vmem:[#allocation6 + $0xe0] sm:$0xff]
          %v1479 = vld [vmem:[#allocation6 + $0xe8] sm:$0xff]
          %v1480 = vld [vmem:[#allocation6 + $0xf0] sm:$0xff]
          %v1481 = vld [vmem:[#allocation6 + $0xf8] sm:$0xff]
          %v1482 = vld [vmem:[#allocation6 + $0x100] sm:$0xff]
          %v1483 = vld [vmem:[#allocation6 + $0x108] sm:$0xff]
          %v1484 = vld [vmem:[#allocation6 + $0x110] sm:$0xff]
          %v1485 = vld [vmem:[#allocation6 + $0x118] sm:$0xff]
          %v1486 = vld [vmem:[#allocation6 + $0x120] sm:$0xff]
          %v1487 = vld [vmem:[#allocation6 + $0x128] sm:$0xff]
          %v1488 = vld [vmem:[#allocation6 + $0x130] sm:$0xff]
          %v1489 = vld [vmem:[#allocation6 + $0x138] sm:$0xff]
          %v1490 = vld [vmem:[#allocation6 + $0x140] sm:$0xff]
          %v1491 = vld [vmem:[#allocation6 + $0x148] sm:$0xff]
          %v1492 = vld [vmem:[#allocation6 + $0x150] sm:$0xff]
          %v1493 = vld [vmem:[#allocation6 + $0x158] sm:$0xff]
          %v1494 = vld [vmem:[#allocation6 + $0x160] sm:$0xff]
          %v1495 = vld [vmem:[#allocation6 + $0x168] sm:$0xff]
          %v1496 = vld [vmem:[#allocation6 + $0x170] sm:$0xff]
          %v1497 = vld [vmem:[#allocation6 + $0x178] sm:$0xff]
          %v1498 = vld [vmem:[#allocation6 + $0x180] sm:$0xff]
          %v1499 = vld [vmem:[#allocation6 + $0x188] sm:$0xff]
          %v1500 = vld [vmem:[#allocation6 + $0x190] sm:$0xff]
          %v1501 = vld [vmem:[#allocation6 + $0x198] sm:$0xff]
          %v1502 = vld [vmem:[#allocation6 + $0x1a0] sm:$0xff]
          %v1503 = vld [vmem:[#allocation6 + $0x1a8] sm:$0xff]
          %v1504 = vld [vmem:[#allocation6 + $0x1b0] sm:$0xff]
          %v1505 = vld [vmem:[#allocation6 + $0x1b8] sm:$0xff]
          %v1506 = vld [vmem:[#allocation6 + $0x1c0] sm:$0xff]
          %v1507 = vld [vmem:[#allocation6 + $0x1c8] sm:$0xff]
          %v1508 = vld [vmem:[#allocation6 + $0x1d0] sm:$0xff]
          %v1509 = vld [vmem:[#allocation6 + $0x1d8] sm:$0xff]
          %v1510 = vld [vmem:[#allocation6 + $0x1e0] sm:$0xff]
          %v1511 = vld [vmem:[#allocation6 + $0x1e8] sm:$0xff]
          %v1512 = vld [vmem:[#allocation6 + $0x1f0] sm:$0xff]
          %v1513 = vld [vmem:[#allocation6 + $0x1f8] sm:$0xff]
          %v1514 = vld [vmem:[#allocation6 + $0x200] sm:$0xff]
          %v1515 = vld [vmem:[#allocation6 + $0x208] sm:$0xff]
          %v1516 = vld [vmem:[#allocation6 + $0x210] sm:$0xff]
          %v1517 = vld [vmem:[#allocation6 + $0x218] sm:$0xff]
          %v1518 = vld [vmem:[#allocation6 + $0x220] sm:$0xff]
          %v1519 = vld [vmem:[#allocation6 + $0x228] sm:$0xff]
          %v1520 = vld [vmem:[#allocation6 + $0x230] sm:$0xff]
          %v1521 = vld [vmem:[#allocation6 + $0x238] sm:$0xff]
          %v1522 = vld [vmem:[#allocation6 + $0x240] sm:$0xff]
          %v1523 = vld [vmem:[#allocation6 + $0x248] sm:$0xff]
          %v1524 = vld [vmem:[#allocation6 + $0x250] sm:$0xff]
          %v1525 = vld [vmem:[#allocation6 + $0x258] sm:$0xff]
          %v1526 = vld [vmem:[#allocation6 + $0x260] sm:$0xff]
          %v1527 = vld [vmem:[#allocation6 + $0x268] sm:$0xff]
          %v1528 = vld [vmem:[#allocation6 + $0x270] sm:$0xff]
          %v1529 = vld [vmem:[#allocation6 + $0x278] sm:$0xff]
          %v1530 = vld [vmem:[#allocation6 + $0x280] sm:$0xff]
          %v1531 = vld [vmem:[#allocation6 + $0x288] sm:$0xff]
          %v1532 = vld [vmem:[#allocation6 + $0x290] sm:$0xff]
          %v1533 = vld [vmem:[#allocation6 + $0x298] sm:$0xff]
          %v1534 = vld [vmem:[#allocation6 + $0x2a0] sm:$0xff]
          %v1535 = vld [vmem:[#allocation6 + $0x2a8] sm:$0xff]
          %v1536 = vld [vmem:[#allocation6 + $0x2b0] sm:$0xff]
          %v1537 = vld [vmem:[#allocation6 + $0x2b8] sm:$0xff]
          %v1538 = vld [vmem:[#allocation6 + $0x2c0] sm:$0xff]
          %v1539 = vld [vmem:[#allocation6 + $0x2c8] sm:$0xff]
          %v1540 = vld [vmem:[#allocation6 + $0x2d0] sm:$0xff]
          %v1541 = vld [vmem:[#allocation6 + $0x2d8] sm:$0xff]
          %v1542 = vld [vmem:[#allocation6 + $0x2e0] sm:$0xff]
          %v1543 = vld [vmem:[#allocation6 + $0x2e8] sm:$0xff]
          %v1544 = vld [vmem:[#allocation6 + $0x2f0] sm:$0xff]
          %v1545 = vld [vmem:[#allocation6 + $0x2f8] sm:$0xff]
          %v1546 = vld [vmem:[#allocation6 + $0x300] sm:$0xff]
          %v1547 = vld [vmem:[#allocation6 + $0x308] sm:$0xff]
          %v1548 = vld [vmem:[#allocation6 + $0x310] sm:$0xff]
          %v1549 = vld [vmem:[#allocation6 + $0x318] sm:$0xff]
          %v1550 = vld [vmem:[#allocation6 + $0x320] sm:$0xff]
          %v1551 = vld [vmem:[#allocation6 + $0x328] sm:$0xff]
          %v1552 = vld [vmem:[#allocation6 + $0x330] sm:$0xff]
          %v1553 = vld [vmem:[#allocation6 + $0x338] sm:$0xff]
          %v1554 = vld [vmem:[#allocation6 + $0x340] sm:$0xff]
          %v1555 = vld [vmem:[#allocation6 + $0x348] sm:$0xff]
          %v1556 = vld [vmem:[#allocation6 + $0x350] sm:$0xff]
          %v1557 = vld [vmem:[#allocation6 + $0x358] sm:$0xff]
          %v1558 = vld [vmem:[#allocation6 + $0x360] sm:$0xff]
          %v1559 = vld [vmem:[#allocation6 + $0x368] sm:$0xff]
          %v1560 = vld [vmem:[#allocation6 + $0x370] sm:$0xff]
          %v1561 = vld [vmem:[#allocation6 + $0x378] sm:$0xff]
          %v1562 = vld [vmem:[#allocation6 + $0x380] sm:$0xff]
          %v1563 = vld [vmem:[#allocation6 + $0x388] sm:$0xff]
          %v1564 = vld [vmem:[#allocation6 + $0x390] sm:$0xff]
          %v1565 = vld [vmem:[#allocation6 + $0x398] sm:$0xff]
          %v1566 = vld [vmem:[#allocation6 + $0x3a0] sm:$0xff]
          %v1567 = vld [vmem:[#allocation6 + $0x3a8] sm:$0xff]
          %v1568 = vld [vmem:[#allocation6 + $0x3b0] sm:$0xff]
          %v1569 = vld [vmem:[#allocation6 + $0x3b8] sm:$0xff]
          %v1570 = vld [vmem:[#allocation6 + $0x3c0] sm:$0xff]
          %v1571 = vld [vmem:[#allocation6 + $0x3c8] sm:$0xff]
          %v1572 = vld [vmem:[#allocation6 + $0x3d0] sm:$0xff]
          %v1573 = vld [vmem:[#allocation6 + $0x3d8] sm:$0xff]
          %v1574 = vld [vmem:[#allocation6 + $0x3e0] sm:$0xff]
          %v1575 = vld [vmem:[#allocation6 + $0x3e8] sm:$0xff]
          %v1576 = vld [vmem:[#allocation6 + $0x3f0] sm:$0xff]
          %v1577 = vld [vmem:[#allocation6 + $0x3f8] sm:$0xff]
          %v1578 = vld [vmem:[#allocation6 + $0x400] sm:$0xff]
          %v1579 = vld [vmem:[#allocation6 + $0x408] sm:$0xff]
          %v1580 = vld [vmem:[#allocation6 + $0x410] sm:$0xff]
          %v1581 = vld [vmem:[#allocation6 + $0x418] sm:$0xff]
          %v1582 = vld [vmem:[#allocation6 + $0x420] sm:$0xff]
          %v1583 = vld [vmem:[#allocation6 + $0x428] sm:$0xff]
          %v1584 = vld [vmem:[#allocation6 + $0x430] sm:$0xff]
          %v1585 = vld [vmem:[#allocation6 + $0x438] sm:$0xff]
          %v1586 = vld [vmem:[#allocation6 + $0x440] sm:$0xff]
          %v1587 = vld [vmem:[#allocation6 + $0x448] sm:$0xff]
          %v1588 = vld [vmem:[#allocation6 + $0x450] sm:$0xff]
          %v1589 = vld [vmem:[#allocation6 + $0x458] sm:$0xff]
          %v1590 = vld [vmem:[#allocation6 + $0x460] sm:$0xff]
          %v1591 = vld [vmem:[#allocation6 + $0x468] sm:$0xff]
          %v1592 = vld [vmem:[#allocation6 + $0x470] sm:$0xff]
          %v1593 = vld [vmem:[#allocation6 + $0x478] sm:$0xff]
          %v1594 = vld [vmem:[#allocation6 + $0x480] sm:$0xff]
          %v1595 = vld [vmem:[#allocation6 + $0x488] sm:$0xff]
          %v1596 = vld [vmem:[#allocation6 + $0x490] sm:$0xff]
          %v1597 = vld [vmem:[#allocation6 + $0x498] sm:$0xff]
          %v1598 = vld [vmem:[#allocation6 + $0x4a0] sm:$0xff]
          %v1599 = vld [vmem:[#allocation6 + $0x4a8] sm:$0xff]
          %v1600 = vld [vmem:[#allocation6 + $0x4b0] sm:$0xff]
          %v1601 = vld [vmem:[#allocation6 + $0x4b8] sm:$0xff]
          %v1602 = vld [vmem:[#allocation6 + $0x4c0] sm:$0xff]
          %v1603 = vld [vmem:[#allocation6 + $0x4c8] sm:$0xff]
          %v1604 = vld [vmem:[#allocation6 + $0x4d0] sm:$0xff]
          %v1605 = vld [vmem:[#allocation6 + $0x4d8] sm:$0xff]
          %v1606 = vld [vmem:[#allocation6 + $0x4e0] sm:$0xff]
          %v1607 = vld [vmem:[#allocation6 + $0x4e8] sm:$0xff]
          %v1608 = vld [vmem:[#allocation6 + $0x4f0] sm:$0xff]
          %v1609 = vld [vmem:[#allocation6 + $0x4f8] sm:$0xff]
          %v1610 = vld [vmem:[#allocation6 + $0x500] sm:$0xff]
          %v1611 = vld [vmem:[#allocation6 + $0x508] sm:$0xff]
          %v1612 = vld [vmem:[#allocation6 + $0x510] sm:$0xff]
          %v1613 = vld [vmem:[#allocation6 + $0x518] sm:$0xff]
          %v1614 = vld [vmem:[#allocation6 + $0x520] sm:$0xff]
          %v1615 = vld [vmem:[#allocation6 + $0x528] sm:$0xff]
          %v1616 = vld [vmem:[#allocation6 + $0x530] sm:$0xff]
          %v1617 = vld [vmem:[#allocation6 + $0x538] sm:$0xff]
          %v1618 = vld [vmem:[#allocation6 + $0x540] sm:$0xff]
          %v1619 = vld [vmem:[#allocation6 + $0x548] sm:$0xff]
          %v1620 = vld [vmem:[#allocation6 + $0x550] sm:$0xff]
          %v1621 = vld [vmem:[#allocation6 + $0x558] sm:$0xff]
          %v1622 = vld [vmem:[#allocation6 + $0x560] sm:$0xff]
          %v1623 = vld [vmem:[#allocation6 + $0x568] sm:$0xff]
          %v1624 = vld [vmem:[#allocation6 + $0x570] sm:$0xff]
          %v1625 = vld [vmem:[#allocation6 + $0x578] sm:$0xff]
          %v1626 = vld [vmem:[#allocation6 + $0x580] sm:$0xff]
          %v1627 = vld [vmem:[#allocation6 + $0x588] sm:$0xff]
          %v1628 = vld [vmem:[#allocation6 + $0x590] sm:$0xff]
          %v1629 = vld [vmem:[#allocation6 + $0x598] sm:$0xff]
          %v1630 = vld [vmem:[#allocation6 + $0x5a0] sm:$0xff]
          %v1631 = vld [vmem:[#allocation6 + $0x5a8] sm:$0xff]
          %v1632 = vld [vmem:[#allocation6 + $0x5b0] sm:$0xff]
          %v1633 = vld [vmem:[#allocation6 + $0x5b8] sm:$0xff]
          %v1634 = vld [vmem:[#allocation6 + $0x5c0] sm:$0xff]
          %v1635 = vld [vmem:[#allocation6 + $0x5c8] sm:$0xff]
          %v1636 = vld [vmem:[#allocation6 + $0x5d0] sm:$0xff]
          %v1637 = vld [vmem:[#allocation6 + $0x5d8] sm:$0xff]
          %v1638 = vld [vmem:[#allocation6 + $0x5e0] sm:$0xff]
          %v1639 = vld [vmem:[#allocation6 + $0x5e8] sm:$0xff]
          %v1640 = vld [vmem:[#allocation6 + $0x5f0] sm:$0xff]
          %v1641 = vld [vmem:[#allocation6 + $0x5f8] sm:$0xff]
          %v1642 = vld [vmem:[#allocation6 + $0x600] sm:$0xff]
          %v1643 = vld [vmem:[#allocation6 + $0x608] sm:$0xff]
          %v1644 = vld [vmem:[#allocation6 + $0x610] sm:$0xff]
          %v1645 = vld [vmem:[#allocation6 + $0x618] sm:$0xff]
          %v1646 = vld [vmem:[#allocation6 + $0x620] sm:$0xff]
          %v1647 = vld [vmem:[#allocation6 + $0x628] sm:$0xff]
          %v1648 = vld [vmem:[#allocation6 + $0x630] sm:$0xff]
          %v1649 = vld [vmem:[#allocation6 + $0x638] sm:$0xff]
          %v1650 = vld [vmem:[#allocation6 + $0x640] sm:$0xff]
          %v1651 = vld [vmem:[#allocation6 + $0x648] sm:$0xff]
          %v1652 = vld [vmem:[#allocation6 + $0x650] sm:$0xff]
          %v1653 = vld [vmem:[#allocation6 + $0x658] sm:$0xff]
          %v1654 = vld [vmem:[#allocation6 + $0x660] sm:$0xff]
          %v1655 = vld [vmem:[#allocation6 + $0x668] sm:$0xff]
          %v1656 = vld [vmem:[#allocation6 + $0x670] sm:$0xff]
          %v1657 = vld [vmem:[#allocation6 + $0x678] sm:$0xff]
          %v1658 = vld [vmem:[#allocation6 + $0x680] sm:$0xff]
          %v1659 = vld [vmem:[#allocation6 + $0x688] sm:$0xff]
          %v1660 = vld [vmem:[#allocation6 + $0x690] sm:$0xff]
          %v1661 = vld [vmem:[#allocation6 + $0x698] sm:$0xff]
          %v1662 = vld [vmem:[#allocation6 + $0x6a0] sm:$0xff]
          %v1663 = vld [vmem:[#allocation6 + $0x6a8] sm:$0xff]
          %v1664 = vld [vmem:[#allocation6 + $0x6b0] sm:$0xff]
          %v1665 = vld [vmem:[#allocation6 + $0x6b8] sm:$0xff]
          %v1666 = vld [vmem:[#allocation6 + $0x6c0] sm:$0xff]
          %v1667 = vld [vmem:[#allocation6 + $0x6c8] sm:$0xff]
          %v1668 = vld [vmem:[#allocation6 + $0x6d0] sm:$0xff]
          %v1669 = vld [vmem:[#allocation6 + $0x6d8] sm:$0xff]
          %v1670 = vld [vmem:[#allocation6 + $0x6e0] sm:$0xff]
          %v1671 = vld [vmem:[#allocation6 + $0x6e8] sm:$0xff]
          %v1672 = vld [vmem:[#allocation6 + $0x6f0] sm:$0xff]
          %v1673 = vld [vmem:[#allocation6 + $0x6f8] sm:$0xff]
          %v1674 = vld [vmem:[#allocation6 + $0x700] sm:$0xff]
          %v1675 = vld [vmem:[#allocation6 + $0x708] sm:$0xff]
          %v1676 = vld [vmem:[#allocation6 + $0x710] sm:$0xff]
          %v1677 = vld [vmem:[#allocation6 + $0x718] sm:$0xff]
          %v1678 = vld [vmem:[#allocation6 + $0x720] sm:$0xff]
          %v1679 = vld [vmem:[#allocation6 + $0x728] sm:$0xff]
          %v1680 = vld [vmem:[#allocation6 + $0x730] sm:$0xff]
          %v1681 = vld [vmem:[#allocation6 + $0x738] sm:$0xff]
          %v1682 = vld [vmem:[#allocation6 + $0x740] sm:$0xff]
          %v1683 = vld [vmem:[#allocation6 + $0x748] sm:$0xff]
          %v1684 = vld [vmem:[#allocation6 + $0x750] sm:$0xff]
          %v1685 = vld [vmem:[#allocation6 + $0x758] sm:$0xff]
          %v1686 = vld [vmem:[#allocation6 + $0x760] sm:$0xff]
          %v1687 = vld [vmem:[#allocation6 + $0x768] sm:$0xff]
          %v1688 = vld [vmem:[#allocation6 + $0x770] sm:$0xff]
          %v1689 = vld [vmem:[#allocation6 + $0x778] sm:$0xff]
          %v1690 = vld [vmem:[#allocation6 + $0x780] sm:$0xff]
          %v1691 = vld [vmem:[#allocation6 + $0x788] sm:$0xff]
          %v1692 = vld [vmem:[#allocation6 + $0x790] sm:$0xff]
          %v1693 = vld [vmem:[#allocation6 + $0x798] sm:$0xff]
          %v1694 = vld [vmem:[#allocation6 + $0x7a0] sm:$0xff]
          %v1695 = vld [vmem:[#allocation6 + $0x7a8] sm:$0xff]
          %v1696 = vld [vmem:[#allocation6 + $0x7b0] sm:$0xff]
          %v1697 = vld [vmem:[#allocation6 + $0x7b8] sm:$0xff]
          %v1698 = vld [vmem:[#allocation6 + $0x7c0] sm:$0xff]
          %v1699 = vld [vmem:[#allocation6 + $0x7c8] sm:$0xff]
          %v1700 = vld [vmem:[#allocation6 + $0x7d0] sm:$0xff]
          %v1701 = vld [vmem:[#allocation6 + $0x7d8] sm:$0xff]
          %v1702 = vld [vmem:[#allocation6 + $0x7e0] sm:$0xff]
          %v1703 = vld [vmem:[#allocation6 + $0x7e8] sm:$0xff]
          %v1704 = vld [vmem:[#allocation6 + $0x7f0] sm:$0xff]
          %v1705 = vld [vmem:[#allocation6 + $0x7f8] sm:$0xff]
          %v1706 = vld [vmem:[%s8] sm:$0xf]
          %v1963 = vunpack.c.l.b16 %v1450
          %v1964 = vunpack.c.h.b16 %v1450
          %v1965 = vunpack.c.l.b16 %v1451
          %v1966 = vunpack.c.h.b16 %v1451
          %v1967 = vunpack.c.l.b16 %v1452
          %v1968 = vunpack.c.h.b16 %v1452
          %v1969 = vunpack.c.l.b16 %v1453
          %v1970 = vunpack.c.h.b16 %v1453
          %v1971 = vunpack.c.l.b16 %v1454
          %v1972 = vunpack.c.h.b16 %v1454
          %v1973 = vunpack.c.l.b16 %v1455
          %v1974 = vunpack.c.h.b16 %v1455
          %v1975 = vunpack.c.l.b16 %v1456
          %v1976 = vunpack.c.h.b16 %v1456
          %v1977 = vunpack.c.l.b16 %v1457
          %v1978 = vunpack.c.h.b16 %v1457
          %v1979 = vunpack.c.l.b16 %v1458
          %v1980 = vunpack.c.h.b16 %v1458
          %v1981 = vunpack.c.l.b16 %v1459
          %v1982 = vunpack.c.h.b16 %v1459
          %v1983 = vunpack.c.l.b16 %v1460
          %v1984 = vunpack.c.h.b16 %v1460
          %v1985 = vunpack.c.l.b16 %v1461
          %v1986 = vunpack.c.h.b16 %v1461
          %v1987 = vunpack.c.l.b16 %v1462
          %v1988 = vunpack.c.h.b16 %v1462
          %v1989 = vunpack.c.l.b16 %v1463
          %v1990 = vunpack.c.h.b16 %v1463
          %v1991 = vunpack.c.l.b16 %v1464
          %v1992 = vunpack.c.h.b16 %v1464
          %v1993 = vunpack.c.l.b16 %v1465
          %v1994 = vunpack.c.h.b16 %v1465
          %v1995 = vunpack.c.l.b16 %v1466
          %v1996 = vunpack.c.h.b16 %v1466
          %v1997 = vunpack.c.l.b16 %v1467
          %v1998 = vunpack.c.h.b16 %v1467
          %v1999 = vunpack.c.l.b16 %v1468
          %v2000 = vunpack.c.h.b16 %v1468
          %v2001 = vunpack.c.l.b16 %v1469
          %v2002 = vunpack.c.h.b16 %v1469
          %v2003 = vunpack.c.l.b16 %v1470
          %v2004 = vunpack.c.h.b16 %v1470
          %v2005 = vunpack.c.l.b16 %v1471
          %v2006 = vunpack.c.h.b16 %v1471
          %v2007 = vunpack.c.l.b16 %v1472
          %v2008 = vunpack.c.h.b16 %v1472
          %v2009 = vunpack.c.l.b16 %v1473
          %v2010 = vunpack.c.h.b16 %v1473
          %v2011 = vunpack.c.l.b16 %v1474
          %v2012 = vunpack.c.h.b16 %v1474
          %v2013 = vunpack.c.l.b16 %v1475
          %v2014 = vunpack.c.h.b16 %v1475
          %v2015 = vunpack.c.l.b16 %v1476
          %v2016 = vunpack.c.h.b16 %v1476
          %v2017 = vunpack.c.l.b16 %v1477
          %v2018 = vunpack.c.h.b16 %v1477
          %v2019 = vunpack.c.l.b16 %v1478
          %v2020 = vunpack.c.h.b16 %v1478
          %v2021 = vunpack.c.l.b16 %v1479
          %v2022 = vunpack.c.h.b16 %v1479
          %v2023 = vunpack.c.l.b16 %v1480
          %v2024 = vunpack.c.h.b16 %v1480
          %v2025 = vunpack.c.l.b16 %v1481
          %v2026 = vunpack.c.h.b16 %v1481
          %v2027 = vunpack.c.l.b16 %v1482
          %v2028 = vunpack.c.h.b16 %v1482
          %v2029 = vunpack.c.l.b16 %v1483
          %v2030 = vunpack.c.h.b16 %v1483
          %v2031 = vunpack.c.l.b16 %v1484
          %v2032 = vunpack.c.h.b16 %v1484
          %v2033 = vunpack.c.l.b16 %v1485
          %v2034 = vunpack.c.h.b16 %v1485
          %v2035 = vunpack.c.l.b16 %v1486
          %v2036 = vunpack.c.h.b16 %v1486
          %v2037 = vunpack.c.l.b16 %v1487
          %v2038 = vunpack.c.h.b16 %v1487
          %v2039 = vunpack.c.l.b16 %v1488
          %v2040 = vunpack.c.h.b16 %v1488
          %v2041 = vunpack.c.l.b16 %v1489
          %v2042 = vunpack.c.h.b16 %v1489
          %v2043 = vunpack.c.l.b16 %v1490
          %v2044 = vunpack.c.h.b16 %v1490
          %v2045 = vunpack.c.l.b16 %v1491
          %v2046 = vunpack.c.h.b16 %v1491
          %v2047 = vunpack.c.l.b16 %v1492
          %v2048 = vunpack.c.h.b16 %v1492
          %v2049 = vunpack.c.l.b16 %v1493
          %v2050 = vunpack.c.h.b16 %v1493
          %v2051 = vunpack.c.l.b16 %v1494
          %v2052 = vunpack.c.h.b16 %v1494
          %v2053 = vunpack.c.l.b16 %v1495
          %v2054 = vunpack.c.h.b16 %v1495
          %v2055 = vunpack.c.l.b16 %v1496
          %v2056 = vunpack.c.h.b16 %v1496
          %v2057 = vunpack.c.l.b16 %v1497
          %v2058 = vunpack.c.h.b16 %v1497
          %v2059 = vunpack.c.l.b16 %v1498
          %v2060 = vunpack.c.h.b16 %v1498
          %v2061 = vunpack.c.l.b16 %v1499
          %v2062 = vunpack.c.h.b16 %v1499
          %v2063 = vunpack.c.l.b16 %v1500
          %v2064 = vunpack.c.h.b16 %v1500
          %v2065 = vunpack.c.l.b16 %v1501
          %v2066 = vunpack.c.h.b16 %v1501
          %v2067 = vunpack.c.l.b16 %v1502
          %v2068 = vunpack.c.h.b16 %v1502
          %v2069 = vunpack.c.l.b16 %v1503
          %v2070 = vunpack.c.h.b16 %v1503
          %v2071 = vunpack.c.l.b16 %v1504
          %v2072 = vunpack.c.h.b16 %v1504
          %v2073 = vunpack.c.l.b16 %v1505
          %v2074 = vunpack.c.h.b16 %v1505
          %v2075 = vunpack.c.l.b16 %v1506
          %v2076 = vunpack.c.h.b16 %v1506
          %v2077 = vunpack.c.l.b16 %v1507
          %v2078 = vunpack.c.h.b16 %v1507
          %v2079 = vunpack.c.l.b16 %v1508
          %v2080 = vunpack.c.h.b16 %v1508
          %v2081 = vunpack.c.l.b16 %v1509
          %v2082 = vunpack.c.h.b16 %v1509
          %v2083 = vunpack.c.l.b16 %v1510
          %v2084 = vunpack.c.h.b16 %v1510
          %v2085 = vunpack.c.l.b16 %v1511
          %v2086 = vunpack.c.h.b16 %v1511
          %v2087 = vunpack.c.l.b16 %v1512
          %v2088 = vunpack.c.h.b16 %v1512
          %v2089 = vunpack.c.l.b16 %v1513
          %v2090 = vunpack.c.h.b16 %v1513
          %v2091 = vunpack.c.l.b16 %v1514
          %v2092 = vunpack.c.h.b16 %v1514
          %v2093 = vunpack.c.l.b16 %v1515
          %v2094 = vunpack.c.h.b16 %v1515
          %v2095 = vunpack.c.l.b16 %v1516
          %v2096 = vunpack.c.h.b16 %v1516
          %v2097 = vunpack.c.l.b16 %v1517
          %v2098 = vunpack.c.h.b16 %v1517
          %v2099 = vunpack.c.l.b16 %v1518
          %v2100 = vunpack.c.h.b16 %v1518
          %v2101 = vunpack.c.l.b16 %v1519
          %v2102 = vunpack.c.h.b16 %v1519
          %v2103 = vunpack.c.l.b16 %v1520
          %v2104 = vunpack.c.h.b16 %v1520
          %v2105 = vunpack.c.l.b16 %v1521
          %v2106 = vunpack.c.h.b16 %v1521
          %v2107 = vunpack.c.l.b16 %v1522
          %v2108 = vunpack.c.h.b16 %v1522
          %v2109 = vunpack.c.l.b16 %v1523
          %v2110 = vunpack.c.h.b16 %v1523
          %v2111 = vunpack.c.l.b16 %v1524
          %v2112 = vunpack.c.h.b16 %v1524
          %v2113 = vunpack.c.l.b16 %v1525
          %v2114 = vunpack.c.h.b16 %v1525
          %v2115 = vunpack.c.l.b16 %v1526
          %v2116 = vunpack.c.h.b16 %v1526
          %v2117 = vunpack.c.l.b16 %v1527
          %v2118 = vunpack.c.h.b16 %v1527
          %v2119 = vunpack.c.l.b16 %v1528
          %v2120 = vunpack.c.h.b16 %v1528
          %v2121 = vunpack.c.l.b16 %v1529
          %v2122 = vunpack.c.h.b16 %v1529
          %v2123 = vunpack.c.l.b16 %v1530
          %v2124 = vunpack.c.h.b16 %v1530
          %v2125 = vunpack.c.l.b16 %v1531
          %v2126 = vunpack.c.h.b16 %v1531
          %v2127 = vunpack.c.l.b16 %v1532
          %v2128 = vunpack.c.h.b16 %v1532
          %v2129 = vunpack.c.l.b16 %v1533
          %v2130 = vunpack.c.h.b16 %v1533
          %v2131 = vunpack.c.l.b16 %v1534
          %v2132 = vunpack.c.h.b16 %v1534
          %v2133 = vunpack.c.l.b16 %v1535
          %v2134 = vunpack.c.h.b16 %v1535
          %v2135 = vunpack.c.l.b16 %v1536
          %v2136 = vunpack.c.h.b16 %v1536
          %v2137 = vunpack.c.l.b16 %v1537
          %v2138 = vunpack.c.h.b16 %v1537
          %v2139 = vunpack.c.l.b16 %v1538
          %v2140 = vunpack.c.h.b16 %v1538
          %v2141 = vunpack.c.l.b16 %v1539
          %v2142 = vunpack.c.h.b16 %v1539
          %v2143 = vunpack.c.l.b16 %v1540
          %v2144 = vunpack.c.h.b16 %v1540
          %v2145 = vunpack.c.l.b16 %v1541
          %v2146 = vunpack.c.h.b16 %v1541
          %v2147 = vunpack.c.l.b16 %v1542
          %v2148 = vunpack.c.h.b16 %v1542
          %v2149 = vunpack.c.l.b16 %v1543
          %v2150 = vunpack.c.h.b16 %v1543
          %v2151 = vunpack.c.l.b16 %v1544
          %v2152 = vunpack.c.h.b16 %v1544
          %v2153 = vunpack.c.l.b16 %v1545
          %v2154 = vunpack.c.h.b16 %v1545
          %v2155 = vunpack.c.l.b16 %v1546
          %v2156 = vunpack.c.h.b16 %v1546
          %v2157 = vunpack.c.l.b16 %v1547
          %v2158 = vunpack.c.h.b16 %v1547
          %v2159 = vunpack.c.l.b16 %v1548
          %v2160 = vunpack.c.h.b16 %v1548
          %v2161 = vunpack.c.l.b16 %v1549
          %v2162 = vunpack.c.h.b16 %v1549
          %v2163 = vunpack.c.l.b16 %v1550
          %v2164 = vunpack.c.h.b16 %v1550
          %v2165 = vunpack.c.l.b16 %v1551
          %v2166 = vunpack.c.h.b16 %v1551
          %v2167 = vunpack.c.l.b16 %v1552
          %v2168 = vunpack.c.h.b16 %v1552
          %v2169 = vunpack.c.l.b16 %v1553
          %v2170 = vunpack.c.h.b16 %v1553
          %v2171 = vunpack.c.l.b16 %v1554
          %v2172 = vunpack.c.h.b16 %v1554
          %v2173 = vunpack.c.l.b16 %v1555
          %v2174 = vunpack.c.h.b16 %v1555
          %v2175 = vunpack.c.l.b16 %v1556
          %v2176 = vunpack.c.h.b16 %v1556
          %v2177 = vunpack.c.l.b16 %v1557
          %v2178 = vunpack.c.h.b16 %v1557
          %v2179 = vunpack.c.l.b16 %v1558
          %v2180 = vunpack.c.h.b16 %v1558
          %v2181 = vunpack.c.l.b16 %v1559
          %v2182 = vunpack.c.h.b16 %v1559
          %v2183 = vunpack.c.l.b16 %v1560
          %v2184 = vunpack.c.h.b16 %v1560
          %v2185 = vunpack.c.l.b16 %v1561
          %v2186 = vunpack.c.h.b16 %v1561
          %v2187 = vunpack.c.l.b16 %v1562
          %v2188 = vunpack.c.h.b16 %v1562
          %v2189 = vunpack.c.l.b16 %v1563
          %v2190 = vunpack.c.h.b16 %v1563
          %v2191 = vunpack.c.l.b16 %v1564
          %v2192 = vunpack.c.h.b16 %v1564
          %v2193 = vunpack.c.l.b16 %v1565
          %v2194 = vunpack.c.h.b16 %v1565
          %v2195 = vunpack.c.l.b16 %v1566
          %v2196 = vunpack.c.h.b16 %v1566
          %v2197 = vunpack.c.l.b16 %v1567
          %v2198 = vunpack.c.h.b16 %v1567
          %v2199 = vunpack.c.l.b16 %v1568
          %v2200 = vunpack.c.h.b16 %v1568
          %v2201 = vunpack.c.l.b16 %v1569
          %v2202 = vunpack.c.h.b16 %v1569
          %v2203 = vunpack.c.l.b16 %v1570
          %v2204 = vunpack.c.h.b16 %v1570
          %v2205 = vunpack.c.l.b16 %v1571
          %v2206 = vunpack.c.h.b16 %v1571
          %v2207 = vunpack.c.l.b16 %v1572
          %v2208 = vunpack.c.h.b16 %v1572
          %v2209 = vunpack.c.l.b16 %v1573
          %v2210 = vunpack.c.h.b16 %v1573
          %v2211 = vunpack.c.l.b16 %v1574
          %v2212 = vunpack.c.h.b16 %v1574
          %v2213 = vunpack.c.l.b16 %v1575
          %v2214 = vunpack.c.h.b16 %v1575
          %v2215 = vunpack.c.l.b16 %v1576
          %v2216 = vunpack.c.h.b16 %v1576
          %v2217 = vunpack.c.l.b16 %v1577
          %v2218 = vunpack.c.h.b16 %v1577
          %v2219 = vunpack.c.l.b16 %v1578
          %v2220 = vunpack.c.h.b16 %v1578
          %v2221 = vunpack.c.l.b16 %v1579
          %v2222 = vunpack.c.h.b16 %v1579
          %v2223 = vunpack.c.l.b16 %v1580
          %v2224 = vunpack.c.h.b16 %v1580
          %v2225 = vunpack.c.l.b16 %v1581
          %v2226 = vunpack.c.h.b16 %v1581
          %v2227 = vunpack.c.l.b16 %v1582
          %v2228 = vunpack.c.h.b16 %v1582
          %v2229 = vunpack.c.l.b16 %v1583
          %v2230 = vunpack.c.h.b16 %v1583
          %v2231 = vunpack.c.l.b16 %v1584
          %v2232 = vunpack.c.h.b16 %v1584
          %v2233 = vunpack.c.l.b16 %v1585
          %v2234 = vunpack.c.h.b16 %v1585
          %v2235 = vunpack.c.l.b16 %v1586
          %v2236 = vunpack.c.h.b16 %v1586
          %v2237 = vunpack.c.l.b16 %v1587
          %v2238 = vunpack.c.h.b16 %v1587
          %v2239 = vunpack.c.l.b16 %v1588
          %v2240 = vunpack.c.h.b16 %v1588
          %v2241 = vunpack.c.l.b16 %v1589
          %v2242 = vunpack.c.h.b16 %v1589
          %v2243 = vunpack.c.l.b16 %v1590
          %v2244 = vunpack.c.h.b16 %v1590
          %v2245 = vunpack.c.l.b16 %v1591
          %v2246 = vunpack.c.h.b16 %v1591
          %v2247 = vunpack.c.l.b16 %v1592
          %v2248 = vunpack.c.h.b16 %v1592
          %v2249 = vunpack.c.l.b16 %v1593
          %v2250 = vunpack.c.h.b16 %v1593
          %v2251 = vunpack.c.l.b16 %v1594
          %v2252 = vunpack.c.h.b16 %v1594
          %v2253 = vunpack.c.l.b16 %v1595
          %v2254 = vunpack.c.h.b16 %v1595
          %v2255 = vunpack.c.l.b16 %v1596
          %v2256 = vunpack.c.h.b16 %v1596
          %v2257 = vunpack.c.l.b16 %v1597
          %v2258 = vunpack.c.h.b16 %v1597
          %v2259 = vunpack.c.l.b16 %v1598
          %v2260 = vunpack.c.h.b16 %v1598
          %v2261 = vunpack.c.l.b16 %v1599
          %v2262 = vunpack.c.h.b16 %v1599
          %v2263 = vunpack.c.l.b16 %v1600
          %v2264 = vunpack.c.h.b16 %v1600
          %v2265 = vunpack.c.l.b16 %v1601
          %v2266 = vunpack.c.h.b16 %v1601
          %v2267 = vunpack.c.l.b16 %v1602
          %v2268 = vunpack.c.h.b16 %v1602
          %v2269 = vunpack.c.l.b16 %v1603
          %v2270 = vunpack.c.h.b16 %v1603
          %v2271 = vunpack.c.l.b16 %v1604
          %v2272 = vunpack.c.h.b16 %v1604
          %v2273 = vunpack.c.l.b16 %v1605
          %v2274 = vunpack.c.h.b16 %v1605
          %v2275 = vunpack.c.l.b16 %v1606
          %v2276 = vunpack.c.h.b16 %v1606
          %v2277 = vunpack.c.l.b16 %v1607
          %v2278 = vunpack.c.h.b16 %v1607
          %v2279 = vunpack.c.l.b16 %v1608
          %v2280 = vunpack.c.h.b16 %v1608
          %v2281 = vunpack.c.l.b16 %v1609
          %v2282 = vunpack.c.h.b16 %v1609
          %v2283 = vunpack.c.l.b16 %v1610
          %v2284 = vunpack.c.h.b16 %v1610
          %v2285 = vunpack.c.l.b16 %v1611
          %v2286 = vunpack.c.h.b16 %v1611
          %v2287 = vunpack.c.l.b16 %v1612
          %v2288 = vunpack.c.h.b16 %v1612
          %v2289 = vunpack.c.l.b16 %v1613
          %v2290 = vunpack.c.h.b16 %v1613
          %v2291 = vunpack.c.l.b16 %v1614
          %v2292 = vunpack.c.h.b16 %v1614
          %v2293 = vunpack.c.l.b16 %v1615
          %v2294 = vunpack.c.h.b16 %v1615
          %v2295 = vunpack.c.l.b16 %v1616
          %v2296 = vunpack.c.h.b16 %v1616
          %v2297 = vunpack.c.l.b16 %v1617
          %v2298 = vunpack.c.h.b16 %v1617
          %v2299 = vunpack.c.l.b16 %v1618
          %v2300 = vunpack.c.h.b16 %v1618
          %v2301 = vunpack.c.l.b16 %v1619
          %v2302 = vunpack.c.h.b16 %v1619
          %v2303 = vunpack.c.l.b16 %v1620
          %v2304 = vunpack.c.h.b16 %v1620
          %v2305 = vunpack.c.l.b16 %v1621
          %v2306 = vunpack.c.h.b16 %v1621
          %v2307 = vunpack.c.l.b16 %v1622
          %v2308 = vunpack.c.h.b16 %v1622
          %v2309 = vunpack.c.l.b16 %v1623
          %v2310 = vunpack.c.h.b16 %v1623
          %v2311 = vunpack.c.l.b16 %v1624
          %v2312 = vunpack.c.h.b16 %v1624
          %v2313 = vunpack.c.l.b16 %v1625
          %v2314 = vunpack.c.h.b16 %v1625
          %v2315 = vunpack.c.l.b16 %v1626
          %v2316 = vunpack.c.h.b16 %v1626
          %v2317 = vunpack.c.l.b16 %v1627
          %v2318 = vunpack.c.h.b16 %v1627
          %v2319 = vunpack.c.l.b16 %v1628
          %v2320 = vunpack.c.h.b16 %v1628
          %v2321 = vunpack.c.l.b16 %v1629
          %v2322 = vunpack.c.h.b16 %v1629
          %v2323 = vunpack.c.l.b16 %v1630
          %v2324 = vunpack.c.h.b16 %v1630
          %v2325 = vunpack.c.l.b16 %v1631
          %v2326 = vunpack.c.h.b16 %v1631
          %v2327 = vunpack.c.l.b16 %v1632
          %v2328 = vunpack.c.h.b16 %v1632
          %v2329 = vunpack.c.l.b16 %v1633
          %v2330 = vunpack.c.h.b16 %v1633
          %v2331 = vunpack.c.l.b16 %v1634
          %v2332 = vunpack.c.h.b16 %v1634
          %v2333 = vunpack.c.l.b16 %v1635
          %v2334 = vunpack.c.h.b16 %v1635
          %v2335 = vunpack.c.l.b16 %v1636
          %v2336 = vunpack.c.h.b16 %v1636
          %v2337 = vunpack.c.l.b16 %v1637
          %v2338 = vunpack.c.h.b16 %v1637
          %v2339 = vunpack.c.l.b16 %v1638
          %v2340 = vunpack.c.h.b16 %v1638
          %v2341 = vunpack.c.l.b16 %v1639
          %v2342 = vunpack.c.h.b16 %v1639
          %v2343 = vunpack.c.l.b16 %v1640
          %v2344 = vunpack.c.h.b16 %v1640
          %v2345 = vunpack.c.l.b16 %v1641
          %v2346 = vunpack.c.h.b16 %v1641
          %v2347 = vunpack.c.l.b16 %v1642
          %v2348 = vunpack.c.h.b16 %v1642
          %v2349 = vunpack.c.l.b16 %v1643
          %v2350 = vunpack.c.h.b16 %v1643
          %v2351 = vunpack.c.l.b16 %v1644
          %v2352 = vunpack.c.h.b16 %v1644
          %v2353 = vunpack.c.l.b16 %v1645
          %v2354 = vunpack.c.h.b16 %v1645
          %v2355 = vunpack.c.l.b16 %v1646
          %v2356 = vunpack.c.h.b16 %v1646
          %v2357 = vunpack.c.l.b16 %v1647
          %v2358 = vunpack.c.h.b16 %v1647
          %v2359 = vunpack.c.l.b16 %v1648
          %v2360 = vunpack.c.h.b16 %v1648
          %v2361 = vunpack.c.l.b16 %v1649
          %v2362 = vunpack.c.h.b16 %v1649
          %v2363 = vunpack.c.l.b16 %v1650
          %v2364 = vunpack.c.h.b16 %v1650
          %v2365 = vunpack.c.l.b16 %v1651
          %v2366 = vunpack.c.h.b16 %v1651
          %v2367 = vunpack.c.l.b16 %v1652
          %v2368 = vunpack.c.h.b16 %v1652
          %v2369 = vunpack.c.l.b16 %v1653
          %v2370 = vunpack.c.h.b16 %v1653
          %v2371 = vunpack.c.l.b16 %v1654
          %v2372 = vunpack.c.h.b16 %v1654
          %v2373 = vunpack.c.l.b16 %v1655
          %v2374 = vunpack.c.h.b16 %v1655
          %v2375 = vunpack.c.l.b16 %v1656
          %v2376 = vunpack.c.h.b16 %v1656
          %v2377 = vunpack.c.l.b16 %v1657
          %v2378 = vunpack.c.h.b16 %v1657
          %v2379 = vunpack.c.l.b16 %v1658
          %v2380 = vunpack.c.h.b16 %v1658
          %v2381 = vunpack.c.l.b16 %v1659
          %v2382 = vunpack.c.h.b16 %v1659
          %v2383 = vunpack.c.l.b16 %v1660
          %v2384 = vunpack.c.h.b16 %v1660
          %v2385 = vunpack.c.l.b16 %v1661
          %v2386 = vunpack.c.h.b16 %v1661
          %v2387 = vunpack.c.l.b16 %v1662
          %v2388 = vunpack.c.h.b16 %v1662
          %v2389 = vunpack.c.l.b16 %v1663
          %v2390 = vunpack.c.h.b16 %v1663
          %v2391 = vunpack.c.l.b16 %v1664
          %v2392 = vunpack.c.h.b16 %v1664
          %v2393 = vunpack.c.l.b16 %v1665
          %v2394 = vunpack.c.h.b16 %v1665
          %v2395 = vunpack.c.l.b16 %v1666
          %v2396 = vunpack.c.h.b16 %v1666
          %v2397 = vunpack.c.l.b16 %v1667
          %v2398 = vunpack.c.h.b16 %v1667
          %v2399 = vunpack.c.l.b16 %v1668
          %v2400 = vunpack.c.h.b16 %v1668
          %v2401 = vunpack.c.l.b16 %v1669
          %v2402 = vunpack.c.h.b16 %v1669
          %v2403 = vunpack.c.l.b16 %v1670
          %v2404 = vunpack.c.h.b16 %v1670
          %v2405 = vunpack.c.l.b16 %v1671
          %v2406 = vunpack.c.h.b16 %v1671
          %v2407 = vunpack.c.l.b16 %v1672
          %v2408 = vunpack.c.h.b16 %v1672
          %v2409 = vunpack.c.l.b16 %v1673
          %v2410 = vunpack.c.h.b16 %v1673
          %v2411 = vunpack.c.l.b16 %v1674
          %v2412 = vunpack.c.h.b16 %v1674
          %v2413 = vunpack.c.l.b16 %v1675
          %v2414 = vunpack.c.h.b16 %v1675
          %v2415 = vunpack.c.l.b16 %v1676
          %v2416 = vunpack.c.h.b16 %v1676
          %v2417 = vunpack.c.l.b16 %v1677
          %v2418 = vunpack.c.h.b16 %v1677
          %v2419 = vunpack.c.l.b16 %v1678
          %v2420 = vunpack.c.h.b16 %v1678
          %v2421 = vunpack.c.l.b16 %v1679
          %v2422 = vunpack.c.h.b16 %v1679
          %v2423 = vunpack.c.l.b16 %v1680
          %v2424 = vunpack.c.h.b16 %v1680
          %v2425 = vunpack.c.l.b16 %v1681
          %v2426 = vunpack.c.h.b16 %v1681
          %v2427 = vunpack.c.l.b16 %v1682
          %v2428 = vunpack.c.h.b16 %v1682
          %v2429 = vunpack.c.l.b16 %v1683
          %v2430 = vunpack.c.h.b16 %v1683
          %v2431 = vunpack.c.l.b16 %v1684
          %v2432 = vunpack.c.h.b16 %v1684
          %v2433 = vunpack.c.l.b16 %v1685
          %v2434 = vunpack.c.h.b16 %v1685
          %v2435 = vunpack.c.l.b16 %v1686
          %v2436 = vunpack.c.h.b16 %v1686
          %v2437 = vunpack.c.l.b16 %v1687
          %v2438 = vunpack.c.h.b16 %v1687
          %v2439 = vunpack.c.l.b16 %v1688
          %v2440 = vunpack.c.h.b16 %v1688
          %v2441 = vunpack.c.l.b16 %v1689
          %v2442 = vunpack.c.h.b16 %v1689
          %v2443 = vunpack.c.l.b16 %v1690
          %v2444 = vunpack.c.h.b16 %v1690
          %v2445 = vunpack.c.l.b16 %v1691
          %v2446 = vunpack.c.h.b16 %v1691
          %v2447 = vunpack.c.l.b16 %v1692
          %v2448 = vunpack.c.h.b16 %v1692
          %v2449 = vunpack.c.l.b16 %v1693
          %v2450 = vunpack.c.h.b16 %v1693
          %v2451 = vunpack.c.l.b16 %v1694
          %v2452 = vunpack.c.h.b16 %v1694
          %v2453 = vunpack.c.l.b16 %v1695
          %v2454 = vunpack.c.h.b16 %v1695
          %v2455 = vunpack.c.l.b16 %v1696
          %v2456 = vunpack.c.h.b16 %v1696
          %v2457 = vunpack.c.l.b16 %v1697
          %v2458 = vunpack.c.h.b16 %v1697
          %v2459 = vunpack.c.l.b16 %v1698
          %v2460 = vunpack.c.h.b16 %v1698
          %v2461 = vunpack.c.l.b16 %v1699
          %v2462 = vunpack.c.h.b16 %v1699
          %v2463 = vunpack.c.l.b16 %v1700
          %v2464 = vunpack.c.h.b16 %v1700
          %v2465 = vunpack.c.l.b16 %v1701
          %v2466 = vunpack.c.h.b16 %v1701
          %v2467 = vunpack.c.l.b16 %v1702
          %v2468 = vunpack.c.h.b16 %v1702
          %v2469 = vunpack.c.l.b16 %v1703
          %v2470 = vunpack.c.h.b16 %v1703
          %v2471 = vunpack.c.l.b16 %v1704
          %v2472 = vunpack.c.h.b16 %v1704
          %v2473 = vunpack.c.l.b16 %v1705
          %v2474 = vunpack.c.h.b16 %v1705
          %v2475 = vpack.c.b16 %v1967, %v1963
          %v2476 = vpack.c.b16 %v1968, %v1964
          %v2477 = vpack.c.b16 %v1969, %v1965
          %v2478 = vpack.c.b16 %v1970, %v1966
          %v2479 = vpack.c.b16 %v1975, %v1971
          %v2480 = vpack.c.b16 %v1976, %v1972
          %v2481 = vpack.c.b16 %v1977, %v1973
          %v2482 = vpack.c.b16 %v1978, %v1974
          %v2483 = vpack.c.b16 %v1983, %v1979
          %v2484 = vpack.c.b16 %v1984, %v1980
          %v2485 = vpack.c.b16 %v1985, %v1981
          %v2486 = vpack.c.b16 %v1986, %v1982
          %v2487 = vpack.c.b16 %v1991, %v1987
          %v2488 = vpack.c.b16 %v1992, %v1988
          %v2489 = vpack.c.b16 %v1993, %v1989
          %v2490 = vpack.c.b16 %v1994, %v1990
          %v2491 = vpack.c.b16 %v1999, %v1995
          %v2492 = vpack.c.b16 %v2000, %v1996
          %v2493 = vpack.c.b16 %v2001, %v1997
          %v2494 = vpack.c.b16 %v2002, %v1998
          %v2495 = vpack.c.b16 %v2007, %v2003
          %v2496 = vpack.c.b16 %v2008, %v2004
          %v2497 = vpack.c.b16 %v2009, %v2005
          %v2498 = vpack.c.b16 %v2010, %v2006
          %v2499 = vpack.c.b16 %v2015, %v2011
          %v2500 = vpack.c.b16 %v2016, %v2012
          %v2501 = vpack.c.b16 %v2017, %v2013
          %v2502 = vpack.c.b16 %v2018, %v2014
          %v2503 = vpack.c.b16 %v2023, %v2019
          %v2504 = vpack.c.b16 %v2024, %v2020
          %v2505 = vpack.c.b16 %v2025, %v2021
          %v2506 = vpack.c.b16 %v2026, %v2022
          %v2507 = vpack.c.b16 %v2031, %v2027
          %v2508 = vpack.c.b16 %v2032, %v2028
          %v2509 = vpack.c.b16 %v2033, %v2029
          %v2510 = vpack.c.b16 %v2034, %v2030
          %v2511 = vpack.c.b16 %v2039, %v2035
          %v2512 = vpack.c.b16 %v2040, %v2036
          %v2513 = vpack.c.b16 %v2041, %v2037
          %v2514 = vpack.c.b16 %v2042, %v2038
          %v2515 = vpack.c.b16 %v2047, %v2043
          %v2516 = vpack.c.b16 %v2048, %v2044
          %v2517 = vpack.c.b16 %v2049, %v2045
          %v2518 = vpack.c.b16 %v2050, %v2046
          %v2519 = vpack.c.b16 %v2055, %v2051
          %v2520 = vpack.c.b16 %v2056, %v2052
          %v2521 = vpack.c.b16 %v2057, %v2053
          %v2522 = vpack.c.b16 %v2058, %v2054
          %v2523 = vpack.c.b16 %v2063, %v2059
          %v2524 = vpack.c.b16 %v2064, %v2060
          %v2525 = vpack.c.b16 %v2065, %v2061
          %v2526 = vpack.c.b16 %v2066, %v2062
          %v2527 = vpack.c.b16 %v2071, %v2067
          %v2528 = vpack.c.b16 %v2072, %v2068
          %v2529 = vpack.c.b16 %v2073, %v2069
          %v2530 = vpack.c.b16 %v2074, %v2070
          %v2531 = vpack.c.b16 %v2079, %v2075
          %v2532 = vpack.c.b16 %v2080, %v2076
          %v2533 = vpack.c.b16 %v2081, %v2077
          %v2534 = vpack.c.b16 %v2082, %v2078
          %v2535 = vpack.c.b16 %v2087, %v2083
          %v2536 = vpack.c.b16 %v2088, %v2084
          %v2537 = vpack.c.b16 %v2089, %v2085
          %v2538 = vpack.c.b16 %v2090, %v2086
          %v2539 = vpack.c.b16 %v2095, %v2091
          %v2540 = vpack.c.b16 %v2096, %v2092
          %v2541 = vpack.c.b16 %v2097, %v2093
          %v2542 = vpack.c.b16 %v2098, %v2094
          %v2543 = vpack.c.b16 %v2103, %v2099
          %v2544 = vpack.c.b16 %v2104, %v2100
          %v2545 = vpack.c.b16 %v2105, %v2101
          %v2546 = vpack.c.b16 %v2106, %v2102
          %v2547 = vpack.c.b16 %v2111, %v2107
          %v2548 = vpack.c.b16 %v2112, %v2108
          %v2549 = vpack.c.b16 %v2113, %v2109
          %v2550 = vpack.c.b16 %v2114, %v2110
          %v2551 = vpack.c.b16 %v2119, %v2115
          %v2552 = vpack.c.b16 %v2120, %v2116
          %v2553 = vpack.c.b16 %v2121, %v2117
          %v2554 = vpack.c.b16 %v2122, %v2118
          %v2555 = vpack.c.b16 %v2127, %v2123
          %v2556 = vpack.c.b16 %v2128, %v2124
          %v2557 = vpack.c.b16 %v2129, %v2125
          %v2558 = vpack.c.b16 %v2130, %v2126
          %v2559 = vpack.c.b16 %v2135, %v2131
          %v2560 = vpack.c.b16 %v2136, %v2132
          %v2561 = vpack.c.b16 %v2137, %v2133
          %v2562 = vpack.c.b16 %v2138, %v2134
          %v2563 = vpack.c.b16 %v2143, %v2139
          %v2564 = vpack.c.b16 %v2144, %v2140
          %v2565 = vpack.c.b16 %v2145, %v2141
          %v2566 = vpack.c.b16 %v2146, %v2142
          %v2567 = vpack.c.b16 %v2151, %v2147
          %v2568 = vpack.c.b16 %v2152, %v2148
          %v2569 = vpack.c.b16 %v2153, %v2149
          %v2570 = vpack.c.b16 %v2154, %v2150
          %v2571 = vpack.c.b16 %v2159, %v2155
          %v2572 = vpack.c.b16 %v2160, %v2156
          %v2573 = vpack.c.b16 %v2161, %v2157
          %v2574 = vpack.c.b16 %v2162, %v2158
          %v2575 = vpack.c.b16 %v2167, %v2163
          %v2576 = vpack.c.b16 %v2168, %v2164
          %v2577 = vpack.c.b16 %v2169, %v2165
          %v2578 = vpack.c.b16 %v2170, %v2166
          %v2579 = vpack.c.b16 %v2175, %v2171
          %v2580 = vpack.c.b16 %v2176, %v2172
          %v2581 = vpack.c.b16 %v2177, %v2173
          %v2582 = vpack.c.b16 %v2178, %v2174
          %v2583 = vpack.c.b16 %v2183, %v2179
          %v2584 = vpack.c.b16 %v2184, %v2180
          %v2585 = vpack.c.b16 %v2185, %v2181
          %v2586 = vpack.c.b16 %v2186, %v2182
          %v2587 = vpack.c.b16 %v2191, %v2187
          %v2588 = vpack.c.b16 %v2192, %v2188
          %v2589 = vpack.c.b16 %v2193, %v2189
          %v2590 = vpack.c.b16 %v2194, %v2190
          %v2591 = vpack.c.b16 %v2199, %v2195
          %v2592 = vpack.c.b16 %v2200, %v2196
          %v2593 = vpack.c.b16 %v2201, %v2197
          %v2594 = vpack.c.b16 %v2202, %v2198
          %v2595 = vpack.c.b16 %v2207, %v2203
          %v2596 = vpack.c.b16 %v2208, %v2204
          %v2597 = vpack.c.b16 %v2209, %v2205
          %v2598 = vpack.c.b16 %v2210, %v2206
          %v2599 = vpack.c.b16 %v2215, %v2211
          %v2600 = vpack.c.b16 %v2216, %v2212
          %v2601 = vpack.c.b16 %v2217, %v2213
          %v2602 = vpack.c.b16 %v2218, %v2214
          %v2603 = vpack.c.b16 %v2223, %v2219
          %v2604 = vpack.c.b16 %v2224, %v2220
          %v2605 = vpack.c.b16 %v2225, %v2221
          %v2606 = vpack.c.b16 %v2226, %v2222
          %v2607 = vpack.c.b16 %v2231, %v2227
          %v2608 = vpack.c.b16 %v2232, %v2228
          %v2609 = vpack.c.b16 %v2233, %v2229
          %v2610 = vpack.c.b16 %v2234, %v2230
          %v2611 = vpack.c.b16 %v2239, %v2235
          %v2612 = vpack.c.b16 %v2240, %v2236
          %v2613 = vpack.c.b16 %v2241, %v2237
          %v2614 = vpack.c.b16 %v2242, %v2238
          %v2615 = vpack.c.b16 %v2247, %v2243
          %v2616 = vpack.c.b16 %v2248, %v2244
          %v2617 = vpack.c.b16 %v2249, %v2245
          %v2618 = vpack.c.b16 %v2250, %v2246
          %v2619 = vpack.c.b16 %v2255, %v2251
          %v2620 = vpack.c.b16 %v2256, %v2252
          %v2621 = vpack.c.b16 %v2257, %v2253
          %v2622 = vpack.c.b16 %v2258, %v2254
          %v2623 = vpack.c.b16 %v2263, %v2259
          %v2624 = vpack.c.b16 %v2264, %v2260
          %v2625 = vpack.c.b16 %v2265, %v2261
          %v2626 = vpack.c.b16 %v2266, %v2262
          %v2627 = vpack.c.b16 %v2271, %v2267
          %v2628 = vpack.c.b16 %v2272, %v2268
          %v2629 = vpack.c.b16 %v2273, %v2269
          %v2630 = vpack.c.b16 %v2274, %v2270
          %v2631 = vpack.c.b16 %v2279, %v2275
          %v2632 = vpack.c.b16 %v2280, %v2276
          %v2633 = vpack.c.b16 %v2281, %v2277
          %v2634 = vpack.c.b16 %v2282, %v2278
          %v2635 = vpack.c.b16 %v2287, %v2283
          %v2636 = vpack.c.b16 %v2288, %v2284
          %v2637 = vpack.c.b16 %v2289, %v2285
          %v2638 = vpack.c.b16 %v2290, %v2286
          %v2639 = vpack.c.b16 %v2295, %v2291
          %v2640 = vpack.c.b16 %v2296, %v2292
          %v2641 = vpack.c.b16 %v2297, %v2293
          %v2642 = vpack.c.b16 %v2298, %v2294
          %v2643 = vpack.c.b16 %v2303, %v2299
          %v2644 = vpack.c.b16 %v2304, %v2300
          %v2645 = vpack.c.b16 %v2305, %v2301
          %v2646 = vpack.c.b16 %v2306, %v2302
          %v2647 = vpack.c.b16 %v2311, %v2307
          %v2648 = vpack.c.b16 %v2312, %v2308
          %v2649 = vpack.c.b16 %v2313, %v2309
          %v2650 = vpack.c.b16 %v2314, %v2310
          %v2651 = vpack.c.b16 %v2319, %v2315
          %v2652 = vpack.c.b16 %v2320, %v2316
          %v2653 = vpack.c.b16 %v2321, %v2317
          %v2654 = vpack.c.b16 %v2322, %v2318
          %v2655 = vpack.c.b16 %v2327, %v2323
          %v2656 = vpack.c.b16 %v2328, %v2324
          %v2657 = vpack.c.b16 %v2329, %v2325
          %v2658 = vpack.c.b16 %v2330, %v2326
          %v2659 = vpack.c.b16 %v2335, %v2331
          %v2660 = vpack.c.b16 %v2336, %v2332
          %v2661 = vpack.c.b16 %v2337, %v2333
          %v2662 = vpack.c.b16 %v2338, %v2334
          %v2663 = vpack.c.b16 %v2343, %v2339
          %v2664 = vpack.c.b16 %v2344, %v2340
          %v2665 = vpack.c.b16 %v2345, %v2341
          %v2666 = vpack.c.b16 %v2346, %v2342
          %v2667 = vpack.c.b16 %v2351, %v2347
          %v2668 = vpack.c.b16 %v2352, %v2348
          %v2669 = vpack.c.b16 %v2353, %v2349
          %v2670 = vpack.c.b16 %v2354, %v2350
          %v2671 = vpack.c.b16 %v2359, %v2355
          %v2672 = vpack.c.b16 %v2360, %v2356
          %v2673 = vpack.c.b16 %v2361, %v2357
          %v2674 = vpack.c.b16 %v2362, %v2358
          %v2675 = vpack.c.b16 %v2367, %v2363
          %v2676 = vpack.c.b16 %v2368, %v2364
          %v2677 = vpack.c.b16 %v2369, %v2365
          %v2678 = vpack.c.b16 %v2370, %v2366
          %v2679 = vpack.c.b16 %v2375, %v2371
          %v2680 = vpack.c.b16 %v2376, %v2372
          %v2681 = vpack.c.b16 %v2377, %v2373
          %v2682 = vpack.c.b16 %v2378, %v2374
          %v2683 = vpack.c.b16 %v2383, %v2379
          %v2684 = vpack.c.b16 %v2384, %v2380
          %v2685 = vpack.c.b16 %v2385, %v2381
          %v2686 = vpack.c.b16 %v2386, %v2382
          %v2687 = vpack.c.b16 %v2391, %v2387
          %v2688 = vpack.c.b16 %v2392, %v2388
          %v2689 = vpack.c.b16 %v2393, %v2389
          %v2690 = vpack.c.b16 %v2394, %v2390
          %v2691 = vpack.c.b16 %v2399, %v2395
          %v2692 = vpack.c.b16 %v2400, %v2396
          %v2693 = vpack.c.b16 %v2401, %v2397
          %v2694 = vpack.c.b16 %v2402, %v2398
          %v2695 = vpack.c.b16 %v2407, %v2403
          %v2696 = vpack.c.b16 %v2408, %v2404
          %v2697 = vpack.c.b16 %v2409, %v2405
          %v2698 = vpack.c.b16 %v2410, %v2406
          %v2699 = vpack.c.b16 %v2415, %v2411
          %v2700 = vpack.c.b16 %v2416, %v2412
          %v2701 = vpack.c.b16 %v2417, %v2413
          %v2702 = vpack.c.b16 %v2418, %v2414
          %v2703 = vpack.c.b16 %v2423, %v2419
          %v2704 = vpack.c.b16 %v2424, %v2420
          %v2705 = vpack.c.b16 %v2425, %v2421
          %v2706 = vpack.c.b16 %v2426, %v2422
          %v2707 = vpack.c.b16 %v2431, %v2427
          %v2708 = vpack.c.b16 %v2432, %v2428
          %v2709 = vpack.c.b16 %v2433, %v2429
          %v2710 = vpack.c.b16 %v2434, %v2430
          %v2711 = vpack.c.b16 %v2439, %v2435
          %v2712 = vpack.c.b16 %v2440, %v2436
          %v2713 = vpack.c.b16 %v2441, %v2437
          %v2714 = vpack.c.b16 %v2442, %v2438
          %v2715 = vpack.c.b16 %v2447, %v2443
          %v2716 = vpack.c.b16 %v2448, %v2444
          %v2717 = vpack.c.b16 %v2449, %v2445
          %v2718 = vpack.c.b16 %v2450, %v2446
          %v2719 = vpack.c.b16 %v2455, %v2451
          %v2720 = vpack.c.b16 %v2456, %v2452
          %v2721 = vpack.c.b16 %v2457, %v2453
          %v2722 = vpack.c.b16 %v2458, %v2454
          %v2723 = vpack.c.b16 %v2463, %v2459
          %v2724 = vpack.c.b16 %v2464, %v2460
          %v2725 = vpack.c.b16 %v2465, %v2461
          %v2726 = vpack.c.b16 %v2466, %v2462
          %v2727 = vpack.c.b16 %v2471, %v2467
          %v2728 = vpack.c.b16 %v2472, %v2468
          %v2729 = vpack.c.b16 %v2473, %v2469
          %v2730 = vpack.c.b16 %v2474, %v2470
          %v2988 = vlaneseq
          %v2989 = vshrl.u32 %v2988, 7
          %v2990 = vsub.s32 0, %v2989
          %v2991 = vrot.slane %v1706, %v2990
          %v2992 = vlaneseq
          %v2993 = vshrl.u32 %v2992, 7
          %v2994 = vsub.s32 1, %v2993
          %v2995 = vrot.slane %v1706, %v2994
          %v2996 = vlaneseq
          %v2997 = vshrl.u32 %v2996, 7
          %v2998 = vsub.s32 2, %v2997
          %v2999 = vrot.slane %v1706, %v2998
          %v3000 = vlaneseq
          %v3001 = vshrl.u32 %v3000, 7
          %v3002 = vsub.s32 3, %v3001
          %v3003 = vrot.slane %v1706, %v3002
          %3008 = vmatprep.subr.bf16.mxu0 %v2476
          %3009 = vmatpush1.bf16.msra.mxu0 %v2475
          %3010 = vmatprep.subr.bf16.mxu0 %v2480
          %3011 = vmatpush1.bf16.msra.mxu0 %v2479
          %3012 = vmatprep.subr.bf16.mxu0 %v2484
          %3013 = vmatpush1.bf16.msra.mxu0 %v2483
          %3014 = vmatprep.subr.bf16.mxu0 %v2488
          %3015 = vmatpush1.bf16.msra.mxu0 %v2487
          %3016 = vmatprep.subr.bf16.mxu0 %v2492
          %3017 = vmatpush1.bf16.msra.mxu0 %v2491
          %3018 = vmatprep.subr.bf16.mxu0 %v2496
          %3019 = vmatpush1.bf16.msra.mxu0 %v2495
          %3020 = vmatprep.subr.bf16.mxu0 %v2500
          %3021 = vmatpush1.bf16.msra.mxu0 %v2499
          %3022 = vmatprep.subr.bf16.mxu0 %v2504
          %3023 = vmatpush1.bf16.msra.mxu0 %v2503
          %3024 = vmatprep.subr.bf16.mxu0 %v2508
          %3025 = vmatpush1.bf16.msra.mxu0 %v2507
          %3026 = vmatprep.subr.bf16.mxu0 %v2512
          %3027 = vmatpush1.bf16.msra.mxu0 %v2511
          %3028 = vmatprep.subr.bf16.mxu0 %v2516
          %3029 = vmatpush1.bf16.msra.mxu0 %v2515
          %3030 = vmatprep.subr.bf16.mxu0 %v2520
          %3031 = vmatpush1.bf16.msra.mxu0 %v2519
          %3032 = vmatprep.subr.bf16.mxu0 %v2524
          %3033 = vmatpush1.bf16.msra.mxu0 %v2523
          %3034 = vmatprep.subr.bf16.mxu0 %v2528
          %3035 = vmatpush1.bf16.msra.mxu0 %v2527
          %3036 = vmatprep.subr.bf16.mxu0 %v2532
          %3037 = vmatpush1.bf16.msra.mxu0 %v2531
          %3038 = vmatprep.subr.bf16.mxu0 %v2536
          %3039 = vmatpush1.bf16.msra.mxu0 %v2535
          %3040 = vmatprep.mubr.bf16.mxu0 %v1443
          %3041 = vmatmul.mubr.bf16.gmra.mrb[0].mxu0 %v1442
          %v3042 = vpop.f32.mrb[0].mxu0
          %v3043 = vadd.f32 %v2991, %v3042
          %v3044 = vpop.f32.mrb[0].mxu0
          %v3045 = vadd.f32 %v2995, %v3044
          %v3046 = vpop.f32.mrb[0].mxu0
          %v3047 = vpop.f32.mrb[0].mxu0
          %3048 = vdwg.mxu0
          %3049 = vmatprep.subr.bf16.mxu0 %v2540
          %3050 = vmatpush1.bf16.msra.mxu0 %v2539
          %3051 = vmatprep.subr.bf16.mxu0 %v2544
          %3052 = vmatpush1.bf16.msra.mxu0 %v2543
          %3053 = vmatprep.subr.bf16.mxu0 %v2548
          %3054 = vmatpush1.bf16.msra.mxu0 %v2547
          %3055 = vmatprep.subr.bf16.mxu0 %v2552
          %3056 = vmatpush1.bf16.msra.mxu0 %v2551
          %3057 = vmatprep.subr.bf16.mxu0 %v2556
          %3058 = vmatpush1.bf16.msra.mxu0 %v2555
          %3059 = vmatprep.subr.bf16.mxu0 %v2560
          %3060 = vmatpush1.bf16.msra.mxu0 %v2559
          %3061 = vmatprep.subr.bf16.mxu0 %v2564
          %3062 = vmatpush1.bf16.msra.mxu0 %v2563
          %3063 = vmatprep.subr.bf16.mxu0 %v2568
          %3064 = vmatpush1.bf16.msra.mxu0 %v2567
          %3065 = vmatprep.subr.bf16.mxu0 %v2572
          %3066 = vmatpush1.bf16.msra.mxu0 %v2571
          %3067 = vmatprep.subr.bf16.mxu0 %v2576
          %3068 = vmatpush1.bf16.msra.mxu0 %v2575
          %3069 = vmatprep.subr.bf16.mxu0 %v2580
          %3070 = vmatpush1.bf16.msra.mxu0 %v2579
          %3071 = vmatprep.subr.bf16.mxu0 %v2584
          %3072 = vmatpush1.bf16.msra.mxu0 %v2583
          %3073 = vmatprep.subr.bf16.mxu0 %v2588
          %3074 = vmatpush1.bf16.msra.mxu0 %v2587
          %3075 = vmatprep.subr.bf16.mxu0 %v2592
          %3076 = vmatpush1.bf16.msra.mxu0 %v2591
          %3077 = vmatprep.subr.bf16.mxu0 %v2596
          %3078 = vmatpush1.bf16.msra.mxu0 %v2595
          %3079 = vmatprep.subr.bf16.mxu0 %v2600
          %3080 = vmatpush1.bf16.msra.mxu0 %v2599
          %3081 = vmatprep.mubr.bf16.mxu0 %v1445
          %3082 = vmatmul.mubr.bf16.gmra.mrb[0].mxu0 %v1444
          %v3083 = vpop.f32.mrb[0].mxu0
          %v3084 = vadd.f32 %v3043, %v3083
          %v3085 = vpop.f32.mrb[0].mxu0
          %v3086 = vadd.f32 %v3045, %v3085
          %v3087 = vpop.f32.mrb[0].mxu0
          %v3088 = vpop.f32.mrb[0].mxu0
          %3089 = vdwg.mxu0
          %3090 = vmatprep.subr.bf16.mxu0 %v2604
          %3091 = vmatpush1.bf16.msra.mxu0 %v2603
          %3092 = vmatprep.subr.bf16.mxu0 %v2608
          %3093 = vmatpush1.bf16.msra.mxu0 %v2607
          %3094 = vmatprep.subr.bf16.mxu0 %v2612
          %3095 = vmatpush1.bf16.msra.mxu0 %v2611
          %3096 = vmatprep.subr.bf16.mxu0 %v2616
          %3097 = vmatpush1.bf16.msra.mxu0 %v2615
          %3098 = vmatprep.subr.bf16.mxu0 %v2620
          %3099 = vmatpush1.bf16.msra.mxu0 %v2619
          %3100 = vmatprep.subr.bf16.mxu0 %v2624
          %3101 = vmatpush1.bf16.msra.mxu0 %v2623
          %3102 = vmatprep.subr.bf16.mxu0 %v2628
          %3103 = vmatpush1.bf16.msra.mxu0 %v2627
          %3104 = vmatprep.subr.bf16.mxu0 %v2632
          %3105 = vmatpush1.bf16.msra.mxu0 %v2631
          %3106 = vmatprep.subr.bf16.mxu0 %v2636
          %3107 = vmatpush1.bf16.msra.mxu0 %v2635
          %3108 = vmatprep.subr.bf16.mxu0 %v2640
          %3109 = vmatpush1.bf16.msra.mxu0 %v2639
          %3110 = vmatprep.subr.bf16.mxu0 %v2644
          %3111 = vmatpush1.bf16.msra.mxu0 %v2643
          %3112 = vmatprep.subr.bf16.mxu0 %v2648
          %3113 = vmatpush1.bf16.msra.mxu0 %v2647
          %3114 = vmatprep.subr.bf16.mxu0 %v2652
          %3115 = vmatpush1.bf16.msra.mxu0 %v2651
          %3116 = vmatprep.subr.bf16.mxu0 %v2656
          %3117 = vmatpush1.bf16.msra.mxu0 %v2655
          %3118 = vmatprep.subr.bf16.mxu0 %v2660
          %3119 = vmatpush1.bf16.msra.mxu0 %v2659
          %3120 = vmatprep.subr.bf16.mxu0 %v2664
          %3121 = vmatpush1.bf16.msra.mxu0 %v2663
          %3122 = vmatprep.mubr.bf16.mxu0 %v1447
          %3123 = vmatmul.mubr.bf16.gmra.mrb[0].mxu0 %v1446
          %v3124 = vpop.f32.mrb[0].mxu0
          %v3125 = vadd.f32 %v3084, %v3124
          %v3126 = vpop.f32.mrb[0].mxu0
          %v3127 = vadd.f32 %v3086, %v3126
          %v3128 = vpop.f32.mrb[0].mxu0
          %v3129 = vpop.f32.mrb[0].mxu0
          %3130 = vdwg.mxu0
          %3131 = vmatprep.subr.bf16.mxu0 %v2668
          %3132 = vmatpush1.bf16.msra.mxu0 %v2667
          %3133 = vmatprep.subr.bf16.mxu0 %v2672
          %3134 = vmatpush1.bf16.msra.mxu0 %v2671
          %3135 = vmatprep.subr.bf16.mxu0 %v2676
          %3136 = vmatpush1.bf16.msra.mxu0 %v2675
          %3137 = vmatprep.subr.bf16.mxu0 %v2680
          %3138 = vmatpush1.bf16.msra.mxu0 %v2679
          %3139 = vmatprep.subr.bf16.mxu0 %v2684
          %3140 = vmatpush1.bf16.msra.mxu0 %v2683
          %3141 = vmatprep.subr.bf16.mxu0 %v2688
          %3142 = vmatpush1.bf16.msra.mxu0 %v2687
          %3143 = vmatprep.subr.bf16.mxu0 %v2692
          %3144 = vmatpush1.bf16.msra.mxu0 %v2691
          %3145 = vmatprep.subr.bf16.mxu0 %v2696
          %3146 = vmatpush1.bf16.msra.mxu0 %v2695
          %3147 = vmatprep.subr.bf16.mxu0 %v2700
          %3148 = vmatpush1.bf16.msra.mxu0 %v2699
          %3149 = vmatprep.subr.bf16.mxu0 %v2704
          %3150 = vmatpush1.bf16.msra.mxu0 %v2703
          %3151 = vmatprep.subr.bf16.mxu0 %v2708
          %3152 = vmatpush1.bf16.msra.mxu0 %v2707
          %3153 = vmatprep.subr.bf16.mxu0 %v2712
          %3154 = vmatpush1.bf16.msra.mxu0 %v2711
          %3155 = vmatprep.subr.bf16.mxu0 %v2716
          %3156 = vmatpush1.bf16.msra.mxu0 %v2715
          %3157 = vmatprep.subr.bf16.mxu0 %v2720
          %3158 = vmatpush1.bf16.msra.mxu0 %v2719
          %3159 = vmatprep.subr.bf16.mxu0 %v2724
          %3160 = vmatpush1.bf16.msra.mxu0 %v2723
          %3161 = vmatprep.subr.bf16.mxu0 %v2728
          %3162 = vmatpush1.bf16.msra.mxu0 %v2727
          %3163 = vmatprep.mubr.bf16.mxu0 %v1449
          %3164 = vmatmul.mubr.bf16.gmra.mrb[0].mxu0 %v1448
          %v3165 = vpop.f32.mrb[0].mxu0
          %v3166 = vadd.f32 %v3125, %v3165
          %v3167 = vpop.f32.mrb[0].mxu0
          %v3168 = vadd.f32 %v3127, %v3167
          %v3169 = vpop.f32.mrb[0].mxu0
          %v3170 = vpop.f32.mrb[0].mxu0
          %3171 = vdwg.mxu0
          %3172 = vmatprep.subr.bf16.mxu0 %v2478
          %3173 = vmatpush1.bf16.msra.mxu0 %v2477
          %3174 = vmatprep.subr.bf16.mxu0 %v2482
          %3175 = vmatpush1.bf16.msra.mxu0 %v2481
          %3176 = vmatprep.subr.bf16.mxu0 %v2486
          %3177 = vmatpush1.bf16.msra.mxu0 %v2485
          %3178 = vmatprep.subr.bf16.mxu0 %v2490
          %3179 = vmatpush1.bf16.msra.mxu0 %v2489
          %3180 = vmatprep.subr.bf16.mxu0 %v2494
          %3181 = vmatpush1.bf16.msra.mxu0 %v2493
          %3182 = vmatprep.subr.bf16.mxu0 %v2498
          %3183 = vmatpush1.bf16.msra.mxu0 %v2497
          %3184 = vmatprep.subr.bf16.mxu0 %v2502
          %3185 = vmatpush1.bf16.msra.mxu0 %v2501
          %3186 = vmatprep.subr.bf16.mxu0 %v2506
          %3187 = vmatpush1.bf16.msra.mxu0 %v2505
          %3188 = vmatprep.subr.bf16.mxu0 %v2510
          %3189 = vmatpush1.bf16.msra.mxu0 %v2509
          %3190 = vmatprep.subr.bf16.mxu0 %v2514
          %3191 = vmatpush1.bf16.msra.mxu0 %v2513
          %3192 = vmatprep.subr.bf16.mxu0 %v2518
          %3193 = vmatpush1.bf16.msra.mxu0 %v2517
          %3194 = vmatprep.subr.bf16.mxu0 %v2522
          %3195 = vmatpush1.bf16.msra.mxu0 %v2521
          %3196 = vmatprep.subr.bf16.mxu0 %v2526
          %3197 = vmatpush1.bf16.msra.mxu0 %v2525
          %3198 = vmatprep.subr.bf16.mxu0 %v2530
          %3199 = vmatpush1.bf16.msra.mxu0 %v2529
          %3200 = vmatprep.subr.bf16.mxu0 %v2534
          %3201 = vmatpush1.bf16.msra.mxu0 %v2533
          %3202 = vmatprep.subr.bf16.mxu0 %v2538
          %3203 = vmatpush1.bf16.msra.mxu0 %v2537
          %3204 = vmatprep.mubr.bf16.mxu0 %v1443
          %3205 = vmatmul.mubr.bf16.gmra.mrb[0].mxu0 %v1442
          %v3206 = vpop.f32.mrb[0].mxu0
          %v3207 = vadd.f32 %v2999, %v3206
          %v3208 = vpop.f32.mrb[0].mxu0
          %v3209 = vadd.f32 %v3003, %v3208
          %v3210 = vpop.f32.mrb[0].mxu0
          %v3211 = vpop.f32.mrb[0].mxu0
          %3212 = vdwg.mxu0
          %3213 = vmatprep.subr.bf16.mxu0 %v2542
          %3214 = vmatpush1.bf16.msra.mxu0 %v2541
          %3215 = vmatprep.subr.bf16.mxu0 %v2546
          %3216 = vmatpush1.bf16.msra.mxu0 %v2545
          %3217 = vmatprep.subr.bf16.mxu0 %v2550
          %3218 = vmatpush1.bf16.msra.mxu0 %v2549
          %3219 = vmatprep.subr.bf16.mxu0 %v2554
          %3220 = vmatpush1.bf16.msra.mxu0 %v2553
          %3221 = vmatprep.subr.bf16.mxu0 %v2558
          %3222 = vmatpush1.bf16.msra.mxu0 %v2557
          %3223 = vmatprep.subr.bf16.mxu0 %v2562
          %3224 = vmatpush1.bf16.msra.mxu0 %v2561
          %3225 = vmatprep.subr.bf16.mxu0 %v2566
          %3226 = vmatpush1.bf16.msra.mxu0 %v2565
          %3227 = vmatprep.subr.bf16.mxu0 %v2570
          %3228 = vmatpush1.bf16.msra.mxu0 %v2569
          %3229 = vmatprep.subr.bf16.mxu0 %v2574
          %3230 = vmatpush1.bf16.msra.mxu0 %v2573
          %3231 = vmatprep.subr.bf16.mxu0 %v2578
          %3232 = vmatpush1.bf16.msra.mxu0 %v2577
          %3233 = vmatprep.subr.bf16.mxu0 %v2582
          %3234 = vmatpush1.bf16.msra.mxu0 %v2581
          %3235 = vmatprep.subr.bf16.mxu0 %v2586
          %3236 = vmatpush1.bf16.msra.mxu0 %v2585
          %3237 = vmatprep.subr.bf16.mxu0 %v2590
          %3238 = vmatpush1.bf16.msra.mxu0 %v2589
          %3239 = vmatprep.subr.bf16.mxu0 %v2594
          %3240 = vmatpush1.bf16.msra.mxu0 %v2593
          %3241 = vmatprep.subr.bf16.mxu0 %v2598
          %3242 = vmatpush1.bf16.msra.mxu0 %v2597
          %3243 = vmatprep.subr.bf16.mxu0 %v2602
          %3244 = vmatpush1.bf16.msra.mxu0 %v2601
          %3245 = vmatprep.mubr.bf16.mxu0 %v1445
          %3246 = vmatmul.mubr.bf16.gmra.mrb[0].mxu0 %v1444
          %v3247 = vpop.f32.mrb[0].mxu0
          %v3248 = vadd.f32 %v3207, %v3247
          %v3249 = vpop.f32.mrb[0].mxu0
          %v3250 = vadd.f32 %v3209, %v3249
          %v3251 = vpop.f32.mrb[0].mxu0
          %v3252 = vpop.f32.mrb[0].mxu0
          %3253 = vdwg.mxu0
          %3254 = vmatprep.subr.bf16.mxu0 %v2606
          %3255 = vmatpush1.bf16.msra.mxu0 %v2605
          %3256 = vmatprep.subr.bf16.mxu0 %v2610
          %3257 = vmatpush1.bf16.msra.mxu0 %v2609
          %3258 = vmatprep.subr.bf16.mxu0 %v2614
          %3259 = vmatpush1.bf16.msra.mxu0 %v2613
          %3260 = vmatprep.subr.bf16.mxu0 %v2618
          %3261 = vmatpush1.bf16.msra.mxu0 %v2617
          %3262 = vmatprep.subr.bf16.mxu0 %v2622
          %3263 = vmatpush1.bf16.msra.mxu0 %v2621
          %3264 = vmatprep.subr.bf16.mxu0 %v2626
          %3265 = vmatpush1.bf16.msra.mxu0 %v2625
          %3266 = vmatprep.subr.bf16.mxu0 %v2630
          %3267 = vmatpush1.bf16.msra.mxu0 %v2629
          %3268 = vmatprep.subr.bf16.mxu0 %v2634
          %3269 = vmatpush1.bf16.msra.mxu0 %v2633
          %3270 = vmatprep.subr.bf16.mxu0 %v2638
          %3271 = vmatpush1.bf16.msra.mxu0 %v2637
          %3272 = vmatprep.subr.bf16.mxu0 %v2642
          %3273 = vmatpush1.bf16.msra.mxu0 %v2641
          %3274 = vmatprep.subr.bf16.mxu0 %v2646
          %3275 = vmatpush1.bf16.msra.mxu0 %v2645
          %3276 = vmatprep.subr.bf16.mxu0 %v2650
          %3277 = vmatpush1.bf16.msra.mxu0 %v2649
          %3278 = vmatprep.subr.bf16.mxu0 %v2654
          %3279 = vmatpush1.bf16.msra.mxu0 %v2653
          %3280 = vmatprep.subr.bf16.mxu0 %v2658
          %3281 = vmatpush1.bf16.msra.mxu0 %v2657
          %3282 = vmatprep.subr.bf16.mxu0 %v2662
          %3283 = vmatpush1.bf16.msra.mxu0 %v2661
          %3284 = vmatprep.subr.bf16.mxu0 %v2666
          %3285 = vmatpush1.bf16.msra.mxu0 %v2665
          %3286 = vmatprep.mubr.bf16.mxu0 %v1447
          %3287 = vmatmul.mubr.bf16.gmra.mrb[0].mxu0 %v1446
          %v3288 = vpop.f32.mrb[0].mxu0
          %v3289 = vadd.f32 %v3248, %v3288
          %v3290 = vpop.f32.mrb[0].mxu0
          %v3291 = vadd.f32 %v3250, %v3290
          %v3292 = vpop.f32.mrb[0].mxu0
          %v3293 = vpop.f32.mrb[0].mxu0
          %3294 = vdwg.mxu0
          %3295 = vmatprep.subr.bf16.mxu0 %v2670
          %3296 = vmatpush1.bf16.msra.mxu0 %v2669
          %3297 = vmatprep.subr.bf16.mxu0 %v2674
          %3298 = vmatpush1.bf16.msra.mxu0 %v2673
          %3299 = vmatprep.subr.bf16.mxu0 %v2678
          %3300 = vmatpush1.bf16.msra.mxu0 %v2677
          %3301 = vmatprep.subr.bf16.mxu0 %v2682
          %3302 = vmatpush1.bf16.msra.mxu0 %v2681
          %3303 = vmatprep.subr.bf16.mxu0 %v2686
          %3304 = vmatpush1.bf16.msra.mxu0 %v2685
          %3305 = vmatprep.subr.bf16.mxu0 %v2690
          %3306 = vmatpush1.bf16.msra.mxu0 %v2689
          %3307 = vmatprep.subr.bf16.mxu0 %v2694
          %3308 = vmatpush1.bf16.msra.mxu0 %v2693
          %3309 = vmatprep.subr.bf16.mxu0 %v2698
          %3310 = vmatpush1.bf16.msra.mxu0 %v2697
          %3311 = vmatprep.subr.bf16.mxu0 %v2702
          %3312 = vmatpush1.bf16.msra.mxu0 %v2701
          %3313 = vmatprep.subr.bf16.mxu0 %v2706
          %3314 = vmatpush1.bf16.msra.mxu0 %v2705
          %3315 = vmatprep.subr.bf16.mxu0 %v2710
          %3316 = vmatpush1.bf16.msra.mxu0 %v2709
          %3317 = vmatprep.subr.bf16.mxu0 %v2714
          %3318 = vmatpush1.bf16.msra.mxu0 %v2713
          %3319 = vmatprep.subr.bf16.mxu0 %v2718
          %3320 = vmatpush1.bf16.msra.mxu0 %v2717
          %3321 = vmatprep.subr.bf16.mxu0 %v2722
          %3322 = vmatpush1.bf16.msra.mxu0 %v2721
          %3323 = vmatprep.subr.bf16.mxu0 %v2726
          %3324 = vmatpush1.bf16.msra.mxu0 %v2725
          %3325 = vmatprep.subr.bf16.mxu0 %v2730
          %3326 = vmatpush1.bf16.msra.mxu0 %v2729
          %3327 = vmatprep.mubr.bf16.mxu0 %v1449
          %3328 = vmatmul.mubr.bf16.gmra.mrb[0].mxu0 %v1448
          %v3329 = vpop.f32.mrb[0].mxu0
          %v3330 = vadd.f32 %v3289, %v3329
          %v3331 = vpop.f32.mrb[0].mxu0
          %v3332 = vadd.f32 %v3291, %v3331
          %v3333 = vpop.f32.mrb[0].mxu0
          %v3334 = vpop.f32.mrb[0].mxu0
          %3335 = vdwg.mxu0
          %v3336 = vmax.f32 %v3166, 0.0
          %v3337 = vmax.f32 %v3168, 0.0
          %v3338 = vmax.f32 %v3330, 0.0
          %v3339 = vmax.f32 %v3332, 0.0
          %v3340 = vpack.c.bf16 %v3336, %v3336
          %v3341 = vpack.c.bf16 %v3337, %v3337
          %v3342 = vpack.c.bf16 %v3338, %v3338
          %v3343 = vpack.c.bf16 %v3339, %v3339
          %v3344 = vld [vmem:[#allocation8] sm:$0xff]
          %v3345 = vld [vmem:[#allocation8 + $0x8] sm:$0xff]
          %v3346 = vld [vmem:[#allocation8 + $0x10] sm:$0xff]
          %v3347 = vld [vmem:[#allocation8 + $0x18] sm:$0xff]
          %v3348 = vld [vmem:[#allocation8 + $0x20] sm:$0xff]
          %v3349 = vld [vmem:[#allocation8 + $0x28] sm:$0xff]
          %v3350 = vld [vmem:[#allocation8 + $0x30] sm:$0xff]
          %v3351 = vld [vmem:[#allocation8 + $0x38] sm:$0xff]
          %v3352 = vld [vmem:[#allocation8 + $0x40] sm:$0xff]
          %v3353 = vld [vmem:[#allocation8 + $0x48] sm:$0xff]
          %v3354 = vld [vmem:[#allocation8 + $0x50] sm:$0xff]
          %v3355 = vld [vmem:[#allocation8 + $0x58] sm:$0xff]
          %v3356 = vld [vmem:[#allocation8 + $0x60] sm:$0xff]
          %v3357 = vld [vmem:[#allocation8 + $0x68] sm:$0xff]
          %v3358 = vld [vmem:[#allocation8 + $0x70] sm:$0xff]
          %v3359 = vld [vmem:[#allocation8 + $0x78] sm:$0xff]
          %v3360 = vld [vmem:[#allocation8 + $0x80] sm:$0xff]
          %v3361 = vld [vmem:[#allocation8 + $0x88] sm:$0xff]
          %v3362 = vld [vmem:[#allocation8 + $0x90] sm:$0xff]
          %v3363 = vld [vmem:[#allocation8 + $0x98] sm:$0xff]
          %v3364 = vld [vmem:[#allocation8 + $0xa0] sm:$0xff]
          %v3365 = vld [vmem:[#allocation8 + $0xa8] sm:$0xff]
          %v3366 = vld [vmem:[#allocation8 + $0xb0] sm:$0xff]
          %v3367 = vld [vmem:[#allocation8 + $0xb8] sm:$0xff]
          %v3368 = vld [vmem:[#allocation8 + $0xc0] sm:$0xff]
          %v3369 = vld [vmem:[#allocation8 + $0xc8] sm:$0xff]
          %v3370 = vld [vmem:[#allocation8 + $0xd0] sm:$0xff]
          %v3371 = vld [vmem:[#allocation8 + $0xd8] sm:$0xff]
          %v3372 = vld [vmem:[#allocation8 + $0xe0] sm:$0xff]
          %v3373 = vld [vmem:[#allocation8 + $0xe8] sm:$0xff]
          %v3374 = vld [vmem:[#allocation8 + $0xf0] sm:$0xff]
          %v3375 = vld [vmem:[#allocation8 + $0xf8] sm:$0xff]
          %v3376 = vld [vmem:[#allocation8 + $0x100] sm:$0xff]
          %v3377 = vld [vmem:[#allocation8 + $0x108] sm:$0xff]
          %v3378 = vld [vmem:[#allocation8 + $0x110] sm:$0xff]
          %v3379 = vld [vmem:[#allocation8 + $0x118] sm:$0xff]
          %v3380 = vld [vmem:[#allocation8 + $0x120] sm:$0xff]
          %v3381 = vld [vmem:[#allocation8 + $0x128] sm:$0xff]
          %v3382 = vld [vmem:[#allocation8 + $0x130] sm:$0xff]
          %v3383 = vld [vmem:[#allocation8 + $0x138] sm:$0xff]
          %v3384 = vld [vmem:[#allocation8 + $0x140] sm:$0xff]
          %v3385 = vld [vmem:[#allocation8 + $0x148] sm:$0xff]
          %v3386 = vld [vmem:[#allocation8 + $0x150] sm:$0xff]
          %v3387 = vld [vmem:[#allocation8 + $0x158] sm:$0xff]
          %v3388 = vld [vmem:[#allocation8 + $0x160] sm:$0xff]
          %v3389 = vld [vmem:[#allocation8 + $0x168] sm:$0xff]
          %v3390 = vld [vmem:[#allocation8 + $0x170] sm:$0xff]
          %v3391 = vld [vmem:[#allocation8 + $0x178] sm:$0xff]
          %v3392 = vld [vmem:[#allocation8 + $0x180] sm:$0xff]
          %v3393 = vld [vmem:[#allocation8 + $0x188] sm:$0xff]
          %v3394 = vld [vmem:[#allocation8 + $0x190] sm:$0xff]
          %v3395 = vld [vmem:[#allocation8 + $0x198] sm:$0xff]
          %v3396 = vld [vmem:[#allocation8 + $0x1a0] sm:$0xff]
          %v3397 = vld [vmem:[#allocation8 + $0x1a8] sm:$0xff]
          %v3398 = vld [vmem:[#allocation8 + $0x1b0] sm:$0xff]
          %v3399 = vld [vmem:[#allocation8 + $0x1b8] sm:$0xff]
          %v3400 = vld [vmem:[#allocation8 + $0x1c0] sm:$0xff]
          %v3401 = vld [vmem:[#allocation8 + $0x1c8] sm:$0xff]
          %v3402 = vld [vmem:[#allocation8 + $0x1d0] sm:$0xff]
          %v3403 = vld [vmem:[#allocation8 + $0x1d8] sm:$0xff]
          %v3404 = vld [vmem:[#allocation8 + $0x1e0] sm:$0xff]
          %v3405 = vld [vmem:[#allocation8 + $0x1e8] sm:$0xff]
          %v3406 = vld [vmem:[#allocation8 + $0x1f0] sm:$0xff]
          %v3407 = vld [vmem:[#allocation8 + $0x1f8] sm:$0xff]
          %v3408 = vld [vmem:[%s10] sm:$0x3]
          %v3473 = vunpack.c.l.b16 %v3344
          %v3474 = vunpack.c.h.b16 %v3344
          %v3475 = vunpack.c.l.b16 %v3345
          %v3476 = vunpack.c.h.b16 %v3345
          %v3477 = vunpack.c.l.b16 %v3346
          %v3478 = vunpack.c.h.b16 %v3346
          %v3479 = vunpack.c.l.b16 %v3347
          %v3480 = vunpack.c.h.b16 %v3347
          %v3481 = vunpack.c.l.b16 %v3348
          %v3482 = vunpack.c.h.b16 %v3348
          %v3483 = vunpack.c.l.b16 %v3349
          %v3484 = vunpack.c.h.b16 %v3349
          %v3485 = vunpack.c.l.b16 %v3350
          %v3486 = vunpack.c.h.b16 %v3350
          %v3487 = vunpack.c.l.b16 %v3351
          %v3488 = vunpack.c.h.b16 %v3351
          %v3489 = vunpack.c.l.b16 %v3352
          %v3490 = vunpack.c.h.b16 %v3352
          %v3491 = vunpack.c.l.b16 %v3353
          %v3492 = vunpack.c.h.b16 %v3353
          %v3493 = vunpack.c.l.b16 %v3354
          %v3494 = vunpack.c.h.b16 %v3354
          %v3495 = vunpack.c.l.b16 %v3355
          %v3496 = vunpack.c.h.b16 %v3355
          %v3497 = vunpack.c.l.b16 %v3356
          %v3498 = vunpack.c.h.b16 %v3356
          %v3499 = vunpack.c.l.b16 %v3357
          %v3500 = vunpack.c.h.b16 %v3357
          %v3501 = vunpack.c.l.b16 %v3358
          %v3502 = vunpack.c.h.b16 %v3358
          %v3503 = vunpack.c.l.b16 %v3359
          %v3504 = vunpack.c.h.b16 %v3359
          %v3505 = vunpack.c.l.b16 %v3360
          %v3506 = vunpack.c.h.b16 %v3360
          %v3507 = vunpack.c.l.b16 %v3361
          %v3508 = vunpack.c.h.b16 %v3361
          %v3509 = vunpack.c.l.b16 %v3362
          %v3510 = vunpack.c.h.b16 %v3362
          %v3511 = vunpack.c.l.b16 %v3363
          %v3512 = vunpack.c.h.b16 %v3363
          %v3513 = vunpack.c.l.b16 %v3364
          %v3514 = vunpack.c.h.b16 %v3364
          %v3515 = vunpack.c.l.b16 %v3365
          %v3516 = vunpack.c.h.b16 %v3365
          %v3517 = vunpack.c.l.b16 %v3366
          %v3518 = vunpack.c.h.b16 %v3366
          %v3519 = vunpack.c.l.b16 %v3367
          %v3520 = vunpack.c.h.b16 %v3367
          %v3521 = vunpack.c.l.b16 %v3368
          %v3522 = vunpack.c.h.b16 %v3368
          %v3523 = vunpack.c.l.b16 %v3369
          %v3524 = vunpack.c.h.b16 %v3369
          %v3525 = vunpack.c.l.b16 %v3370
          %v3526 = vunpack.c.h.b16 %v3370
          %v3527 = vunpack.c.l.b16 %v3371
          %v3528 = vunpack.c.h.b16 %v3371
          %v3529 = vunpack.c.l.b16 %v3372
          %v3530 = vunpack.c.h.b16 %v3372
          %v3531 = vunpack.c.l.b16 %v3373
          %v3532 = vunpack.c.h.b16 %v3373
          %v3533 = vunpack.c.l.b16 %v3374
          %v3534 = vunpack.c.h.b16 %v3374
          %v3535 = vunpack.c.l.b16 %v3375
          %v3536 = vunpack.c.h.b16 %v3375
          %v3537 = vunpack.c.l.b16 %v3376
          %v3538 = vunpack.c.h.b16 %v3376
          %v3539 = vunpack.c.l.b16 %v3377
          %v3540 = vunpack.c.h.b16 %v3377
          %v3541 = vunpack.c.l.b16 %v3378
          %v3542 = vunpack.c.h.b16 %v3378
          %v3543 = vunpack.c.l.b16 %v3379
          %v3544 = vunpack.c.h.b16 %v3379
          %v3545 = vunpack.c.l.b16 %v3380
          %v3546 = vunpack.c.h.b16 %v3380
          %v3547 = vunpack.c.l.b16 %v3381
          %v3548 = vunpack.c.h.b16 %v3381
          %v3549 = vunpack.c.l.b16 %v3382
          %v3550 = vunpack.c.h.b16 %v3382
          %v3551 = vunpack.c.l.b16 %v3383
          %v3552 = vunpack.c.h.b16 %v3383
          %v3553 = vunpack.c.l.b16 %v3384
          %v3554 = vunpack.c.h.b16 %v3384
          %v3555 = vunpack.c.l.b16 %v3385
          %v3556 = vunpack.c.h.b16 %v3385
          %v3557 = vunpack.c.l.b16 %v3386
          %v3558 = vunpack.c.h.b16 %v3386
          %v3559 = vunpack.c.l.b16 %v3387
          %v3560 = vunpack.c.h.b16 %v3387
          %v3561 = vunpack.c.l.b16 %v3388
          %v3562 = vunpack.c.h.b16 %v3388
          %v3563 = vunpack.c.l.b16 %v3389
          %v3564 = vunpack.c.h.b16 %v3389
          %v3565 = vunpack.c.l.b16 %v3390
          %v3566 = vunpack.c.h.b16 %v3390
          %v3567 = vunpack.c.l.b16 %v3391
          %v3568 = vunpack.c.h.b16 %v3391
          %v3569 = vunpack.c.l.b16 %v3392
          %v3570 = vunpack.c.h.b16 %v3392
          %v3571 = vunpack.c.l.b16 %v3393
          %v3572 = vunpack.c.h.b16 %v3393
          %v3573 = vunpack.c.l.b16 %v3394
          %v3574 = vunpack.c.h.b16 %v3394
          %v3575 = vunpack.c.l.b16 %v3395
          %v3576 = vunpack.c.h.b16 %v3395
          %v3577 = vunpack.c.l.b16 %v3396
          %v3578 = vunpack.c.h.b16 %v3396
          %v3579 = vunpack.c.l.b16 %v3397
          %v3580 = vunpack.c.h.b16 %v3397
          %v3581 = vunpack.c.l.b16 %v3398
          %v3582 = vunpack.c.h.b16 %v3398
          %v3583 = vunpack.c.l.b16 %v3399
          %v3584 = vunpack.c.h.b16 %v3399
          %v3585 = vunpack.c.l.b16 %v3400
          %v3586 = vunpack.c.h.b16 %v3400
          %v3587 = vunpack.c.l.b16 %v3401
          %v3588 = vunpack.c.h.b16 %v3401
          %v3589 = vunpack.c.l.b16 %v3402
          %v3590 = vunpack.c.h.b16 %v3402
          %v3591 = vunpack.c.l.b16 %v3403
          %v3592 = vunpack.c.h.b16 %v3403
          %v3593 = vunpack.c.l.b16 %v3404
          %v3594 = vunpack.c.h.b16 %v3404
          %v3595 = vunpack.c.l.b16 %v3405
          %v3596 = vunpack.c.h.b16 %v3405
          %v3597 = vunpack.c.l.b16 %v3406
          %v3598 = vunpack.c.h.b16 %v3406
          %v3599 = vunpack.c.l.b16 %v3407
          %v3600 = vunpack.c.h.b16 %v3407
          %v3601 = vpack.c.b16 %v3475, %v3473
          %v3602 = vpack.c.b16 %v3476, %v3474
          %v3603 = vpack.c.b16 %v3479, %v3477
          %v3604 = vpack.c.b16 %v3480, %v3478
          %v3605 = vpack.c.b16 %v3483, %v3481
          %v3606 = vpack.c.b16 %v3484, %v3482
          %v3607 = vpack.c.b16 %v3487, %v3485
          %v3608 = vpack.c.b16 %v3488, %v3486
          %v3609 = vpack.c.b16 %v3491, %v3489
          %v3610 = vpack.c.b16 %v3492, %v3490
          %v3611 = vpack.c.b16 %v3495, %v3493
          %v3612 = vpack.c.b16 %v3496, %v3494
          %v3613 = vpack.c.b16 %v3499, %v3497
          %v3614 = vpack.c.b16 %v3500, %v3498
          %v3615 = vpack.c.b16 %v3503, %v3501
          %v3616 = vpack.c.b16 %v3504, %v3502
          %v3617 = vpack.c.b16 %v3507, %v3505
          %v3618 = vpack.c.b16 %v3508, %v3506
          %v3619 = vpack.c.b16 %v3511, %v3509
          %v3620 = vpack.c.b16 %v3512, %v3510
          %v3621 = vpack.c.b16 %v3515, %v3513
          %v3622 = vpack.c.b16 %v3516, %v3514
          %v3623 = vpack.c.b16 %v3519, %v3517
          %v3624 = vpack.c.b16 %v3520, %v3518
          %v3625 = vpack.c.b16 %v3523, %v3521
          %v3626 = vpack.c.b16 %v3524, %v3522
          %v3627 = vpack.c.b16 %v3527, %v3525
          %v3628 = vpack.c.b16 %v3528, %v3526
          %v3629 = vpack.c.b16 %v3531, %v3529
          %v3630 = vpack.c.b16 %v3532, %v3530
          %v3631 = vpack.c.b16 %v3535, %v3533
          %v3632 = vpack.c.b16 %v3536, %v3534
          %v3633 = vpack.c.b16 %v3539, %v3537
          %v3634 = vpack.c.b16 %v3540, %v3538
          %v3635 = vpack.c.b16 %v3543, %v3541
          %v3636 = vpack.c.b16 %v3544, %v3542
          %v3637 = vpack.c.b16 %v3547, %v3545
          %v3638 = vpack.c.b16 %v3548, %v3546
          %v3639 = vpack.c.b16 %v3551, %v3549
          %v3640 = vpack.c.b16 %v3552, %v3550
          %v3641 = vpack.c.b16 %v3555, %v3553
          %v3642 = vpack.c.b16 %v3556, %v3554
          %v3643 = vpack.c.b16 %v3559, %v3557
          %v3644 = vpack.c.b16 %v3560, %v3558
          %v3645 = vpack.c.b16 %v3563, %v3561
          %v3646 = vpack.c.b16 %v3564, %v3562
          %v3647 = vpack.c.b16 %v3567, %v3565
          %v3648 = vpack.c.b16 %v3568, %v3566
          %v3649 = vpack.c.b16 %v3571, %v3569
          %v3650 = vpack.c.b16 %v3572, %v3570
          %v3651 = vpack.c.b16 %v3575, %v3573
          %v3652 = vpack.c.b16 %v3576, %v3574
          %v3653 = vpack.c.b16 %v3579, %v3577
          %v3654 = vpack.c.b16 %v3580, %v3578
          %v3655 = vpack.c.b16 %v3583, %v3581
          %v3656 = vpack.c.b16 %v3584, %v3582
          %v3657 = vpack.c.b16 %v3587, %v3585
          %v3658 = vpack.c.b16 %v3588, %v3586
          %v3659 = vpack.c.b16 %v3591, %v3589
          %v3660 = vpack.c.b16 %v3592, %v3590
          %v3661 = vpack.c.b16 %v3595, %v3593
          %v3662 = vpack.c.b16 %v3596, %v3594
          %v3663 = vpack.c.b16 %v3599, %v3597
          %v3664 = vpack.c.b16 %v3600, %v3598
          %v3730 = vlaneseq
          %v3731 = vshrl.u32 %v3730, 7
          %v3732 = vsub.s32 0, %v3731
          %v3733 = vrot.slane %v3408, %v3732
          %v3734 = vlaneseq
          %v3735 = vshrl.u32 %v3734, 7
          %v3736 = vsub.s32 1, %v3735
          %v3737 = vrot.slane %v3408, %v3736
          %3740 = vmatprep.subr.bf16.mxu0 %v3602
          %3741 = vmatpush1.bf16.msra.mxu0 %v3601
          %3742 = vmatprep.subr.bf16.mxu0 %v3604
          %3743 = vmatpush1.bf16.msra.mxu0 %v3603
          %3744 = vmatprep.subr.bf16.mxu0 %v3606
          %3745 = vmatpush1.bf16.msra.mxu0 %v3605
          %3746 = vmatprep.subr.bf16.mxu0 %v3608
          %3747 = vmatpush1.bf16.msra.mxu0 %v3607
          %3748 = vmatprep.subr.bf16.mxu0 %v3610
          %3749 = vmatpush1.bf16.msra.mxu0 %v3609
          %3750 = vmatprep.subr.bf16.mxu0 %v3612
          %3751 = vmatpush1.bf16.msra.mxu0 %v3611
          %3752 = vmatprep.subr.bf16.mxu0 %v3614
          %3753 = vmatpush1.bf16.msra.mxu0 %v3613
          %3754 = vmatprep.subr.bf16.mxu0 %v3616
          %3755 = vmatpush1.bf16.msra.mxu0 %v3615
          %3756 = vmatprep.subr.bf16.mxu0 %v3618
          %3757 = vmatpush1.bf16.msra.mxu0 %v3617
          %3758 = vmatprep.subr.bf16.mxu0 %v3620
          %3759 = vmatpush1.bf16.msra.mxu0 %v3619
          %3760 = vmatprep.subr.bf16.mxu0 %v3622
          %3761 = vmatpush1.bf16.msra.mxu0 %v3621
          %3762 = vmatprep.subr.bf16.mxu0 %v3624
          %3763 = vmatpush1.bf16.msra.mxu0 %v3623
          %3764 = vmatprep.subr.bf16.mxu0 %v3626
          %3765 = vmatpush1.bf16.msra.mxu0 %v3625
          %3766 = vmatprep.subr.bf16.mxu0 %v3628
          %3767 = vmatpush1.bf16.msra.mxu0 %v3627
          %3768 = vmatprep.subr.bf16.mxu0 %v3630
          %3769 = vmatpush1.bf16.msra.mxu0 %v3629
          %3770 = vmatprep.subr.bf16.mxu0 %v3632
          %3771 = vmatpush1.bf16.msra.mxu0 %v3631
          %3772 = vmatprep.mubr.bf16.mxu0 %v3341
          %3773 = vmatmul.mubr.bf16.gmra.mrb[0].mxu0 %v3340
          %v3774 = vpop.f32.mrb[0].mxu0
          %v3775 = vadd.f32 %v3733, %v3774
          %v3776 = vpop.f32.mrb[0].mxu0
          %v3777 = vadd.f32 %v3737, %v3776
          %v3778 = vpop.f32.mrb[0].mxu0
          %v3779 = vpop.f32.mrb[0].mxu0
          %3780 = vdwg.mxu0
          %3781 = vmatprep.subr.bf16.mxu0 %v3634
          %3782 = vmatpush1.bf16.msra.mxu0 %v3633
          %3783 = vmatprep.subr.bf16.mxu0 %v3636
          %3784 = vmatpush1.bf16.msra.mxu0 %v3635
          %3785 = vmatprep.subr.bf16.mxu0 %v3638
          %3786 = vmatpush1.bf16.msra.mxu0 %v3637
          %3787 = vmatprep.subr.bf16.mxu0 %v3640
          %3788 = vmatpush1.bf16.msra.mxu0 %v3639
          %3789 = vmatprep.subr.bf16.mxu0 %v3642
          %3790 = vmatpush1.bf16.msra.mxu0 %v3641
          %3791 = vmatprep.subr.bf16.mxu0 %v3644
          %3792 = vmatpush1.bf16.msra.mxu0 %v3643
          %3793 = vmatprep.subr.bf16.mxu0 %v3646
          %3794 = vmatpush1.bf16.msra.mxu0 %v3645
          %3795 = vmatprep.subr.bf16.mxu0 %v3648
          %3796 = vmatpush1.bf16.msra.mxu0 %v3647
          %3797 = vmatprep.subr.bf16.mxu0 %v3650
          %3798 = vmatpush1.bf16.msra.mxu0 %v3649
          %3799 = vmatprep.subr.bf16.mxu0 %v3652
          %3800 = vmatpush1.bf16.msra.mxu0 %v3651
          %3801 = vmatprep.subr.bf16.mxu0 %v3654
          %3802 = vmatpush1.bf16.msra.mxu0 %v3653
          %3803 = vmatprep.subr.bf16.mxu0 %v3656
          %3804 = vmatpush1.bf16.msra.mxu0 %v3655
          %3805 = vmatprep.subr.bf16.mxu0 %v3658
          %3806 = vmatpush1.bf16.msra.mxu0 %v3657
          %3807 = vmatprep.subr.bf16.mxu0 %v3660
          %3808 = vmatpush1.bf16.msra.mxu0 %v3659
          %3809 = vmatprep.subr.bf16.mxu0 %v3662
          %3810 = vmatpush1.bf16.msra.mxu0 %v3661
          %3811 = vmatprep.subr.bf16.mxu0 %v3664
          %3812 = vmatpush1.bf16.msra.mxu0 %v3663
          %3813 = vmatprep.mubr.bf16.mxu0 %v3343
          %3814 = vmatmul.mubr.bf16.gmra.mrb[0].mxu0 %v3342
          %v3815 = vpop.f32.mrb[0].mxu0
          %v3816 = vadd.f32 %v3775, %v3815
          %v3817 = vpop.f32.mrb[0].mxu0
          %v3818 = vadd.f32 %v3777, %v3817
          %v3819 = vpop.f32.mrb[0].mxu0
          %v3820 = vpop.f32.mrb[0].mxu0
          %3821 = vdwg.mxu0
          %v3822 = vmax.f32 %v3816, 0.0
          %v3823 = vmax.f32 %v3818, 0.0
          %v3824 = vpack.c.bf16 %v3822, %v3822
          %v3825 = vpack.c.bf16 %v3823, %v3823
          %v3826 = vld [vmem:[%s11] sm:$0xf]
          %v3827 = vld [vmem:[%s11 + $0x4] sm:$0xf]
          %v3828 = vld [vmem:[%s11 + $0x8] sm:$0xf]
          %v3829 = vld [vmem:[%s11 + $0xc] sm:$0xf]
          %v3830 = vld [vmem:[%s11 + $0x10] sm:$0xf]
          %v3831 = vld [vmem:[%s11 + $0x14] sm:$0xf]
          %v3832 = vld [vmem:[%s11 + $0x18] sm:$0xf]
          %v3833 = vld [vmem:[%s11 + $0x1c] sm:$0xf]
          %v3834 = vld [vmem:[%s11 + $0x20] sm:$0xf]
          %v3835 = vld [vmem:[%s11 + $0x24] sm:$0xf]
          %v3836 = vld [vmem:[%s11 + $0x28] sm:$0xf]
          %v3837 = vld [vmem:[%s11 + $0x2c] sm:$0xf]
          %v3838 = vld [vmem:[%s11 + $0x30] sm:$0xf]
          %v3839 = vld [vmem:[%s11 + $0x34] sm:$0xf]
          %v3840 = vld [vmem:[%s11 + $0x38] sm:$0xf]
          %v3841 = vld [vmem:[%s11 + $0x3c] sm:$0xf]
          %v3842 = vld [vmem:[%s11 + $0x40] sm:$0xf]
          %v3843 = vld [vmem:[%s11 + $0x44] sm:$0xf]
          %v3844 = vld [vmem:[%s11 + $0x48] sm:$0xf]
          %v3845 = vld [vmem:[%s11 + $0x4c] sm:$0xf]
          %v3846 = vld [vmem:[%s11 + $0x50] sm:$0xf]
          %v3847 = vld [vmem:[%s11 + $0x54] sm:$0xf]
          %v3848 = vld [vmem:[%s11 + $0x58] sm:$0xf]
          %v3849 = vld [vmem:[%s11 + $0x5c] sm:$0xf]
          %v3850 = vld [vmem:[%s11 + $0x60] sm:$0xf]
          %v3851 = vld [vmem:[%s11 + $0x64] sm:$0xf]
          %v3852 = vld [vmem:[%s11 + $0x68] sm:$0xf]
          %v3853 = vld [vmem:[%s11 + $0x6c] sm:$0xf]
          %v3854 = vld [vmem:[%s11 + $0x70] sm:$0xf]
          %v3855 = vld [vmem:[%s11 + $0x74] sm:$0xf]
          %v3856 = vld [vmem:[%s11 + $0x78] sm:$0xf]
          %v3857 = vld [vmem:[%s11 + $0x7c] sm:$0xf]
          %v3858 = vld [vmem:[%s12] sm:$0x1]
          %v3891 = vunpack.c.l.b16 %v3826
          %v3892 = vunpack.c.l.b16 %v3827
          %v3893 = vunpack.c.l.b16 %v3828
          %v3894 = vunpack.c.l.b16 %v3829
          %v3895 = vunpack.c.l.b16 %v3830
          %v3896 = vunpack.c.l.b16 %v3831
          %v3897 = vunpack.c.l.b16 %v3832
          %v3898 = vunpack.c.l.b16 %v3833
          %v3899 = vunpack.c.l.b16 %v3834
          %v3900 = vunpack.c.l.b16 %v3835
          %v3901 = vunpack.c.l.b16 %v3836
          %v3902 = vunpack.c.l.b16 %v3837
          %v3903 = vunpack.c.l.b16 %v3838
          %v3904 = vunpack.c.l.b16 %v3839
          %v3905 = vunpack.c.l.b16 %v3840
          %v3906 = vunpack.c.l.b16 %v3841
          %v3907 = vunpack.c.l.b16 %v3842
          %v3908 = vunpack.c.l.b16 %v3843
          %v3909 = vunpack.c.l.b16 %v3844
          %v3910 = vunpack.c.l.b16 %v3845
          %v3911 = vunpack.c.l.b16 %v3846
          %v3912 = vunpack.c.l.b16 %v3847
          %v3913 = vunpack.c.l.b16 %v3848
          %v3914 = vunpack.c.l.b16 %v3849
          %v3915 = vunpack.c.l.b16 %v3850
          %v3916 = vunpack.c.l.b16 %v3851
          %v3917 = vunpack.c.l.b16 %v3852
          %v3918 = vunpack.c.l.b16 %v3853
          %v3919 = vunpack.c.l.b16 %v3854
          %v3920 = vunpack.c.l.b16 %v3855
          %v3921 = vunpack.c.l.b16 %v3856
          %v3922 = vunpack.c.l.b16 %v3857
          %v3923 = vpack.c.b16 %v3892, %v3891
          %v3924 = vpack.c.b16 %v3894, %v3893
          %v3925 = vpack.c.b16 %v3896, %v3895
          %v3926 = vpack.c.b16 %v3898, %v3897
          %v3927 = vpack.c.b16 %v3900, %v3899
          %v3928 = vpack.c.b16 %v3902, %v3901
          %v3929 = vpack.c.b16 %v3904, %v3903
          %v3930 = vpack.c.b16 %v3906, %v3905
          %v3931 = vpack.c.b16 %v3908, %v3907
          %v3932 = vpack.c.b16 %v3910, %v3909
          %v3933 = vpack.c.b16 %v3912, %v3911
          %v3934 = vpack.c.b16 %v3914, %v3913
          %v3935 = vpack.c.b16 %v3916, %v3915
          %v3936 = vpack.c.b16 %v3918, %v3917
          %v3937 = vpack.c.b16 %v3920, %v3919
          %v3938 = vpack.c.b16 %v3922, %v3921
          %3955 = vmatprep.subr.bf16.mxu0 0
          %3956 = vmatpush1.bf16.msra.mxu0 %v3923
          %3957 = vmatprep.subr.bf16.mxu0 0
          %3958 = vmatpush1.bf16.msra.mxu0 %v3924
          %3959 = vmatprep.subr.bf16.mxu0 0
          %3960 = vmatpush1.bf16.msra.mxu0 %v3925
          %3961 = vmatprep.subr.bf16.mxu0 0
          %3962 = vmatpush1.bf16.msra.mxu0 %v3926
          %3963 = vmatprep.subr.bf16.mxu0 0
          %3964 = vmatpush1.bf16.msra.mxu0 %v3927
          %3965 = vmatprep.subr.bf16.mxu0 0
          %3966 = vmatpush1.bf16.msra.mxu0 %v3928
          %3967 = vmatprep.subr.bf16.mxu0 0
          %3968 = vmatpush1.bf16.msra.mxu0 %v3929
          %3969 = vmatprep.subr.bf16.mxu0 0
          %3970 = vmatpush1.bf16.msra.mxu0 %v3930
          %3971 = vmatprep.subr.bf16.mxu0 0
          %3972 = vmatpush1.bf16.msra.mxu0 %v3931
          %3973 = vmatprep.subr.bf16.mxu0 0
          %3974 = vmatpush1.bf16.msra.mxu0 %v3932
          %3975 = vmatprep.subr.bf16.mxu0 0
          %3976 = vmatpush1.bf16.msra.mxu0 %v3933
          %3977 = vmatprep.subr.bf16.mxu0 0
          %3978 = vmatpush1.bf16.msra.mxu0 %v3934
          %3979 = vmatprep.subr.bf16.mxu0 0
          %3980 = vmatpush1.bf16.msra.mxu0 %v3935
          %3981 = vmatprep.subr.bf16.mxu0 0
          %3982 = vmatpush1.bf16.msra.mxu0 %v3936
          %3983 = vmatprep.subr.bf16.mxu0 0
          %3984 = vmatpush1.bf16.msra.mxu0 %v3937
          %3985 = vmatprep.subr.bf16.mxu0 0
          %3986 = vmatpush1.bf16.msra.mxu0 %v3938
          %3987 = vmatprep.mubr.bf16.mxu0 %v3825
          %3988 = vmatmul.mubr.bf16.gmra.mrb[0].mxu0 %v3824
          %v3989 = vpop.f32.mrb[0].mxu0
          %v3990 = vadd.f32 %v3858, %v3989
          %v3991 = vpop.f32.mrb[0].mxu0
          %v3992 = vpop.f32.mrb[0].mxu0
          %v3993 = vpop.f32.mrb[0].mxu0
          %3994 = vdwg.mxu0
          %vm3995 = vcmask 65536
          %3996 = vst.msk [vmem:[%s499] sm:$0x1] %vm3995, %v3990
        $region92: #{tpu_custom_call.1} parent=71 // pred_fallthru
          _
        %s3997 = sand.u32 %s329, 1
        %s3998 = scalar_lea.sflag [#allocation5], %s3997
        %s3999 = sand.u32 %s329, 1
        %s4000 = scalar_lea.vmem [#allocation9], %s3999
        // Predicated region
        $region93: #{tpu_custom_call.1} parent=71 // pred_check
          %p4001 = pneg %p339
        $region94: #{tpu_custom_call.1} parent=71 // pred_check_branch
          %4003 = sbr.rel (%p4001) target = $region96
        $region95: #{tpu_custom_call.1} parent=71 // pred_region
          %s4005 = ssub.s32 16, 16
          %4006 = vsyncadd %s3998, %s4005
          %s4007 = smul.addr %s33, 16
          %s4008 = scalar_lea.hbm %s13, %s4007
          %s4010 = sshll.u32 %s4000, 4
          %s4011 = int_to_ptr.vmem [resolvable:$true] %s4010
          %4013 = dma.vmem_to_hbm [thread:$0]  %s4011, 16, %s4008, %s3998
        $region96: #{tpu_custom_call.1} parent=71 // pred_fallthru
          _
      $region72: #{tpu_custom_call.1} parent=5 // pred_fallthru
        _
      %p4014 = scmp.le.s32.totalorder 2, %s24
      // Predicated region
      $region97: #{tpu_custom_call.1} parent=5 // pred_check
        %p4015 = pneg %p4014
      $region98: #{tpu_custom_call.1} parent=5 // pred_check_branch
        %4017 = sbr.rel (%p4015) target = $region100
      $region99: #{tpu_custom_call.1} parent=5 // pred_region
        %s4018 = ssub.s32 %s24, 2
        // Predicated region
        $region101: #{tpu_custom_call.1} parent=99 // pred_check
          %p4019 = pneg %p345
        $region102: #{tpu_custom_call.1} parent=99 // pred_check_branch
          %4021 = sbr.rel (%p4019) target = $region104
        $region103: #{tpu_custom_call.1} parent=99 // pred_region
          %s4022 = sand.u32 %s330, 1
          %s4023 = scalar_lea.sflag [#allocation5], %s4022
          %s4024 = sand.u32 %s330, 1
          %s4025 = scalar_lea.vmem [#allocation9], %s4024
          %4026 = dma.done %s4023, 16
        $region104: #{tpu_custom_call.1} parent=99 // pred_fallthru
          _
      $region100: #{tpu_custom_call.1} parent=5 // pred_fallthru
        _
    $region6: #{tpu_custom_call.1} parent=1 // loop_footer
      %s28 = sadd.s32 1, %s24
    $region7: #{tpu_custom_call.1} parent=1 // loop_footer_branch
      %23 = sbr.rel target = $region3
    $region8: #{tpu_custom_call.1} parent=1 // loop_exit
      _
    %4027 = vsyncpa [#allocation4], 1
    %s4028 = scalar_lea.sflag [#allocation4], 1
    %4029 = vsyncpa %s4028, 1
    %4030 = vsyncpa [#allocation7], 1
    %4031 = vsyncpa [#allocation5], 1
    %s4032 = scalar_lea.sflag [#allocation5], 1
    %4033 = vsyncpa %s4032, 1

</llo_original>
